<compile_context>
chip_gen: v6e
topology: v6e:2x2x1
jax: 0.10.0
libtpu: 0.0.40
codegen_flags: <defaults>
</compile_context>

<pallas_src>
import functools
import math

import jax
import jax.numpy as jnp
from jax import lax
from jax.experimental import pallas as pl
from jax.experimental.pallas import tpu as pltpu

# ---- model hyper-params (small, matching the module's __init__ signature) ----
HIDDEN = 32
NUM_HEADS = 4
HEAD_DIM = HIDDEN // NUM_HEADS
FILTER = 64
SEQ = 8          # decoder sequence length
ENC_SEQ = 16     # encoder sequence length
BATCH = 2
LN_EPS = 1e-5
NEG_INF = -1e30  # large finite negative: no NaN even for fully-masked rows


def _decoder_layer_kernel(B, S, Se, NH,
                          x_ref, enc_ref, bias_ref,
                          wself_ref, wenc_ref, ffnw_ref, vec_ref,
                          o_ref):
    H = x_ref.shape[-1]
    HD = H // NH
    F = ffnw_ref.shape[-1]

    xf = x_ref[...]                      # (B*S, H)  — batch folded into rows
    encf = enc_ref[...]                  # (B*Se, H)
    bias_all = bias_ref[...]             # (S, S+Se) additive mask bias
    self_bias = bias_all[:, :S]          # (S, S)
    enc_bias = bias_all[:, S:S + Se]     # (S, Se)

    w_self = wself_ref[...]              # (H, 4H) = [Wq*scale | Wk | Wv | Wo]
    w_enc = wenc_ref[...]                # (H, 4H)
    vecs = vec_ref[...]                  # (8, 4H)
    ln1_g, ln1_b = vecs[0:1, :H], vecs[1:2, :H]
    ln3_g, ln3_b = vecs[2:3, :H], vecs[3:4, :H]
    b1 = vecs[4:5, :F]                   # (1, F)
    b2 = vecs[5:6, :H]                   # (1, H)
    b_self = vecs[6:7, :]                # (1, 4H) = [bq*scale | bk | bv | bo]
    b_enc = vecs[7:8, :]                 # (1, 4H)

    w1 = ffnw_ref[:H, :]                 # (H, F)
    w2 = ffnw_ref[H:, :H]                # (F, H)

    def matmul(a, w):
        return jnp.dot(a, w, preferred_element_type=jnp.float32)

    def layer_norm(v, g, b):
        mu = jnp.mean(v, axis=-1, keepdims=True)
        c = v - mu
        var = jnp.mean(c * c, axis=-1, keepdims=True)
        return c * lax.rsqrt(var + LN_EPS) * g + b

    def attention(q_all, kv_all, Lq, Lk, wo, bo, bias2d):
        # q_all: (B*Lq, H), kv_all: (B*Lk, 2H) — heads along lanes.
        q3 = q_all.reshape(B, Lq, H)
        kv3 = kv_all.reshape(B, Lk, 2 * H)
        # Head-batched tensors (single batch dim NH*B) -> ONE batched MXU
        # einsum and ONE softmax chain for all heads.
        q5 = jnp.stack([q3[:, :, h * HD:(h + 1) * HD] for h in range(NH)],
                       axis=0).reshape(NH * B, Lq, HD)
        k5 = jnp.stack([kv3[:, :, h * HD:(h + 1) * HD] for h in range(NH)],
                       axis=0).reshape(NH * B, Lk, HD)
        v5 = jnp.stack([kv3[:, :, H + h * HD:H + (h + 1) * HD] for h in range(NH)],
                       axis=0).reshape(NH * B, Lk, HD)

        s = jnp.einsum('bqd,bkd->bqk', q5, k5,
                       preferred_element_type=jnp.float32)      # (NH*B, Lq, Lk)
        s = s + bias2d[None, :, :]                               # additive mask
        m = jnp.max(s, axis=-1, keepdims=True)
        p = jnp.exp(s - m)
        denom = jnp.sum(p, axis=-1, keepdims=True)
        p = p * pl.reciprocal(denom, approx=True)                # EUP divide
        ctx = jnp.einsum('bqk,bkd->bqd', p, v5,
                         preferred_element_type=jnp.float32)     # (NH*B, Lq, HD)

        # Lay all heads contiguously along lanes -> one fused (B*Lq, H)@(H, H).
        ctx_cat = jnp.concatenate(
            [ctx[h * B:(h + 1) * B].reshape(B * Lq, HD) for h in range(NH)],
            axis=-1)                                             # (B*Lq, H)
        return matmul(ctx_cat, wo) + bo

    # ---- self-attention: single fused QKV matmul (B*S, H) @ (H, 3H) ----
    qkv = matmul(xf, w_self[:, :3 * H]) + b_self[:, :3 * H]
    self_out = attention(qkv[:, :H], qkv[:, H:3 * H], S, S,
                         w_self[:, 3 * H:], b_self[:, 3 * H:], self_bias)
    # x2 = norm1(x + self_attn(x, x, x, self_mask))
    x2 = layer_norm(xf + self_out, ln1_g, ln1_b)

    # ---- cross-attention: fused Q matmul + fused (H, 2H) KV matmul ----
    q_all = matmul(x2, w_enc[:, :H]) + b_enc[:, :H]
    kv_all = matmul(encf, w_enc[:, H:3 * H]) + b_enc[:, H:3 * H]
    enc_out = attention(q_all, kv_all, S, Se,
                        w_enc[:, 3 * H:], b_enc[:, 3 * H:], enc_bias)
    # x = x2 + dropout(enc_attn(...))   (eval: identity)
    x3 = x2 + enc_out

    # ---- x = x + dropout(feed_forward(norm3(x)))   (eval: identity) ----
    xn = layer_norm(x3, ln3_g, ln3_b)
    hidden = jnp.maximum(matmul(xn, w1) + b1, 0.0)
    ff = matmul(hidden, w2) + b2
    o_ref[...] = (x3 + ff).astype(o_ref.dtype)


# ----------------------------- host-side packing -----------------------------
def _pad_cols(v, width):
    return jnp.pad(v, ((0, 0), (0, width - v.shape[-1])))


def _pack_attn_params(w, b, num_heads):
    """w: (4, H, H) [Wq, Wk, Wv, Wo] each stored (in, out); b: (4, 1, H).

    Returns one (H, 4H) weight slab and one (1, 4H) bias row, with the
    1/sqrt(head_dim) attention scale folded into the q weights/bias."""
    H = w.shape[-1]
    scale = 1.0 / math.sqrt(H // num_heads)
    w_slab = jnp.concatenate([w[0] * scale, w[1], w[2], w[3]], axis=1)   # (H, 4H)
    b_slab = jnp.concatenate([b[0] * scale, b[1], b[2], b[3]], axis=1)   # (1, 4H)
    return w_slab, b_slab


def decoder_layer(x, enc_x, self_mask, enc_mask, params, *, num_heads=NUM_HEADS):
    """x: (B,S,H), enc_x: (B,Se,H), self_mask: (S,S), enc_mask: (S,Se)."""
    B, S, H = x.shape
    Se = enc_x.shape[1]
    F = params["w1"].shape[-1]
    W4 = 4 * H
    assert F >= H and W4 >= F, "packing layout assumes filter >= hidden and 4*hidden >= filter"

    w_self, b_self = _pack_attn_params(params["wself"], params["bself"], num_heads)
    w_enc, b_enc = _pack_attn_params(params["wenc"], params["benc"], num_heads)

    # Additive mask bias (0 keep / NEG_INF masked); both attentions in one slab.
    attn_bias = jnp.concatenate(
        [jnp.where(self_mask == 0.0, NEG_INF, 0.0),
         jnp.where(enc_mask == 0.0, NEG_INF, 0.0)], axis=1).astype(jnp.float32)

    # FFN weights in one slab (w2 lane-padded to F wide).
    ffn_w = jnp.concatenate([params["w1"], _pad_cols(params["w2"], F)], axis=0)

    # All small per-lane vectors in one (8, 4H) slab (exactly one vreg tile).
    vec = jnp.concatenate(
        [_pad_cols(params["ln"][0], W4), _pad_cols(params["ln"][1], W4),
         _pad_cols(params["ln"][2], W4), _pad_cols(params["ln"][3], W4),
         _pad_cols(params["b1"], W4), _pad_cols(params["b2"], W4),
         b_self, b_enc], axis=0)

    xf = x.reshape(B * S, H)
    encf = enc_x.reshape(B * Se, H)

    kernel = functools.partial(_decoder_layer_kernel, B, S, Se, num_heads)

    # Single gridless invocation: the whole working set (<64 KiB) is resident
    # in VMEM on v5e/v6e/v7x, so there is no pipeline / per-grid-step overhead.
    out_flat = pl.pallas_call(
        kernel,
        out_shape=jax.ShapeDtypeStruct((B * S, H), jnp.float32),
        in_specs=[pl.BlockSpec(memory_space=pltpu.MemorySpace.VMEM)
                  for _ in range(7)],
        out_specs=pl.BlockSpec(memory_space=pltpu.MemorySpace.VMEM),
    )(xf, encf, attn_bias, w_self, w_enc, ffn_w, vec)
    return out_flat.reshape(B, S, H)


# ---------------- pure-JAX reference (for correctness check) ----------------
def _ref_mha(q_in, kv_in, w, b, mask, num_heads):
    H = q_in.shape[-1]
    hd = H // num_heads
    q = q_in @ w[0] + b[0]
    k = kv_in @ w[1] + b[1]
    v = kv_in @ w[2] + b[2]
    B, Lq, _ = q.shape
    Lk = k.shape[1]
    qh = q.reshape(B, Lq, num_heads, hd).transpose(0, 2, 1, 3)
    kh = k.reshape(B, Lk, num_heads, hd).transpose(0, 2, 1, 3)
    vh = v.reshape(B, Lk, num_heads, hd).transpose(0, 2, 1, 3)
    s = jnp.einsum("bhqd,bhkd->bhqk", qh, kh) / math.sqrt(hd)
    s = jnp.where(mask[None, None, :, :] == 0.0, -jnp.inf, s)
    p = jax.nn.softmax(s, axis=-1)
    ctx = jnp.einsum("bhqk,bhkd->bhqd", p, vh)
    ctx = ctx.transpose(0, 2, 1, 3).reshape(B, Lq, H)
    return ctx @ w[3] + b[3]


def _ref_ln(v, g, b):
    mu = jnp.mean(v, axis=-1, keepdims=True)
    var = jnp.mean((v - mu) ** 2, axis=-1, keepdims=True)
    return (v - mu) / jnp.sqrt(var + LN_EPS) * g + b


def decoder_layer_ref(x, enc_x, self_mask, enc_mask, p):
    x2 = _ref_ln(x + _ref_mha(x, x, p["wself"], p["bself"], self_mask, NUM_HEADS),
                 p["ln"][0], p["ln"][1])
    x3 = x2 + _ref_mha(x2, enc_x, p["wenc"], p["benc"], enc_mask, NUM_HEADS)
    xn = _ref_ln(x3, p["ln"][2], p["ln"][3])
    ff = jnp.maximum(xn @ p["w1"] + p["b1"], 0.0) @ p["w2"] + p["b2"]
    return x3 + ff


if __name__ == "__main__":
    key = jax.random.PRNGKey(0)
    keys = jax.random.split(key, 16)

    def nrm(k, shape, scale=0.1):
        return (scale * jax.random.normal(k, shape)).astype(jnp.float32)

    params = {
        "wself": nrm(keys[0], (4, HIDDEN, HIDDEN)),   # [Wq, Wk, Wv, Wo], (in,out)
        "bself": nrm(keys[1], (4, 1, HIDDEN)),
        "wenc":  nrm(keys[2], (4, HIDDEN, HIDDEN)),
        "benc":  nrm(keys[3], (4, 1, HIDDEN)),
        # ln = [norm1_gamma, norm1_beta, norm3_gamma, norm3_beta]
        "ln": jnp.concatenate(
            [jnp.ones((1, 1, HIDDEN), jnp.float32),
             jnp.zeros((1, 1, HIDDEN), jnp.float32),
             jnp.ones((1, 1, HIDDEN), jnp.float32),
             jnp.zeros((1, 1, HIDDEN), jnp.float32)], axis=0)
            + nrm(keys[4], (4, 1, HIDDEN), 0.02),
        "w1": nrm(keys[5], (HIDDEN, FILTER)),
        "b1": nrm(keys[6], (1, FILTER)),
        "w2": nrm(keys[7], (FILTER, HIDDEN)),
        "b2": nrm(keys[8], (1, HIDDEN)),
    }

    x = nrm(keys[9], (BATCH, SEQ, HIDDEN), 1.0)
    enc_x = nrm(keys[10], (BATCH, ENC_SEQ, HIDDEN), 1.0)
    # Unbatched masks (shared across batch/heads): causal self-mask,
    # full-visibility encoder mask (1 = keep, 0 = masked).
    self_mask = jnp.tril(jnp.ones((SEQ, SEQ), jnp.float32))
    enc_mask = jnp.ones((SEQ, ENC_SEQ), jnp.float32)

    out = decoder_layer(x, enc_x, self_mask, enc_mask, params)
    out = jax.block_until_ready(out)

    ref = decoder_layer_ref(x, enc_x, self_mask, enc_mask, params)
    assert out.shape == (BATCH, SEQ, HIDDEN)
    assert jnp.allclose(out, ref, rtol=2e-2, atol=2e-2), "mismatch vs reference"

    print("KERNEL_OK")
</pallas_src>

<mosaic_0001>
module attributes {stable_mosaic.version = 11 : i64} {
  func.func @_decoder_layer_kernel(%arg0: memref<16x32xf32, #tpu.memory_space<vmem>>, %arg1: memref<32x32xf32, #tpu.memory_space<vmem>>, %arg2: memref<8x24xf32, #tpu.memory_space<vmem>>, %arg3: memref<32x128xf32, #tpu.memory_space<vmem>>, %arg4: memref<32x128xf32, #tpu.memory_space<vmem>>, %arg5: memref<96x64xf32, #tpu.memory_space<vmem>>, %arg6: memref<8x128xf32, #tpu.memory_space<vmem>>, %arg7: memref<16x32xf32, #tpu.memory_space<vmem>>) attributes {dimension_semantics = [], scalar_prefetch = 0 : i64, scratch_operands = 0 : i64, tpu.core_type = #tpu.core_type<tc>} {
    %c0 = arith.constant 0 : index
    %c0_0 = arith.constant 0 : index
    %0 = vector.load %arg0[%c0, %c0_0] : memref<16x32xf32, #tpu.memory_space<vmem>>, vector<16x32xf32>
    %c0_1 = arith.constant 0 : index
    %c0_2 = arith.constant 0 : index
    %1 = vector.load %arg1[%c0_1, %c0_2] : memref<32x32xf32, #tpu.memory_space<vmem>>, vector<32x32xf32>
    %c0_3 = arith.constant 0 : index
    %c0_4 = arith.constant 0 : index
    %2 = vector.load %arg2[%c0_3, %c0_4] : memref<8x24xf32, #tpu.memory_space<vmem>>, vector<8x24xf32>
    %3 = vector.extract_strided_slice %2 {offsets = [0, 0], sizes = [8, 8], strides = [1, 1]} : vector<8x24xf32> to vector<8x8xf32>
    %4 = vector.extract_strided_slice %2 {offsets = [0, 8], sizes = [8, 16], strides = [1, 1]} : vector<8x24xf32> to vector<8x16xf32>
    %c0_5 = arith.constant 0 : index
    %c0_6 = arith.constant 0 : index
    %5 = vector.load %arg3[%c0_5, %c0_6] : memref<32x128xf32, #tpu.memory_space<vmem>>, vector<32x128xf32>
    %c0_7 = arith.constant 0 : index
    %c0_8 = arith.constant 0 : index
    %6 = vector.load %arg4[%c0_7, %c0_8] : memref<32x128xf32, #tpu.memory_space<vmem>>, vector<32x128xf32>
    %c0_9 = arith.constant 0 : index
    %c0_10 = arith.constant 0 : index
    %7 = vector.load %arg6[%c0_9, %c0_10] : memref<8x128xf32, #tpu.memory_space<vmem>>, vector<8x128xf32>
    %8 = vector.extract_strided_slice %7 {offsets = [0, 0], sizes = [1, 32], strides = [1, 1]} : vector<8x128xf32> to vector<1x32xf32>
    %9 = vector.extract_strided_slice %7 {offsets = [1, 0], sizes = [1, 32], strides = [1, 1]} : vector<8x128xf32> to vector<1x32xf32>
    %10 = vector.extract_strided_slice %7 {offsets = [2, 0], sizes = [1, 32], strides = [1, 1]} : vector<8x128xf32> to vector<1x32xf32>
    %11 = vector.extract_strided_slice %7 {offsets = [3, 0], sizes = [1, 32], strides = [1, 1]} : vector<8x128xf32> to vector<1x32xf32>
    %12 = vector.extract_strided_slice %7 {offsets = [4, 0], sizes = [1, 64], strides = [1, 1]} : vector<8x128xf32> to vector<1x64xf32>
    %13 = vector.extract_strided_slice %7 {offsets = [5, 0], sizes = [1, 32], strides = [1, 1]} : vector<8x128xf32> to vector<1x32xf32>
    %14 = vector.extract_strided_slice %7 {offsets = [6, 0], sizes = [1, 128], strides = [1, 1]} : vector<8x128xf32> to vector<1x128xf32>
    %15 = vector.extract_strided_slice %7 {offsets = [7, 0], sizes = [1, 128], strides = [1, 1]} : vector<8x128xf32> to vector<1x128xf32>
    %c0_11 = arith.constant 0 : index
    %c0_12 = arith.constant 0 : index
    %16 = vector.load %arg5[%c0_11, %c0_12] : memref<96x64xf32, #tpu.memory_space<vmem>>, vector<32x64xf32>
    %c32 = arith.constant 32 : index
    %c0_13 = arith.constant 0 : index
    %17 = vector.load %arg5[%c32, %c0_13] : memref<96x64xf32, #tpu.memory_space<vmem>>, vector<64x32xf32>
    %18 = vector.extract_strided_slice %5 {offsets = [0, 0], sizes = [32, 96], strides = [1, 1]} : vector<32x128xf32> to vector<32x96xf32>
    %cst = arith.constant dense<0.000000e+00> : vector<16x96xf32>
    %19 = tpu.matmul %0, %18, %cst {dimension_numbers = #tpu.dot_dimension_numbers<[1], [0], [0], [1], [0, 0, 1, 1], [], []>} : vector<16x32xf32>, vector<32x96xf32>, vector<16x96xf32> -> vector<16x96xf32>
    %20 = vector.extract_strided_slice %14 {offsets = [0, 0], sizes = [1, 96], strides = [1, 1]} : vector<1x128xf32> to vector<1x96xf32>
    %21 = vector.broadcast %20 : vector<1x96xf32> to vector<16x96xf32>
    %22 = arith.addf %19, %21 : vector<16x96xf32>
    %23 = vector.extract_strided_slice %22 {offsets = [0, 0], sizes = [16, 32], strides = [1, 1]} : vector<16x96xf32> to vector<16x32xf32>
    %24 = vector.extract_strided_slice %22 {offsets = [0, 32], sizes = [16, 64], strides = [1, 1]} : vector<16x96xf32> to vector<16x64xf32>
    %25 = vector.extract_strided_slice %5 {offsets = [0, 96], sizes = [32, 32], strides = [1, 1]} : vector<32x128xf32> to vector<32x32xf32>
    %26 = vector.extract_strided_slice %14 {offsets = [0, 96], sizes = [1, 32], strides = [1, 1]} : vector<1x128xf32> to vector<1x32xf32>
    %27 = vector.shape_cast %23 : vector<16x32xf32> to vector<2x8x32xf32>
    %28 = vector.shape_cast %24 : vector<16x64xf32> to vector<2x8x64xf32>
    %29 = vector.extract_strided_slice %27 {offsets = [0, 0, 0], sizes = [2, 8, 8], strides = [1, 1, 1]} : vector<2x8x32xf32> to vector<2x8x8xf32>
    %30 = vector.extract_strided_slice %27 {offsets = [0, 0, 8], sizes = [2, 8, 8], strides = [1, 1, 1]} : vector<2x8x32xf32> to vector<2x8x8xf32>
    %31 = vector.extract_strided_slice %27 {offsets = [0, 0, 16], sizes = [2, 8, 8], strides = [1, 1, 1]} : vector<2x8x32xf32> to vector<2x8x8xf32>
    %32 = vector.extract_strided_slice %27 {offsets = [0, 0, 24], sizes = [2, 8, 8], strides = [1, 1, 1]} : vector<2x8x32xf32> to vector<2x8x8xf32>
    %33 = vector.shape_cast %29 : vector<2x8x8xf32> to vector<1x2x8x8xf32>
    %34 = vector.shape_cast %30 : vector<2x8x8xf32> to vector<1x2x8x8xf32>
    %35 = vector.shape_cast %31 : vector<2x8x8xf32> to vector<1x2x8x8xf32>
    %36 = vector.shape_cast %32 : vector<2x8x8xf32> to vector<1x2x8x8xf32>
    %37 = tpu.concatenate %33, %34, %35, %36 in 0 : vector<1x2x8x8xf32>, vector<1x2x8x8xf32>, vector<1x2x8x8xf32>, vector<1x2x8x8xf32> -> vector<4x2x8x8xf32>
    %38 = vector.shape_cast %37 : vector<4x2x8x8xf32> to vector<8x8x8xf32>
    %39 = vector.extract_strided_slice %28 {offsets = [0, 0, 0], sizes = [2, 8, 8], strides = [1, 1, 1]} : vector<2x8x64xf32> to vector<2x8x8xf32>
    %40 = vector.extract_strided_slice %28 {offsets = [0, 0, 8], sizes = [2, 8, 8], strides = [1, 1, 1]} : vector<2x8x64xf32> to vector<2x8x8xf32>
    %41 = vector.extract_strided_slice %28 {offsets = [0, 0, 16], sizes = [2, 8, 8], strides = [1, 1, 1]} : vector<2x8x64xf32> to vector<2x8x8xf32>
    %42 = vector.extract_strided_slice %28 {offsets = [0, 0, 24], sizes = [2, 8, 8], strides = [1, 1, 1]} : vector<2x8x64xf32> to vector<2x8x8xf32>
    %43 = vector.shape_cast %39 : vector<2x8x8xf32> to vector<1x2x8x8xf32>
    %44 = vector.shape_cast %40 : vector<2x8x8xf32> to vector<1x2x8x8xf32>
    %45 = vector.shape_cast %41 : vector<2x8x8xf32> to vector<1x2x8x8xf32>
    %46 = vector.shape_cast %42 : vector<2x8x8xf32> to vector<1x2x8x8xf32>
    %47 = tpu.concatenate %43, %44, %45, %46 in 0 : vector<1x2x8x8xf32>, vector<1x2x8x8xf32>, vector<1x2x8x8xf32>, vector<1x2x8x8xf32> -> vector<4x2x8x8xf32>
    %48 = vector.shape_cast %47 : vector<4x2x8x8xf32> to vector<8x8x8xf32>
    %49 = vector.extract_strided_slice %28 {offsets = [0, 0, 32], sizes = [2, 8, 8], strides = [1, 1, 1]} : vector<2x8x64xf32> to vector<2x8x8xf32>
    %50 = vector.extract_strided_slice %28 {offsets = [0, 0, 40], sizes = [2, 8, 8], strides = [1, 1, 1]} : vector<2x8x64xf32> to vector<2x8x8xf32>
    %51 = vector.extract_strided_slice %28 {offsets = [0, 0, 48], sizes = [2, 8, 8], strides = [1, 1, 1]} : vector<2x8x64xf32> to vector<2x8x8xf32>
    %52 = vector.extract_strided_slice %28 {offsets = [0, 0, 56], sizes = [2, 8, 8], strides = [1, 1, 1]} : vector<2x8x64xf32> to vector<2x8x8xf32>
    %53 = vector.shape_cast %49 : vector<2x8x8xf32> to vector<1x2x8x8xf32>
    %54 = vector.shape_cast %50 : vector<2x8x8xf32> to vector<1x2x8x8xf32>
    %55 = vector.shape_cast %51 : vector<2x8x8xf32> to vector<1x2x8x8xf32>
    %56 = vector.shape_cast %52 : vector<2x8x8xf32> to vector<1x2x8x8xf32>
    %57 = tpu.concatenate %53, %54, %55, %56 in 0 : vector<1x2x8x8xf32>, vector<1x2x8x8xf32>, vector<1x2x8x8xf32>, vector<1x2x8x8xf32> -> vector<4x2x8x8xf32>
    %58 = vector.shape_cast %57 : vector<4x2x8x8xf32> to vector<8x8x8xf32>
    "tpu.trace_start"() <{level = 10 : i32, message = "bqd,bkd->bqk"}> : () -> ()
    %cst_14 = arith.constant dense<0.000000e+00> : vector<8x8x8xf32>
    %59 = tpu.matmul %38, %48, %cst_14 {dimension_numbers = #tpu.dot_dimension_numbers<[2], [2], [1], [1], [0, 0, 0, 1, 1, 1], [0], [0]>} : vector<8x8x8xf32>, vector<8x8x8xf32>, vector<8x8x8xf32> -> vector<8x8x8xf32>
    "tpu.trace_stop"() : () -> ()
    %60 = vector.shape_cast %3 : vector<8x8xf32> to vector<1x8x8xf32>
    %61 = vector.broadcast %60 : vector<1x8x8xf32> to vector<8x8x8xf32>
    %62 = arith.addf %59, %61 : vector<8x8x8xf32>
    %cst_15 = arith.constant dense<0xFF800000> : vector<8x8xf32>
    %63 = vector.multi_reduction <maximumf>, %62, %cst_15 [2] : vector<8x8x8xf32> to vector<8x8xf32>
    %64 = vector.shape_cast %63 : vector<8x8xf32> to vector<8x8x1xf32>
    %65 = vector.broadcast %64 : vector<8x8x1xf32> to vector<8x8x8xf32>
    %66 = arith.subf %62, %65 : vector<8x8x8xf32>
    %67 = math.exp %66 : vector<8x8x8xf32>
    %cst_16 = arith.constant dense<0.000000e+00> : vector<8x8xf32>
    %68 = vector.multi_reduction <add>, %67, %cst_16 [2] : vector<8x8x8xf32> to vector<8x8xf32>
    %69 = vector.shape_cast %68 : vector<8x8xf32> to vector<8x8x1xf32>
    %70 = tpu.reciprocal %69 {approx = true} : vector<8x8x1xf32> -> vector<8x8x1xf32>
    %71 = vector.broadcast %70 : vector<8x8x1xf32> to vector<8x8x8xf32>
    %72 = arith.mulf %67, %71 : vector<8x8x8xf32>
    "tpu.trace_start"() <{level = 10 : i32, message = "bqk,bkd->bqd"}> : () -> ()
    %cst_17 = arith.constant dense<0.000000e+00> : vector<8x8x8xf32>
    %73 = tpu.matmul %72, %58, %cst_17 {dimension_numbers = #tpu.dot_dimension_numbers<[2], [1], [1], [2], [0, 0, 0, 1, 1, 2], [0], [0]>} : vector<8x8x8xf32>, vector<8x8x8xf32>, vector<8x8x8xf32> -> vector<8x8x8xf32>
    "tpu.trace_stop"() : () -> ()
    %74 = vector.extract_strided_slice %73 {offsets = [0, 0, 0], sizes = [2, 8, 8], strides = [1, 1, 1]} : vector<8x8x8xf32> to vector<2x8x8xf32>
    %75 = vector.shape_cast %74 : vector<2x8x8xf32> to vector<16x8xf32>
    %76 = vector.extract_strided_slice %73 {offsets = [2, 0, 0], sizes = [2, 8, 8], strides = [1, 1, 1]} : vector<8x8x8xf32> to vector<2x8x8xf32>
    %77 = vector.shape_cast %76 : vector<2x8x8xf32> to vector<16x8xf32>
    %78 = vector.extract_strided_slice %73 {offsets = [4, 0, 0], sizes = [2, 8, 8], strides = [1, 1, 1]} : vector<8x8x8xf32> to vector<2x8x8xf32>
    %79 = vector.shape_cast %78 : vector<2x8x8xf32> to vector<16x8xf32>
    %80 = vector.extract_strided_slice %73 {offsets = [6, 0, 0], sizes = [2, 8, 8], strides = [1, 1, 1]} : vector<8x8x8xf32> to vector<2x8x8xf32>
    %81 = vector.shape_cast %80 : vector<2x8x8xf32> to vector<16x8xf32>
    %82 = tpu.concatenate %75, %77, %79, %81 in 1 : vector<16x8xf32>, vector<16x8xf32>, vector<16x8xf32>, vector<16x8xf32> -> vector<16x32xf32>
    %cst_18 = arith.constant dense<0.000000e+00> : vector<16x32xf32>
    %83 = tpu.matmul %82, %25, %cst_18 {dimension_numbers = #tpu.dot_dimension_numbers<[1], [0], [0], [1], [0, 0, 1, 1], [], []>} : vector<16x32xf32>, vector<32x32xf32>, vector<16x32xf32> -> vector<16x32xf32>
    %84 = vector.broadcast %26 : vector<1x32xf32> to vector<16x32xf32>
    %85 = arith.addf %83, %84 : vector<16x32xf32>
    %86 = arith.addf %0, %85 : vector<16x32xf32>
    %cst_19 = arith.constant dense<0.000000e+00> : vector<16xf32>
    %87 = vector.multi_reduction <add>, %86, %cst_19 [1] : vector<16x32xf32> to vector<16xf32>
    %88 = vector.shape_cast %87 : vector<16xf32> to vector<16x1xf32>
    %cst_20 = arith.constant 3.200000e+01 : f32
    %89 = vector.broadcast %cst_20 : f32 to vector<16x1xf32>
    %90 = arith.divf %88, %89 : vector<16x1xf32>
    %91 = vector.broadcast %90 : vector<16x1xf32> to vector<16x32xf32>
    %92 = arith.subf %86, %91 : vector<16x32xf32>
    %93 = arith.mulf %92, %92 : vector<16x32xf32>
    %cst_21 = arith.constant dense<0.000000e+00> : vector<16xf32>
    %94 = vector.multi_reduction <add>, %93, %cst_21 [1] : vector<16x32xf32> to vector<16xf32>
    %95 = vector.shape_cast %94 : vector<16xf32> to vector<16x1xf32>
    %cst_22 = arith.constant 3.200000e+01 : f32
    %96 = vector.broadcast %cst_22 : f32 to vector<16x1xf32>
    %97 = arith.divf %95, %96 : vector<16x1xf32>
    %cst_23 = arith.constant 9.99999974E-6 : f32
    %98 = vector.broadcast %cst_23 : f32 to vector<16x1xf32>
    %99 = arith.addf %97, %98 : vector<16x1xf32>
    %100 = math.rsqrt %99 : vector<16x1xf32>
    %101 = vector.broadcast %100 : vector<16x1xf32> to vector<16x32xf32>
    %102 = arith.mulf %92, %101 : vector<16x32xf32>
    %103 = vector.broadcast %8 : vector<1x32xf32> to vector<16x32xf32>
    %104 = arith.mulf %102, %103 : vector<16x32xf32>
    %105 = vector.broadcast %9 : vector<1x32xf32> to vector<16x32xf32>
    %106 = arith.addf %104, %105 : vector<16x32xf32>
    %107 = vector.extract_strided_slice %6 {offsets = [0, 0], sizes = [32, 32], strides = [1, 1]} : vector<32x128xf32> to vector<32x32xf32>
    %cst_24 = arith.constant dense<0.000000e+00> : vector<16x32xf32>
    %108 = tpu.matmul %106, %107, %cst_24 {dimension_numbers = #tpu.dot_dimension_numbers<[1], [0], [0], [1], [0, 0, 1, 1], [], []>} : vector<16x32xf32>, vector<32x32xf32>, vector<16x32xf32> -> vector<16x32xf32>
    %109 = vector.extract_strided_slice %15 {offsets = [0, 0], sizes = [1, 32], strides = [1, 1]} : vector<1x128xf32> to vector<1x32xf32>
    %110 = vector.broadcast %109 : vector<1x32xf32> to vector<16x32xf32>
    %111 = arith.addf %108, %110 : vector<16x32xf32>
    %112 = vector.extract_strided_slice %6 {offsets = [0, 32], sizes = [32, 64], strides = [1, 1]} : vector<32x128xf32> to vector<32x64xf32>
    %cst_25 = arith.constant dense<0.000000e+00> : vector<32x64xf32>
    %113 = tpu.matmul %1, %112, %cst_25 {dimension_numbers = #tpu.dot_dimension_numbers<[1], [0], [0], [1], [0, 0, 1, 1], [], []>} : vector<32x32xf32>, vector<32x64xf32>, vector<32x64xf32> -> vector<32x64xf32>
    %114 = vector.extract_strided_slice %15 {offsets = [0, 32], sizes = [1, 64], strides = [1, 1]} : vector<1x128xf32> to vector<1x64xf32>
    %115 = vector.broadcast %114 : vector<1x64xf32> to vector<32x64xf32>
    %116 = arith.addf %113, %115 : vector<32x64xf32>
    %117 = vector.extract_strided_slice %6 {offsets = [0, 96], sizes = [32, 32], strides = [1, 1]} : vector<32x128xf32> to vector<32x32xf32>
    %118 = vector.extract_strided_slice %15 {offsets = [0, 96], sizes = [1, 32], strides = [1, 1]} : vector<1x128xf32> to vector<1x32xf32>
    %119 = vector.shape_cast %111 : vector<16x32xf32> to vector<2x8x32xf32>
    %120 = vector.shape_cast %116 : vector<32x64xf32> to vector<2x16x64xf32>
    %121 = vector.extract_strided_slice %119 {offsets = [0, 0, 0], sizes = [2, 8, 8], strides = [1, 1, 1]} : vector<2x8x32xf32> to vector<2x8x8xf32>
    %122 = vector.extract_strided_slice %119 {offsets = [0, 0, 8], sizes = [2, 8, 8], strides = [1, 1, 1]} : vector<2x8x32xf32> to vector<2x8x8xf32>
    %123 = vector.extract_strided_slice %119 {offsets = [0, 0, 16], sizes = [2, 8, 8], strides = [1, 1, 1]} : vector<2x8x32xf32> to vector<2x8x8xf32>
    %124 = vector.extract_strided_slice %119 {offsets = [0, 0, 24], sizes = [2, 8, 8], strides = [1, 1, 1]} : vector<2x8x32xf32> to vector<2x8x8xf32>
    %125 = vector.shape_cast %121 : vector<2x8x8xf32> to vector<1x2x8x8xf32>
    %126 = vector.shape_cast %122 : vector<2x8x8xf32> to vector<1x2x8x8xf32>
    %127 = vector.shape_cast %123 : vector<2x8x8xf32> to vector<1x2x8x8xf32>
    %128 = vector.shape_cast %124 : vector<2x8x8xf32> to vector<1x2x8x8xf32>
    %129 = tpu.concatenate %125, %126, %127, %128 in 0 : vector<1x2x8x8xf32>, vector<1x2x8x8xf32>, vector<1x2x8x8xf32>, vector<1x2x8x8xf32> -> vector<4x2x8x8xf32>
    %130 = vector.shape_cast %129 : vector<4x2x8x8xf32> to vector<8x8x8xf32>
    %131 = vector.extract_strided_slice %120 {offsets = [0, 0, 0], sizes = [2, 16, 8], strides = [1, 1, 1]} : vector<2x16x64xf32> to vector<2x16x8xf32>
    %132 = vector.extract_strided_slice %120 {offsets = [0, 0, 8], sizes = [2, 16, 8], strides = [1, 1, 1]} : vector<2x16x64xf32> to vector<2x16x8xf32>
    %133 = vector.extract_strided_slice %120 {offsets = [0, 0, 16], sizes = [2, 16, 8], strides = [1, 1, 1]} : vector<2x16x64xf32> to vector<2x16x8xf32>
    %134 = vector.extract_strided_slice %120 {offsets = [0, 0, 24], sizes = [2, 16, 8], strides = [1, 1, 1]} : vector<2x16x64xf32> to vector<2x16x8xf32>
    %135 = vector.shape_cast %131 : vector<2x16x8xf32> to vector<1x2x16x8xf32>
    %136 = vector.shape_cast %132 : vector<2x16x8xf32> to vector<1x2x16x8xf32>
    %137 = vector.shape_cast %133 : vector<2x16x8xf32> to vector<1x2x16x8xf32>
    %138 = vector.shape_cast %134 : vector<2x16x8xf32> to vector<1x2x16x8xf32>
    %139 = tpu.concatenate %135, %136, %137, %138 in 0 : vector<1x2x16x8xf32>, vector<1x2x16x8xf32>, vector<1x2x16x8xf32>, vector<1x2x16x8xf32> -> vector<4x2x16x8xf32>
    %140 = vector.shape_cast %139 : vector<4x2x16x8xf32> to vector<8x16x8xf32>
    %141 = vector.extract_strided_slice %120 {offsets = [0, 0, 32], sizes = [2, 16, 8], strides = [1, 1, 1]} : vector<2x16x64xf32> to vector<2x16x8xf32>
    %142 = vector.extract_strided_slice %120 {offsets = [0, 0, 40], sizes = [2, 16, 8], strides = [1, 1, 1]} : vector<2x16x64xf32> to vector<2x16x8xf32>
    %143 = vector.extract_strided_slice %120 {offsets = [0, 0, 48], sizes = [2, 16, 8], strides = [1, 1, 1]} : vector<2x16x64xf32> to vector<2x16x8xf32>
    %144 = vector.extract_strided_slice %120 {offsets = [0, 0, 56], sizes = [2, 16, 8], strides = [1, 1, 1]} : vector<2x16x64xf32> to vector<2x16x8xf32>
    %145 = vector.shape_cast %141 : vector<2x16x8xf32> to vector<1x2x16x8xf32>
    %146 = vector.shape_cast %142 : vector<2x16x8xf32> to vector<1x2x16x8xf32>
    %147 = vector.shape_cast %143 : vector<2x16x8xf32> to vector<1x2x16x8xf32>
    %148 = vector.shape_cast %144 : vector<2x16x8xf32> to vector<1x2x16x8xf32>
    %149 = tpu.concatenate %145, %146, %147, %148 in 0 : vector<1x2x16x8xf32>, vector<1x2x16x8xf32>, vector<1x2x16x8xf32>, vector<1x2x16x8xf32> -> vector<4x2x16x8xf32>
    %150 = vector.shape_cast %149 : vector<4x2x16x8xf32> to vector<8x16x8xf32>
    "tpu.trace_start"() <{level = 10 : i32, message = "bqd,bkd->bqk"}> : () -> ()
    %cst_26 = arith.constant dense<0.000000e+00> : vector<8x8x16xf32>
    %151 = tpu.matmul %130, %140, %cst_26 {dimension_numbers = #tpu.dot_dimension_numbers<[2], [2], [1], [1], [0, 0, 0, 1, 1, 1], [0], [0]>} : vector<8x8x8xf32>, vector<8x16x8xf32>, vector<8x8x16xf32> -> vector<8x8x16xf32>
    "tpu.trace_stop"() : () -> ()
    %152 = vector.shape_cast %4 : vector<8x16xf32> to vector<1x8x16xf32>
    %153 = vector.broadcast %152 : vector<1x8x16xf32> to vector<8x8x16xf32>
    %154 = arith.addf %151, %153 : vector<8x8x16xf32>
    %cst_27 = arith.constant dense<0xFF800000> : vector<8x8xf32>
    %155 = vector.multi_reduction <maximumf>, %154, %cst_27 [2] : vector<8x8x16xf32> to vector<8x8xf32>
    %156 = vector.shape_cast %155 : vector<8x8xf32> to vector<8x8x1xf32>
    %157 = vector.broadcast %156 : vector<8x8x1xf32> to vector<8x8x16xf32>
    %158 = arith.subf %154, %157 : vector<8x8x16xf32>
    %159 = math.exp %158 : vector<8x8x16xf32>
    %cst_28 = arith.constant dense<0.000000e+00> : vector<8x8xf32>
    %160 = vector.multi_reduction <add>, %159, %cst_28 [2] : vector<8x8x16xf32> to vector<8x8xf32>
    %161 = vector.shape_cast %160 : vector<8x8xf32> to vector<8x8x1xf32>
    %162 = tpu.reciprocal %161 {approx = true} : vector<8x8x1xf32> -> vector<8x8x1xf32>
    %163 = vector.broadcast %162 : vector<8x8x1xf32> to vector<8x8x16xf32>
    %164 = arith.mulf %159, %163 : vector<8x8x16xf32>
    "tpu.trace_start"() <{level = 10 : i32, message = "bqk,bkd->bqd"}> : () -> ()
    %cst_29 = arith.constant dense<0.000000e+00> : vector<8x8x8xf32>
    %165 = tpu.matmul %164, %150, %cst_29 {dimension_numbers = #tpu.dot_dimension_numbers<[2], [1], [1], [2], [0, 0, 0, 1, 1, 2], [0], [0]>} : vector<8x8x16xf32>, vector<8x16x8xf32>, vector<8x8x8xf32> -> vector<8x8x8xf32>
    "tpu.trace_stop"() : () -> ()
    %166 = vector.extract_strided_slice %165 {offsets = [0, 0, 0], sizes = [2, 8, 8], strides = [1, 1, 1]} : vector<8x8x8xf32> to vector<2x8x8xf32>
    %167 = vector.shape_cast %166 : vector<2x8x8xf32> to vector<16x8xf32>
    %168 = vector.extract_strided_slice %165 {offsets = [2, 0, 0], sizes = [2, 8, 8], strides = [1, 1, 1]} : vector<8x8x8xf32> to vector<2x8x8xf32>
    %169 = vector.shape_cast %168 : vector<2x8x8xf32> to vector<16x8xf32>
    %170 = vector.extract_strided_slice %165 {offsets = [4, 0, 0], sizes = [2, 8, 8], strides = [1, 1, 1]} : vector<8x8x8xf32> to vector<2x8x8xf32>
    %171 = vector.shape_cast %170 : vector<2x8x8xf32> to vector<16x8xf32>
    %172 = vector.extract_strided_slice %165 {offsets = [6, 0, 0], sizes = [2, 8, 8], strides = [1, 1, 1]} : vector<8x8x8xf32> to vector<2x8x8xf32>
    %173 = vector.shape_cast %172 : vector<2x8x8xf32> to vector<16x8xf32>
    %174 = tpu.concatenate %167, %169, %171, %173 in 1 : vector<16x8xf32>, vector<16x8xf32>, vector<16x8xf32>, vector<16x8xf32> -> vector<16x32xf32>
    %cst_30 = arith.constant dense<0.000000e+00> : vector<16x32xf32>
    %175 = tpu.matmul %174, %117, %cst_30 {dimension_numbers = #tpu.dot_dimension_numbers<[1], [0], [0], [1], [0, 0, 1, 1], [], []>} : vector<16x32xf32>, vector<32x32xf32>, vector<16x32xf32> -> vector<16x32xf32>
    %176 = vector.broadcast %118 : vector<1x32xf32> to vector<16x32xf32>
    %177 = arith.addf %175, %176 : vector<16x32xf32>
    %178 = arith.addf %106, %177 : vector<16x32xf32>
    %cst_31 = arith.constant dense<0.000000e+00> : vector<16xf32>
    %179 = vector.multi_reduction <add>, %178, %cst_31 [1] : vector<16x32xf32> to vector<16xf32>
    %180 = vector.shape_cast %179 : vector<16xf32> to vector<16x1xf32>
    %cst_32 = arith.constant 3.200000e+01 : f32
    %181 = vector.broadcast %cst_32 : f32 to vector<16x1xf32>
    %182 = arith.divf %180, %181 : vector<16x1xf32>
    %183 = vector.broadcast %182 : vector<16x1xf32> to vector<16x32xf32>
    %184 = arith.subf %178, %183 : vector<16x32xf32>
    %185 = arith.mulf %184, %184 : vector<16x32xf32>
    %cst_33 = arith.constant dense<0.000000e+00> : vector<16xf32>
    %186 = vector.multi_reduction <add>, %185, %cst_33 [1] : vector<16x32xf32> to vector<16xf32>
    %187 = vector.shape_cast %186 : vector<16xf32> to vector<16x1xf32>
    %cst_34 = arith.constant 3.200000e+01 : f32
    %188 = vector.broadcast %cst_34 : f32 to vector<16x1xf32>
    %189 = arith.divf %187, %188 : vector<16x1xf32>
    %cst_35 = arith.constant 9.99999974E-6 : f32
    %190 = vector.broadcast %cst_35 : f32 to vector<16x1xf32>
    %191 = arith.addf %189, %190 : vector<16x1xf32>
    %192 = math.rsqrt %191 : vector<16x1xf32>
    %193 = vector.broadcast %192 : vector<16x1xf32> to vector<16x32xf32>
    %194 = arith.mulf %184, %193 : vector<16x32xf32>
    %195 = vector.broadcast %10 : vector<1x32xf32> to vector<16x32xf32>
    %196 = arith.mulf %194, %195 : vector<16x32xf32>
    %197 = vector.broadcast %11 : vector<1x32xf32> to vector<16x32xf32>
    %198 = arith.addf %196, %197 : vector<16x32xf32>
    %cst_36 = arith.constant dense<0.000000e+00> : vector<16x64xf32>
    %199 = tpu.matmul %198, %16, %cst_36 {dimension_numbers = #tpu.dot_dimension_numbers<[1], [0], [0], [1], [0, 0, 1, 1], [], []>} : vector<16x32xf32>, vector<32x64xf32>, vector<16x64xf32> -> vector<16x64xf32>
    %200 = vector.broadcast %12 : vector<1x64xf32> to vector<16x64xf32>
    %201 = arith.addf %199, %200 : vector<16x64xf32>
    %cst_37 = arith.constant 0.000000e+00 : f32
    %202 = vector.broadcast %cst_37 : f32 to vector<16x64xf32>
    %203 = arith.maximumf %201, %202 : vector<16x64xf32>
    %cst_38 = arith.constant dense<0.000000e+00> : vector<16x32xf32>
    %204 = tpu.matmul %203, %17, %cst_38 {dimension_numbers = #tpu.dot_dimension_numbers<[1], [0], [0], [1], [0, 0, 1, 1], [], []>} : vector<16x64xf32>, vector<64x32xf32>, vector<16x32xf32> -> vector<16x32xf32>
    %205 = vector.broadcast %13 : vector<1x32xf32> to vector<16x32xf32>
    %206 = arith.addf %204, %205 : vector<16x32xf32>
    %207 = arith.addf %178, %206 : vector<16x32xf32>
    %c0_39 = arith.constant 0 : index
    %c0_40 = arith.constant 0 : index
    %208 = vector.load %arg7[%c0_39, %c0_40] : memref<16x32xf32, #tpu.memory_space<vmem>>, vector<16x32xf32>
    tpu.vector_store %arg7[%c0_39, %c0_40], %207 {strides = array<i32>} : memref<16x32xf32, #tpu.memory_space<vmem>>, vector<16x32xf32>,
    return
  }
}

</mosaic_0001>

<llo_original>
// kernel: tpu_custom_call.1
$region0: #{tpu_custom_call.1}
  #allocation0 [shape = 'u32[]', space=smem, size = 0x4, offset = 0x4, fixed_abs, tag = 'smem constant byte address 0x4 - core index']
  #allocation1 [shape = 'u32[144,128]{1,0:T(1,128)}', space=vmem, size = 0x12000, scoped, tag = 'internal scratch']
  %s0 = inlined_call_operand.vmem [shape: f32[16,32], index: 0, kind: input, shape index: {}]
  %s1 = inlined_call_operand.vmem [shape: f32[32,32], index: 1, kind: input, shape index: {}]
  %s2 = inlined_call_operand.vmem [shape: f32[8,24], index: 2, kind: input, shape index: {}]
  %s3 = inlined_call_operand.vmem [shape: f32[32,128], index: 3, kind: input, shape index: {}]
  %s4 = inlined_call_operand.vmem [shape: f32[32,128], index: 4, kind: input, shape index: {}]
  %s5 = inlined_call_operand.vmem [shape: f32[96,64], index: 5, kind: input, shape index: {}]
  %s6 = inlined_call_operand.vmem [shape: f32[8,128], index: 6, kind: input, shape index: {}]
  %s7 = inlined_call_operand.hbm [shape: f32[16,32], index: 7, kind: output, shape index: {}]
  %s8 = sld [smem:[#allocation0]]
  $region38: #{tpu_custom_call.1} parent=0
    _
  %s10 = ssub.s32 1, %s8
  %s11 = scalar_select 0, %s10, %s8
  $region1: #{tpu_custom_call.1} parent=0
    #allocation2 [shape = 'u8[8192]{0}', space=vmem, size = 0x2000, scoped, tag = 'output window, operand 0, single buffered']
    #allocation3 [shape = 's32[1]{0}', space=sflag, size = 0x4, scoped, tag = 'scoped memory for tpu_custom_call.1']
    %12 = vsyncpa [#allocation3], 0
    // Predicated region
    $region2: #{tpu_custom_call.1} parent=1 // pred_check
      _
    $region3: #{tpu_custom_call.1} parent=1 // pred_check_branch
      %14 = sbr.rel (0) target = $region5
    $region4: #{tpu_custom_call.1} parent=1 // pred_region
      _
    $region5: #{tpu_custom_call.1} parent=1 // pred_fallthru
      _
    // Predicated region
    $region6: #{tpu_custom_call.1} parent=1 // pred_check
      _
    $region7: #{tpu_custom_call.1} parent=1 // pred_check_branch
      %16 = sbr.rel (0) target = $region9
    $region8: #{tpu_custom_call.1} parent=1 // pred_region
      _
    $region9: #{tpu_custom_call.1} parent=1 // pred_fallthru
      _
    // Predicated region
    $region10: #{tpu_custom_call.1} parent=1 // pred_check
      _
    $region11: #{tpu_custom_call.1} parent=1 // pred_check_branch
      %18 = sbr.rel (0) target = $region13
    $region12: #{tpu_custom_call.1} parent=1 // pred_region
      _
    $region13: #{tpu_custom_call.1} parent=1 // pred_fallthru
      _
    // Predicated region
    $region14: #{tpu_custom_call.1} parent=1 // pred_check
      _
    $region15: #{tpu_custom_call.1} parent=1 // pred_check_branch
      %20 = sbr.rel (0) target = $region17
    $region16: #{tpu_custom_call.1} parent=1 // pred_region
      _
    $region17: #{tpu_custom_call.1} parent=1 // pred_fallthru
      _
    // Predicated region
    $region18: #{tpu_custom_call.1} parent=1 // pred_check
      _
    $region19: #{tpu_custom_call.1} parent=1 // pred_check_branch
      %22 = sbr.rel (0) target = $region21
    $region20: #{tpu_custom_call.1} parent=1 // pred_region
      _
    $region21: #{tpu_custom_call.1} parent=1 // pred_fallthru
      _
    // Predicated region
    $region22: #{tpu_custom_call.1} parent=1 // pred_check
      _
    $region23: #{tpu_custom_call.1} parent=1 // pred_check_branch
      %24 = sbr.rel (0) target = $region25
    $region24: #{tpu_custom_call.1} parent=1 // pred_region
      _
    $region25: #{tpu_custom_call.1} parent=1 // pred_fallthru
      _
    // Predicated region
    $region26: #{tpu_custom_call.1} parent=1 // pred_check
      _
    $region27: #{tpu_custom_call.1} parent=1 // pred_check_branch
      %26 = sbr.rel (0) target = $region29
    $region28: #{tpu_custom_call.1} parent=1 // pred_region
      _
    $region29: #{tpu_custom_call.1} parent=1 // pred_fallthru
      _
    %v27 = vld [vmem:[%s0] sm:$0xff]
    %v28 = vld [vmem:[%s0 + $0x8] sm:$0xff]
    %v29 = vld [vmem:[%s1] sm:$0xff]
    %v30 = vld [vmem:[%s1 + $0x8] sm:$0xff]
    %v31 = vld [vmem:[%s1 + $0x10] sm:$0xff]
    %v32 = vld [vmem:[%s1 + $0x18] sm:$0xff]
    %v33 = vld [vmem:[%s2] sm:$0xff]
    %v34 = vld [vmem:[%s3] sm:$0xff]
    %v35 = vld [vmem:[%s3 + $0x8] sm:$0xff]
    %v36 = vld [vmem:[%s3 + $0x10] sm:$0xff]
    %v37 = vld [vmem:[%s3 + $0x18] sm:$0xff]
    %v38 = vld [vmem:[%s4] sm:$0xff]
    %v39 = vld [vmem:[%s4 + $0x8] sm:$0xff]
    %v40 = vld [vmem:[%s4 + $0x10] sm:$0xff]
    %v41 = vld [vmem:[%s4 + $0x18] sm:$0xff]
    %v42 = vld [vmem:[%s6] sm:$0xff]
    %v43 = vld [vmem:[%s5] sm:$0xff]
    %v44 = vld [vmem:[%s5 + $0x8] sm:$0xff]
    %v45 = vld [vmem:[%s5 + $0x10] sm:$0xff]
    %v46 = vld [vmem:[%s5 + $0x18] sm:$0xff]
    %v47 = vld [vmem:[%s5 + $0x20] sm:$0xff]
    %v48 = vld [vmem:[%s5 + $0x28] sm:$0xff]
    %v49 = vld [vmem:[%s5 + $0x30] sm:$0xff]
    %v50 = vld [vmem:[%s5 + $0x38] sm:$0xff]
    %v51 = vld [vmem:[%s5 + $0x40] sm:$0xff]
    %v52 = vld [vmem:[%s5 + $0x48] sm:$0xff]
    %v53 = vld [vmem:[%s5 + $0x50] sm:$0xff]
    %v54 = vld [vmem:[%s5 + $0x58] sm:$0xff]
    %v55 = vlaneseq
    %v56 = vshrl.u32 %v55, 7
    %v57 = vsub.s32 6, %v56
    %v58 = vrot.slane %v42, %v57
    %vm59 = vcmask 261120
    %v61 = vsel %vm59, %v27, 0
    %v64 = vsel %vm59, %v28, 0
    %66 = vmatprep.subr.mxu0 0.0
    %67 = vmatpush1.msra.mxu0 0.0
    %68 = vmatprep.subr.mxu0 0.0
    %69 = vmatpush1.msra.mxu0 0.0
    %70 = vmatprep.subr.mxu0 0.0
    %71 = vmatpush1.msra.mxu0 0.0
    %72 = vmatprep.subr.mxu0 0.0
    %73 = vmatpush1.msra.mxu0 0.0
    %74 = vmatprep.subr.mxu0 0.0
    %75 = vmatpush1.msra.mxu0 0.0
    %76 = vmatprep.subr.mxu0 0.0
    %77 = vmatpush1.msra.mxu0 0.0
    %78 = vmatprep.subr.mxu0 0.0
    %79 = vmatpush1.msra.mxu0 0.0
    %80 = vmatprep.subr.mxu0 0.0
    %81 = vmatpush1.msra.mxu0 0.0
    %82 = vmatprep.subr.mxu0 0.0
    %83 = vmatpush1.msra.mxu0 0.0
    %84 = vmatprep.subr.mxu0 0.0
    %85 = vmatpush1.msra.mxu0 0.0
    %86 = vmatprep.subr.mxu0 0.0
    %87 = vmatpush1.msra.mxu0 0.0
    %88 = vmatprep.subr.mxu0 0.0
    %89 = vmatpush1.msra.mxu0 0.0
    %90 = vmatprep.subr.mxu0 0.0
    %91 = vmatpush1.msra.mxu0 %v37
    %92 = vmatprep.subr.mxu0 0.0
    %93 = vmatpush1.msra.mxu0 %v36
    %94 = vmatprep.subr.mxu0 0.0
    %95 = vmatpush1.msra.mxu0 %v35
    %96 = vmatprep.subr.mxu0 0.0
    %97 = vmatpush1.msra.mxu0 %v34
    %98 = vmatprep.subr.mxu0 0.0
    %99 = vmatpush2.msra.mxu0 0.0
    %100 = vmatprep.subr.mxu0 0.0
    %101 = vmatpush2.msra.mxu0 0.0
    %102 = vmatprep.subr.mxu0 0.0
    %103 = vmatpush2.msra.mxu0 0.0
    %104 = vmatprep.subr.mxu0 0.0
    %105 = vmatpush2.msra.mxu0 0.0
    %106 = vmatprep.subr.mxu0 0.0
    %107 = vmatpush2.msra.mxu0 0.0
    %108 = vmatprep.subr.mxu0 0.0
    %109 = vmatpush2.msra.mxu0 0.0
    %110 = vmatprep.subr.mxu0 0.0
    %111 = vmatpush2.msra.mxu0 0.0
    %112 = vmatprep.subr.mxu0 0.0
    %113 = vmatpush2.msra.mxu0 0.0
    %114 = vmatprep.subr.mxu0 0.0
    %115 = vmatpush2.msra.mxu0 0.0
    %116 = vmatprep.subr.mxu0 0.0
    %117 = vmatpush2.msra.mxu0 0.0
    %118 = vmatprep.subr.mxu0 0.0
    %119 = vmatpush2.msra.mxu0 0.0
    %120 = vmatprep.subr.mxu0 0.0
    %121 = vmatpush2.msra.mxu0 0.0
    %122 = vmatprep.subr.mxu0 0.0
    %123 = vmatpush2.msra.mxu0 0.0
    %124 = vmatprep.subr.mxu0 0.0
    %125 = vmatpush2.msra.mxu0 0.0
    %126 = vmatprep.subr.mxu0 0.0
    %127 = vmatpush2.msra.mxu0 0.0
    %128 = vmatprep.subr.mxu0 0.0
    %129 = vmatpush2.msra.mxu0 0.0
    %130 = vmatprep.mubr.f32.mxu0 0.0
    %131 = vmatmul.mubr.f32.gmra.mxu0 %v61
    %v132 = vpop.f32.mrf.mxu0
    %v133 = vadd.f32 %v58, %v132
    %v134 = vpop.f32.mrf.mxu0
    %135 = vmatprep.mubr.f32.mxu0 0.0
    %136 = vmatmul.mubr.f32.gmra.mxu0 %v64
    %v137 = vpop.f32.mrf.mxu0
    %v138 = vadd.f32 %v58, %v137
    %v139 = vpop.f32.mrf.mxu0
    %140 = vdwg.mxu0
    %143 = vrot.lane.b32.xlu0 %v133, 120
    %v144 = vpop.permute.xlu0 %143
    %145 = vrot.lane.b32.xlu0 %v138, 120
    %v146 = vpop.permute.xlu0 %145
    %147 = vrot.lane.b32.xlu0 %v133, 112
    %v148 = vpop.permute.xlu0 %147
    %149 = vrot.lane.b32.xlu0 %v138, 112
    %v150 = vpop.permute.xlu0 %149
    %151 = vrot.lane.b32.xlu0 %v133, 104
    %v152 = vpop.permute.xlu0 %151
    %153 = vrot.lane.b32.xlu0 %v138, 104
    %v154 = vpop.permute.xlu0 %153
    %155 = vrot.lane.b32.xlu0 %v133, 96
    %v156 = vpop.permute.xlu0 %155
    %vm157 = vcmask 64512
    %v158 = vsel %vm157, %v133, 0
    %v160 = vsel %vm157, %v156, 0
    %162 = vmatprep.subr.mxu0 0.0
    %163 = vmatpush1.xpose.msra.mxu0 0.0
    %164 = vmatprep.subr.mxu0 0.0
    %165 = vmatpush1.xpose.msra.mxu0 0.0
    %166 = vmatprep.subr.mxu0 0.0
    %167 = vmatpush1.xpose.msra.mxu0 0.0
    %168 = vmatprep.subr.mxu0 0.0
    %169 = vmatpush1.xpose.msra.mxu0 0.0
    %170 = vmatprep.subr.mxu0 0.0
    %171 = vmatpush1.xpose.msra.mxu0 0.0
    %172 = vmatprep.subr.mxu0 0.0
    %173 = vmatpush1.xpose.msra.mxu0 0.0
    %174 = vmatprep.subr.mxu0 0.0
    %175 = vmatpush1.xpose.msra.mxu0 0.0
    %176 = vmatprep.subr.mxu0 0.0
    %177 = vmatpush1.xpose.msra.mxu0 0.0
    %178 = vmatprep.subr.mxu0 0.0
    %179 = vmatpush1.xpose.msra.mxu0 0.0
    %180 = vmatprep.subr.mxu0 0.0
    %181 = vmatpush1.xpose.msra.mxu0 0.0
    %182 = vmatprep.subr.mxu0 0.0
    %183 = vmatpush1.xpose.msra.mxu0 0.0
    %184 = vmatprep.subr.mxu0 0.0
    %185 = vmatpush1.xpose.msra.mxu0 0.0
    %186 = vmatprep.subr.mxu0 0.0
    %187 = vmatpush1.xpose.msra.mxu0 0.0
    %188 = vmatprep.subr.mxu0 0.0
    %189 = vmatpush1.xpose.msra.mxu0 0.0
    %190 = vmatprep.subr.mxu0 0.0
    %191 = vmatpush1.xpose.msra.mxu0 0.0
    %192 = vmatprep.subr.mxu0 0.0
    %193 = vmatpush1.xpose.msra.mxu0 %v160
    %194 = vmatprep.subr.mxu0 0.0
    %195 = vmatpush2.xpose.msra.mxu0 0.0
    %196 = vmatprep.subr.mxu0 0.0
    %197 = vmatpush2.xpose.msra.mxu0 0.0
    %198 = vmatprep.subr.mxu0 0.0
    %199 = vmatpush2.xpose.msra.mxu0 0.0
    %200 = vmatprep.subr.mxu0 0.0
    %201 = vmatpush2.xpose.msra.mxu0 0.0
    %202 = vmatprep.subr.mxu0 0.0
    %203 = vmatpush2.xpose.msra.mxu0 0.0
    %204 = vmatprep.subr.mxu0 0.0
    %205 = vmatpush2.xpose.msra.mxu0 0.0
    %206 = vmatprep.subr.mxu0 0.0
    %207 = vmatpush2.xpose.msra.mxu0 0.0
    %208 = vmatprep.subr.mxu0 0.0
    %209 = vmatpush2.xpose.msra.mxu0 0.0
    %210 = vmatprep.subr.mxu0 0.0
    %211 = vmatpush2.xpose.msra.mxu0 0.0
    %212 = vmatprep.subr.mxu0 0.0
    %213 = vmatpush2.xpose.msra.mxu0 0.0
    %214 = vmatprep.subr.mxu0 0.0
    %215 = vmatpush2.xpose.msra.mxu0 0.0
    %216 = vmatprep.subr.mxu0 0.0
    %217 = vmatpush2.xpose.msra.mxu0 0.0
    %218 = vmatprep.subr.mxu0 0.0
    %219 = vmatpush2.xpose.msra.mxu0 0.0
    %220 = vmatprep.subr.mxu0 0.0
    %221 = vmatpush2.xpose.msra.mxu0 0.0
    %222 = vmatprep.subr.mxu0 0.0
    %223 = vmatpush2.xpose.msra.mxu0 0.0
    %224 = vmatprep.subr.mxu0 0.0
    %225 = vmatpush2.xpose.msra.mxu0 0.0
    %226 = vmatprep.mubr.f32.mxu0 0.0
    %227 = vmatmul.mubr.f32.gmra.mxu0 %v158
    %v228 = vpop.f32.mrf.mxu0
    %v229 = vadd.f32 %v33, %v228
    %v230 = vpop.f32.mrf.mxu0
    %231 = vdwg.mxu0
    %232 = vrot.lane.b32.xlu0 %v138, 96
    %v233 = vpop.permute.xlu0 %232
    %v234 = vsel %vm157, %v138, 0
    %v236 = vsel %vm157, %v233, 0
    %238 = vmatprep.subr.mxu0 0.0
    %239 = vmatpush1.xpose.msra.mxu0 0.0
    %240 = vmatprep.subr.mxu0 0.0
    %241 = vmatpush1.xpose.msra.mxu0 0.0
    %242 = vmatprep.subr.mxu0 0.0
    %243 = vmatpush1.xpose.msra.mxu0 0.0
    %244 = vmatprep.subr.mxu0 0.0
    %245 = vmatpush1.xpose.msra.mxu0 0.0
    %246 = vmatprep.subr.mxu0 0.0
    %247 = vmatpush1.xpose.msra.mxu0 0.0
    %248 = vmatprep.subr.mxu0 0.0
    %249 = vmatpush1.xpose.msra.mxu0 0.0
    %250 = vmatprep.subr.mxu0 0.0
    %251 = vmatpush1.xpose.msra.mxu0 0.0
    %252 = vmatprep.subr.mxu0 0.0
    %253 = vmatpush1.xpose.msra.mxu0 0.0
    %254 = vmatprep.subr.mxu0 0.0
    %255 = vmatpush1.xpose.msra.mxu0 0.0
    %256 = vmatprep.subr.mxu0 0.0
    %257 = vmatpush1.xpose.msra.mxu0 0.0
    %258 = vmatprep.subr.mxu0 0.0
    %259 = vmatpush1.xpose.msra.mxu0 0.0
    %260 = vmatprep.subr.mxu0 0.0
    %261 = vmatpush1.xpose.msra.mxu0 0.0
    %262 = vmatprep.subr.mxu0 0.0
    %263 = vmatpush1.xpose.msra.mxu0 0.0
    %264 = vmatprep.subr.mxu0 0.0
    %265 = vmatpush1.xpose.msra.mxu0 0.0
    %266 = vmatprep.subr.mxu0 0.0
    %267 = vmatpush1.xpose.msra.mxu0 0.0
    %268 = vmatprep.subr.mxu0 0.0
    %269 = vmatpush1.xpose.msra.mxu0 %v236
    %270 = vmatprep.subr.mxu0 0.0
    %271 = vmatpush2.xpose.msra.mxu0 0.0
    %272 = vmatprep.subr.mxu0 0.0
    %273 = vmatpush2.xpose.msra.mxu0 0.0
    %274 = vmatprep.subr.mxu0 0.0
    %275 = vmatpush2.xpose.msra.mxu0 0.0
    %276 = vmatprep.subr.mxu0 0.0
    %277 = vmatpush2.xpose.msra.mxu0 0.0
    %278 = vmatprep.subr.mxu0 0.0
    %279 = vmatpush2.xpose.msra.mxu0 0.0
    %280 = vmatprep.subr.mxu0 0.0
    %281 = vmatpush2.xpose.msra.mxu0 0.0
    %282 = vmatprep.subr.mxu0 0.0
    %283 = vmatpush2.xpose.msra.mxu0 0.0
    %284 = vmatprep.subr.mxu0 0.0
    %285 = vmatpush2.xpose.msra.mxu0 0.0
    %286 = vmatprep.subr.mxu0 0.0
    %287 = vmatpush2.xpose.msra.mxu0 0.0
    %288 = vmatprep.subr.mxu0 0.0
    %289 = vmatpush2.xpose.msra.mxu0 0.0
    %290 = vmatprep.subr.mxu0 0.0
    %291 = vmatpush2.xpose.msra.mxu0 0.0
    %292 = vmatprep.subr.mxu0 0.0
    %293 = vmatpush2.xpose.msra.mxu0 0.0
    %294 = vmatprep.subr.mxu0 0.0
    %295 = vmatpush2.xpose.msra.mxu0 0.0
    %296 = vmatprep.subr.mxu0 0.0
    %297 = vmatpush2.xpose.msra.mxu0 0.0
    %298 = vmatprep.subr.mxu0 0.0
    %299 = vmatpush2.xpose.msra.mxu0 0.0
    %300 = vmatprep.subr.mxu0 0.0
    %301 = vmatpush2.xpose.msra.mxu0 0.0
    %302 = vmatprep.mubr.f32.mxu0 0.0
    %303 = vmatmul.mubr.f32.gmra.mxu0 %v234
    %v304 = vpop.f32.mrf.mxu0
    %v305 = vadd.f32 %v33, %v304
    %v306 = vpop.f32.mrf.mxu0
    %307 = vdwg.mxu0
    %308 = vrot.lane.b32.xlu0 %v144, 96
    %v309 = vpop.permute.xlu0 %308
    %v310 = vsel %vm157, %v144, 0
    %v312 = vsel %vm157, %v309, 0
    %314 = vmatprep.subr.mxu0 0.0
    %315 = vmatpush1.xpose.msra.mxu0 0.0
    %316 = vmatprep.subr.mxu0 0.0
    %317 = vmatpush1.xpose.msra.mxu0 0.0
    %318 = vmatprep.subr.mxu0 0.0
    %319 = vmatpush1.xpose.msra.mxu0 0.0
    %320 = vmatprep.subr.mxu0 0.0
    %321 = vmatpush1.xpose.msra.mxu0 0.0
    %322 = vmatprep.subr.mxu0 0.0
    %323 = vmatpush1.xpose.msra.mxu0 0.0
    %324 = vmatprep.subr.mxu0 0.0
    %325 = vmatpush1.xpose.msra.mxu0 0.0
    %326 = vmatprep.subr.mxu0 0.0
    %327 = vmatpush1.xpose.msra.mxu0 0.0
    %328 = vmatprep.subr.mxu0 0.0
    %329 = vmatpush1.xpose.msra.mxu0 0.0
    %330 = vmatprep.subr.mxu0 0.0
    %331 = vmatpush1.xpose.msra.mxu0 0.0
    %332 = vmatprep.subr.mxu0 0.0
    %333 = vmatpush1.xpose.msra.mxu0 0.0
    %334 = vmatprep.subr.mxu0 0.0
    %335 = vmatpush1.xpose.msra.mxu0 0.0
    %336 = vmatprep.subr.mxu0 0.0
    %337 = vmatpush1.xpose.msra.mxu0 0.0
    %338 = vmatprep.subr.mxu0 0.0
    %339 = vmatpush1.xpose.msra.mxu0 0.0
    %340 = vmatprep.subr.mxu0 0.0
    %341 = vmatpush1.xpose.msra.mxu0 0.0
    %342 = vmatprep.subr.mxu0 0.0
    %343 = vmatpush1.xpose.msra.mxu0 0.0
    %344 = vmatprep.subr.mxu0 0.0
    %345 = vmatpush1.xpose.msra.mxu0 %v312
    %346 = vmatprep.subr.mxu0 0.0
    %347 = vmatpush2.xpose.msra.mxu0 0.0
    %348 = vmatprep.subr.mxu0 0.0
    %349 = vmatpush2.xpose.msra.mxu0 0.0
    %350 = vmatprep.subr.mxu0 0.0
    %351 = vmatpush2.xpose.msra.mxu0 0.0
    %352 = vmatprep.subr.mxu0 0.0
    %353 = vmatpush2.xpose.msra.mxu0 0.0
    %354 = vmatprep.subr.mxu0 0.0
    %355 = vmatpush2.xpose.msra.mxu0 0.0
    %356 = vmatprep.subr.mxu0 0.0
    %357 = vmatpush2.xpose.msra.mxu0 0.0
    %358 = vmatprep.subr.mxu0 0.0
    %359 = vmatpush2.xpose.msra.mxu0 0.0
    %360 = vmatprep.subr.mxu0 0.0
    %361 = vmatpush2.xpose.msra.mxu0 0.0
    %362 = vmatprep.subr.mxu0 0.0
    %363 = vmatpush2.xpose.msra.mxu0 0.0
    %364 = vmatprep.subr.mxu0 0.0
    %365 = vmatpush2.xpose.msra.mxu0 0.0
    %366 = vmatprep.subr.mxu0 0.0
    %367 = vmatpush2.xpose.msra.mxu0 0.0
    %368 = vmatprep.subr.mxu0 0.0
    %369 = vmatpush2.xpose.msra.mxu0 0.0
    %370 = vmatprep.subr.mxu0 0.0
    %371 = vmatpush2.xpose.msra.mxu0 0.0
    %372 = vmatprep.subr.mxu0 0.0
    %373 = vmatpush2.xpose.msra.mxu0 0.0
    %374 = vmatprep.subr.mxu0 0.0
    %375 = vmatpush2.xpose.msra.mxu0 0.0
    %376 = vmatprep.subr.mxu0 0.0
    %377 = vmatpush2.xpose.msra.mxu0 0.0
    %378 = vmatprep.mubr.f32.mxu0 0.0
    %379 = vmatmul.mubr.f32.gmra.mxu0 %v310
    %v380 = vpop.f32.mrf.mxu0
    %v381 = vadd.f32 %v33, %v380
    %v382 = vpop.f32.mrf.mxu0
    %383 = vdwg.mxu0
    %384 = vrot.lane.b32.xlu0 %v146, 96
    %v385 = vpop.permute.xlu0 %384
    %v386 = vsel %vm157, %v146, 0
    %v388 = vsel %vm157, %v385, 0
    %390 = vmatprep.subr.mxu0 0.0
    %391 = vmatpush1.xpose.msra.mxu0 0.0
    %392 = vmatprep.subr.mxu0 0.0
    %393 = vmatpush1.xpose.msra.mxu0 0.0
    %394 = vmatprep.subr.mxu0 0.0
    %395 = vmatpush1.xpose.msra.mxu0 0.0
    %396 = vmatprep.subr.mxu0 0.0
    %397 = vmatpush1.xpose.msra.mxu0 0.0
    %398 = vmatprep.subr.mxu0 0.0
    %399 = vmatpush1.xpose.msra.mxu0 0.0
    %400 = vmatprep.subr.mxu0 0.0
    %401 = vmatpush1.xpose.msra.mxu0 0.0
    %402 = vmatprep.subr.mxu0 0.0
    %403 = vmatpush1.xpose.msra.mxu0 0.0
    %404 = vmatprep.subr.mxu0 0.0
    %405 = vmatpush1.xpose.msra.mxu0 0.0
    %406 = vmatprep.subr.mxu0 0.0
    %407 = vmatpush1.xpose.msra.mxu0 0.0
    %408 = vmatprep.subr.mxu0 0.0
    %409 = vmatpush1.xpose.msra.mxu0 0.0
    %410 = vmatprep.subr.mxu0 0.0
    %411 = vmatpush1.xpose.msra.mxu0 0.0
    %412 = vmatprep.subr.mxu0 0.0
    %413 = vmatpush1.xpose.msra.mxu0 0.0
    %414 = vmatprep.subr.mxu0 0.0
    %415 = vmatpush1.xpose.msra.mxu0 0.0
    %416 = vmatprep.subr.mxu0 0.0
    %417 = vmatpush1.xpose.msra.mxu0 0.0
    %418 = vmatprep.subr.mxu0 0.0
    %419 = vmatpush1.xpose.msra.mxu0 0.0
    %420 = vmatprep.subr.mxu0 0.0
    %421 = vmatpush1.xpose.msra.mxu0 %v388
    %422 = vmatprep.subr.mxu0 0.0
    %423 = vmatpush2.xpose.msra.mxu0 0.0
    %424 = vmatprep.subr.mxu0 0.0
    %425 = vmatpush2.xpose.msra.mxu0 0.0
    %426 = vmatprep.subr.mxu0 0.0
    %427 = vmatpush2.xpose.msra.mxu0 0.0
    %428 = vmatprep.subr.mxu0 0.0
    %429 = vmatpush2.xpose.msra.mxu0 0.0
    %430 = vmatprep.subr.mxu0 0.0
    %431 = vmatpush2.xpose.msra.mxu0 0.0
    %432 = vmatprep.subr.mxu0 0.0
    %433 = vmatpush2.xpose.msra.mxu0 0.0
    %434 = vmatprep.subr.mxu0 0.0
    %435 = vmatpush2.xpose.msra.mxu0 0.0
    %436 = vmatprep.subr.mxu0 0.0
    %437 = vmatpush2.xpose.msra.mxu0 0.0
    %438 = vmatprep.subr.mxu0 0.0
    %439 = vmatpush2.xpose.msra.mxu0 0.0
    %440 = vmatprep.subr.mxu0 0.0
    %441 = vmatpush2.xpose.msra.mxu0 0.0
    %442 = vmatprep.subr.mxu0 0.0
    %443 = vmatpush2.xpose.msra.mxu0 0.0
    %444 = vmatprep.subr.mxu0 0.0
    %445 = vmatpush2.xpose.msra.mxu0 0.0
    %446 = vmatprep.subr.mxu0 0.0
    %447 = vmatpush2.xpose.msra.mxu0 0.0
    %448 = vmatprep.subr.mxu0 0.0
    %449 = vmatpush2.xpose.msra.mxu0 0.0
    %450 = vmatprep.subr.mxu0 0.0
    %451 = vmatpush2.xpose.msra.mxu0 0.0
    %452 = vmatprep.subr.mxu0 0.0
    %453 = vmatpush2.xpose.msra.mxu0 0.0
    %454 = vmatprep.mubr.f32.mxu0 0.0
    %455 = vmatmul.mubr.f32.gmra.mxu0 %v386
    %v456 = vpop.f32.mrf.mxu0
    %v457 = vadd.f32 %v33, %v456
    %v458 = vpop.f32.mrf.mxu0
    %459 = vdwg.mxu0
    %460 = vrot.lane.b32.xlu0 %v148, 96
    %v461 = vpop.permute.xlu0 %460
    %v462 = vsel %vm157, %v148, 0
    %v464 = vsel %vm157, %v461, 0
    %466 = vmatprep.subr.mxu0 0.0
    %467 = vmatpush1.xpose.msra.mxu0 0.0
    %468 = vmatprep.subr.mxu0 0.0
    %469 = vmatpush1.xpose.msra.mxu0 0.0
    %470 = vmatprep.subr.mxu0 0.0
    %471 = vmatpush1.xpose.msra.mxu0 0.0
    %472 = vmatprep.subr.mxu0 0.0
    %473 = vmatpush1.xpose.msra.mxu0 0.0
    %474 = vmatprep.subr.mxu0 0.0
    %475 = vmatpush1.xpose.msra.mxu0 0.0
    %476 = vmatprep.subr.mxu0 0.0
    %477 = vmatpush1.xpose.msra.mxu0 0.0
    %478 = vmatprep.subr.mxu0 0.0
    %479 = vmatpush1.xpose.msra.mxu0 0.0
    %480 = vmatprep.subr.mxu0 0.0
    %481 = vmatpush1.xpose.msra.mxu0 0.0
    %482 = vmatprep.subr.mxu0 0.0
    %483 = vmatpush1.xpose.msra.mxu0 0.0
    %484 = vmatprep.subr.mxu0 0.0
    %485 = vmatpush1.xpose.msra.mxu0 0.0
    %486 = vmatprep.subr.mxu0 0.0
    %487 = vmatpush1.xpose.msra.mxu0 0.0
    %488 = vmatprep.subr.mxu0 0.0
    %489 = vmatpush1.xpose.msra.mxu0 0.0
    %490 = vmatprep.subr.mxu0 0.0
    %491 = vmatpush1.xpose.msra.mxu0 0.0
    %492 = vmatprep.subr.mxu0 0.0
    %493 = vmatpush1.xpose.msra.mxu0 0.0
    %494 = vmatprep.subr.mxu0 0.0
    %495 = vmatpush1.xpose.msra.mxu0 0.0
    %496 = vmatprep.subr.mxu0 0.0
    %497 = vmatpush1.xpose.msra.mxu0 %v464
    %498 = vmatprep.subr.mxu0 0.0
    %499 = vmatpush2.xpose.msra.mxu0 0.0
    %500 = vmatprep.subr.mxu0 0.0
    %501 = vmatpush2.xpose.msra.mxu0 0.0
    %502 = vmatprep.subr.mxu0 0.0
    %503 = vmatpush2.xpose.msra.mxu0 0.0
    %504 = vmatprep.subr.mxu0 0.0
    %505 = vmatpush2.xpose.msra.mxu0 0.0
    %506 = vmatprep.subr.mxu0 0.0
    %507 = vmatpush2.xpose.msra.mxu0 0.0
    %508 = vmatprep.subr.mxu0 0.0
    %509 = vmatpush2.xpose.msra.mxu0 0.0
    %510 = vmatprep.subr.mxu0 0.0
    %511 = vmatpush2.xpose.msra.mxu0 0.0
    %512 = vmatprep.subr.mxu0 0.0
    %513 = vmatpush2.xpose.msra.mxu0 0.0
    %514 = vmatprep.subr.mxu0 0.0
    %515 = vmatpush2.xpose.msra.mxu0 0.0
    %516 = vmatprep.subr.mxu0 0.0
    %517 = vmatpush2.xpose.msra.mxu0 0.0
    %518 = vmatprep.subr.mxu0 0.0
    %519 = vmatpush2.xpose.msra.mxu0 0.0
    %520 = vmatprep.subr.mxu0 0.0
    %521 = vmatpush2.xpose.msra.mxu0 0.0
    %522 = vmatprep.subr.mxu0 0.0
    %523 = vmatpush2.xpose.msra.mxu0 0.0
    %524 = vmatprep.subr.mxu0 0.0
    %525 = vmatpush2.xpose.msra.mxu0 0.0
    %526 = vmatprep.subr.mxu0 0.0
    %527 = vmatpush2.xpose.msra.mxu0 0.0
    %528 = vmatprep.subr.mxu0 0.0
    %529 = vmatpush2.xpose.msra.mxu0 0.0
    %530 = vmatprep.mubr.f32.mxu0 0.0
    %531 = vmatmul.mubr.f32.gmra.mxu0 %v462
    %v532 = vpop.f32.mrf.mxu0
    %v533 = vadd.f32 %v33, %v532
    %v534 = vpop.f32.mrf.mxu0
    %535 = vdwg.mxu0
    %536 = vrot.lane.b32.xlu0 %v150, 96
    %v537 = vpop.permute.xlu0 %536
    %v538 = vsel %vm157, %v150, 0
    %v540 = vsel %vm157, %v537, 0
    %542 = vmatprep.subr.mxu0 0.0
    %543 = vmatpush1.xpose.msra.mxu0 0.0
    %544 = vmatprep.subr.mxu0 0.0
    %545 = vmatpush1.xpose.msra.mxu0 0.0
    %546 = vmatprep.subr.mxu0 0.0
    %547 = vmatpush1.xpose.msra.mxu0 0.0
    %548 = vmatprep.subr.mxu0 0.0
    %549 = vmatpush1.xpose.msra.mxu0 0.0
    %550 = vmatprep.subr.mxu0 0.0
    %551 = vmatpush1.xpose.msra.mxu0 0.0
    %552 = vmatprep.subr.mxu0 0.0
    %553 = vmatpush1.xpose.msra.mxu0 0.0
    %554 = vmatprep.subr.mxu0 0.0
    %555 = vmatpush1.xpose.msra.mxu0 0.0
    %556 = vmatprep.subr.mxu0 0.0
    %557 = vmatpush1.xpose.msra.mxu0 0.0
    %558 = vmatprep.subr.mxu0 0.0
    %559 = vmatpush1.xpose.msra.mxu0 0.0
    %560 = vmatprep.subr.mxu0 0.0
    %561 = vmatpush1.xpose.msra.mxu0 0.0
    %562 = vmatprep.subr.mxu0 0.0
    %563 = vmatpush1.xpose.msra.mxu0 0.0
    %564 = vmatprep.subr.mxu0 0.0
    %565 = vmatpush1.xpose.msra.mxu0 0.0
    %566 = vmatprep.subr.mxu0 0.0
    %567 = vmatpush1.xpose.msra.mxu0 0.0
    %568 = vmatprep.subr.mxu0 0.0
    %569 = vmatpush1.xpose.msra.mxu0 0.0
    %570 = vmatprep.subr.mxu0 0.0
    %571 = vmatpush1.xpose.msra.mxu0 0.0
    %572 = vmatprep.subr.mxu0 0.0
    %573 = vmatpush1.xpose.msra.mxu0 %v540
    %574 = vmatprep.subr.mxu0 0.0
    %575 = vmatpush2.xpose.msra.mxu0 0.0
    %576 = vmatprep.subr.mxu0 0.0
    %577 = vmatpush2.xpose.msra.mxu0 0.0
    %578 = vmatprep.subr.mxu0 0.0
    %579 = vmatpush2.xpose.msra.mxu0 0.0
    %580 = vmatprep.subr.mxu0 0.0
    %581 = vmatpush2.xpose.msra.mxu0 0.0
    %582 = vmatprep.subr.mxu0 0.0
    %583 = vmatpush2.xpose.msra.mxu0 0.0
    %584 = vmatprep.subr.mxu0 0.0
    %585 = vmatpush2.xpose.msra.mxu0 0.0
    %586 = vmatprep.subr.mxu0 0.0
    %587 = vmatpush2.xpose.msra.mxu0 0.0
    %588 = vmatprep.subr.mxu0 0.0
    %589 = vmatpush2.xpose.msra.mxu0 0.0
    %590 = vmatprep.subr.mxu0 0.0
    %591 = vmatpush2.xpose.msra.mxu0 0.0
    %592 = vmatprep.subr.mxu0 0.0
    %593 = vmatpush2.xpose.msra.mxu0 0.0
    %594 = vmatprep.subr.mxu0 0.0
    %595 = vmatpush2.xpose.msra.mxu0 0.0
    %596 = vmatprep.subr.mxu0 0.0
    %597 = vmatpush2.xpose.msra.mxu0 0.0
    %598 = vmatprep.subr.mxu0 0.0
    %599 = vmatpush2.xpose.msra.mxu0 0.0
    %600 = vmatprep.subr.mxu0 0.0
    %601 = vmatpush2.xpose.msra.mxu0 0.0
    %602 = vmatprep.subr.mxu0 0.0
    %603 = vmatpush2.xpose.msra.mxu0 0.0
    %604 = vmatprep.subr.mxu0 0.0
    %605 = vmatpush2.xpose.msra.mxu0 0.0
    %606 = vmatprep.mubr.f32.mxu0 0.0
    %607 = vmatmul.mubr.f32.gmra.mxu0 %v538
    %v608 = vpop.f32.mrf.mxu0
    %v609 = vadd.f32 %v33, %v608
    %v610 = vpop.f32.mrf.mxu0
    %611 = vdwg.mxu0
    %612 = vrot.lane.b32.xlu0 %v152, 96
    %v613 = vpop.permute.xlu0 %612
    %v614 = vsel %vm157, %v152, 0
    %v616 = vsel %vm157, %v613, 0
    %618 = vmatprep.subr.mxu0 0.0
    %619 = vmatpush1.xpose.msra.mxu0 0.0
    %620 = vmatprep.subr.mxu0 0.0
    %621 = vmatpush1.xpose.msra.mxu0 0.0
    %622 = vmatprep.subr.mxu0 0.0
    %623 = vmatpush1.xpose.msra.mxu0 0.0
    %624 = vmatprep.subr.mxu0 0.0
    %625 = vmatpush1.xpose.msra.mxu0 0.0
    %626 = vmatprep.subr.mxu0 0.0
    %627 = vmatpush1.xpose.msra.mxu0 0.0
    %628 = vmatprep.subr.mxu0 0.0
    %629 = vmatpush1.xpose.msra.mxu0 0.0
    %630 = vmatprep.subr.mxu0 0.0
    %631 = vmatpush1.xpose.msra.mxu0 0.0
    %632 = vmatprep.subr.mxu0 0.0
    %633 = vmatpush1.xpose.msra.mxu0 0.0
    %634 = vmatprep.subr.mxu0 0.0
    %635 = vmatpush1.xpose.msra.mxu0 0.0
    %636 = vmatprep.subr.mxu0 0.0
    %637 = vmatpush1.xpose.msra.mxu0 0.0
    %638 = vmatprep.subr.mxu0 0.0
    %639 = vmatpush1.xpose.msra.mxu0 0.0
    %640 = vmatprep.subr.mxu0 0.0
    %641 = vmatpush1.xpose.msra.mxu0 0.0
    %642 = vmatprep.subr.mxu0 0.0
    %643 = vmatpush1.xpose.msra.mxu0 0.0
    %644 = vmatprep.subr.mxu0 0.0
    %645 = vmatpush1.xpose.msra.mxu0 0.0
    %646 = vmatprep.subr.mxu0 0.0
    %647 = vmatpush1.xpose.msra.mxu0 0.0
    %648 = vmatprep.subr.mxu0 0.0
    %649 = vmatpush1.xpose.msra.mxu0 %v616
    %650 = vmatprep.subr.mxu0 0.0
    %651 = vmatpush2.xpose.msra.mxu0 0.0
    %652 = vmatprep.subr.mxu0 0.0
    %653 = vmatpush2.xpose.msra.mxu0 0.0
    %654 = vmatprep.subr.mxu0 0.0
    %655 = vmatpush2.xpose.msra.mxu0 0.0
    %656 = vmatprep.subr.mxu0 0.0
    %657 = vmatpush2.xpose.msra.mxu0 0.0
    %658 = vmatprep.subr.mxu0 0.0
    %659 = vmatpush2.xpose.msra.mxu0 0.0
    %660 = vmatprep.subr.mxu0 0.0
    %661 = vmatpush2.xpose.msra.mxu0 0.0
    %662 = vmatprep.subr.mxu0 0.0
    %663 = vmatpush2.xpose.msra.mxu0 0.0
    %664 = vmatprep.subr.mxu0 0.0
    %665 = vmatpush2.xpose.msra.mxu0 0.0
    %666 = vmatprep.subr.mxu0 0.0
    %667 = vmatpush2.xpose.msra.mxu0 0.0
    %668 = vmatprep.subr.mxu0 0.0
    %669 = vmatpush2.xpose.msra.mxu0 0.0
    %670 = vmatprep.subr.mxu0 0.0
    %671 = vmatpush2.xpose.msra.mxu0 0.0
    %672 = vmatprep.subr.mxu0 0.0
    %673 = vmatpush2.xpose.msra.mxu0 0.0
    %674 = vmatprep.subr.mxu0 0.0
    %675 = vmatpush2.xpose.msra.mxu0 0.0
    %676 = vmatprep.subr.mxu0 0.0
    %677 = vmatpush2.xpose.msra.mxu0 0.0
    %678 = vmatprep.subr.mxu0 0.0
    %679 = vmatpush2.xpose.msra.mxu0 0.0
    %680 = vmatprep.subr.mxu0 0.0
    %681 = vmatpush2.xpose.msra.mxu0 0.0
    %682 = vmatprep.mubr.f32.mxu0 0.0
    %683 = vmatmul.mubr.f32.gmra.mxu0 %v614
    %v684 = vpop.f32.mrf.mxu0
    %v685 = vadd.f32 %v33, %v684
    %v686 = vpop.f32.mrf.mxu0
    %687 = vdwg.mxu0
    %688 = vrot.lane.b32.xlu0 %v154, 96
    %v689 = vpop.permute.xlu0 %688
    %v690 = vsel %vm157, %v154, 0
    %v692 = vsel %vm157, %v689, 0
    %694 = vmatprep.subr.mxu0 0.0
    %695 = vmatpush1.xpose.msra.mxu0 0.0
    %696 = vmatprep.subr.mxu0 0.0
    %697 = vmatpush1.xpose.msra.mxu0 0.0
    %698 = vmatprep.subr.mxu0 0.0
    %699 = vmatpush1.xpose.msra.mxu0 0.0
    %700 = vmatprep.subr.mxu0 0.0
    %701 = vmatpush1.xpose.msra.mxu0 0.0
    %702 = vmatprep.subr.mxu0 0.0
    %703 = vmatpush1.xpose.msra.mxu0 0.0
    %704 = vmatprep.subr.mxu0 0.0
    %705 = vmatpush1.xpose.msra.mxu0 0.0
    %706 = vmatprep.subr.mxu0 0.0
    %707 = vmatpush1.xpose.msra.mxu0 0.0
    %708 = vmatprep.subr.mxu0 0.0
    %709 = vmatpush1.xpose.msra.mxu0 0.0
    %710 = vmatprep.subr.mxu0 0.0
    %711 = vmatpush1.xpose.msra.mxu0 0.0
    %712 = vmatprep.subr.mxu0 0.0
    %713 = vmatpush1.xpose.msra.mxu0 0.0
    %714 = vmatprep.subr.mxu0 0.0
    %715 = vmatpush1.xpose.msra.mxu0 0.0
    %716 = vmatprep.subr.mxu0 0.0
    %717 = vmatpush1.xpose.msra.mxu0 0.0
    %718 = vmatprep.subr.mxu0 0.0
    %719 = vmatpush1.xpose.msra.mxu0 0.0
    %720 = vmatprep.subr.mxu0 0.0
    %721 = vmatpush1.xpose.msra.mxu0 0.0
    %722 = vmatprep.subr.mxu0 0.0
    %723 = vmatpush1.xpose.msra.mxu0 0.0
    %724 = vmatprep.subr.mxu0 0.0
    %725 = vmatpush1.xpose.msra.mxu0 %v692
    %726 = vmatprep.subr.mxu0 0.0
    %727 = vmatpush2.xpose.msra.mxu0 0.0
    %728 = vmatprep.subr.mxu0 0.0
    %729 = vmatpush2.xpose.msra.mxu0 0.0
    %730 = vmatprep.subr.mxu0 0.0
    %731 = vmatpush2.xpose.msra.mxu0 0.0
    %732 = vmatprep.subr.mxu0 0.0
    %733 = vmatpush2.xpose.msra.mxu0 0.0
    %734 = vmatprep.subr.mxu0 0.0
    %735 = vmatpush2.xpose.msra.mxu0 0.0
    %736 = vmatprep.subr.mxu0 0.0
    %737 = vmatpush2.xpose.msra.mxu0 0.0
    %738 = vmatprep.subr.mxu0 0.0
    %739 = vmatpush2.xpose.msra.mxu0 0.0
    %740 = vmatprep.subr.mxu0 0.0
    %741 = vmatpush2.xpose.msra.mxu0 0.0
    %742 = vmatprep.subr.mxu0 0.0
    %743 = vmatpush2.xpose.msra.mxu0 0.0
    %744 = vmatprep.subr.mxu0 0.0
    %745 = vmatpush2.xpose.msra.mxu0 0.0
    %746 = vmatprep.subr.mxu0 0.0
    %747 = vmatpush2.xpose.msra.mxu0 0.0
    %748 = vmatprep.subr.mxu0 0.0
    %749 = vmatpush2.xpose.msra.mxu0 0.0
    %750 = vmatprep.subr.mxu0 0.0
    %751 = vmatpush2.xpose.msra.mxu0 0.0
    %752 = vmatprep.subr.mxu0 0.0
    %753 = vmatpush2.xpose.msra.mxu0 0.0
    %754 = vmatprep.subr.mxu0 0.0
    %755 = vmatpush2.xpose.msra.mxu0 0.0
    %756 = vmatprep.subr.mxu0 0.0
    %757 = vmatpush2.xpose.msra.mxu0 0.0
    %758 = vmatprep.mubr.f32.mxu0 0.0
    %759 = vmatmul.mubr.f32.gmra.mxu0 %v690
    %v760 = vpop.f32.mrf.mxu0
    %v761 = vadd.f32 %v33, %v760
    %v762 = vpop.f32.mrf.mxu0
    %763 = vdwg.mxu0
    %v764 = vsel %vm157, %v229, -inf
    %765 = vmax.xlane.f32.xlu0 %v764
    %v766 = vpop.xlane.xlu0 %765
    %v767 = vsel %vm157, %v305, -inf
    %768 = vmax.xlane.f32.xlu0 %v767
    %v769 = vpop.xlane.xlu0 %768
    %v770 = vsel %vm157, %v381, -inf
    %771 = vmax.xlane.f32.xlu0 %v770
    %v772 = vpop.xlane.xlu0 %771
    %v773 = vsel %vm157, %v457, -inf
    %774 = vmax.xlane.f32.xlu0 %v773
    %v775 = vpop.xlane.xlu0 %774
    %v776 = vsel %vm157, %v533, -inf
    %777 = vmax.xlane.f32.xlu0 %v776
    %v778 = vpop.xlane.xlu0 %777
    %v779 = vsel %vm157, %v609, -inf
    %780 = vmax.xlane.f32.xlu0 %v779
    %v781 = vpop.xlane.xlu0 %780
    %v782 = vsel %vm157, %v685, -inf
    %783 = vmax.xlane.f32.xlu0 %v782
    %v784 = vpop.xlane.xlu0 %783
    %v785 = vsel %vm157, %v761, -inf
    %786 = vmax.xlane.f32.xlu0 %v785
    %v787 = vpop.xlane.xlu0 %786
    %v788 = vsub.f32 %v229, %v766
    %v789 = vsub.f32 %v305, %v769
    %v790 = vsub.f32 %v381, %v772
    %v791 = vsub.f32 %v457, %v775
    %v792 = vsub.f32 %v533, %v778
    %v793 = vsub.f32 %v609, %v781
    %v794 = vsub.f32 %v685, %v784
    %v795 = vsub.f32 %v761, %v787
    %v796 = vmul.f32 %v788, 1.442695
    %v797 = vpow.pop %v796
    %v798 = vmul.f32 %v789, 1.442695
    %v799 = vpow.pop %v798
    %v800 = vmul.f32 %v790, 1.442695
    %v801 = vpow.pop %v800
    %v802 = vmul.f32 %v791, 1.442695
    %v803 = vpow.pop %v802
    %v804 = vmul.f32 %v792, 1.442695
    %v805 = vpow.pop %v804
    %v806 = vmul.f32 %v793, 1.442695
    %v807 = vpow.pop %v806
    %v808 = vmul.f32 %v794, 1.442695
    %v809 = vpow.pop %v808
    %v810 = vmul.f32 %v795, 1.442695
    %v811 = vpow.pop %v810
    %v812 = vsel %vm157, %v797, 0.0
    %813 = vadd.xlane.f32.xlu0 %v812
    %v814 = vpop.xlane.xlu0 %813
    %v815 = vsel %vm157, %v799, 0.0
    %816 = vadd.xlane.f32.xlu0 %v815
    %v817 = vpop.xlane.xlu0 %816
    %v818 = vsel %vm157, %v801, 0.0
    %819 = vadd.xlane.f32.xlu0 %v818
    %v820 = vpop.xlane.xlu0 %819
    %v821 = vsel %vm157, %v803, 0.0
    %822 = vadd.xlane.f32.xlu0 %v821
    %v823 = vpop.xlane.xlu0 %822
    %v824 = vsel %vm157, %v805, 0.0
    %825 = vadd.xlane.f32.xlu0 %v824
    %v826 = vpop.xlane.xlu0 %825
    %v827 = vsel %vm157, %v807, 0.0
    %828 = vadd.xlane.f32.xlu0 %v827
    %v829 = vpop.xlane.xlu0 %828
    %v830 = vsel %vm157, %v809, 0.0
    %831 = vadd.xlane.f32.xlu0 %v830
    %v832 = vpop.xlane.xlu0 %831
    %v833 = vsel %vm157, %v811, 0.0
    %834 = vadd.xlane.f32.xlu0 %v833
    %v835 = vpop.xlane.xlu0 %834
    %v836 = vrcp.pop %v814
    %v837 = vrcp.pop %v817
    %v838 = vrcp.pop %v820
    %v839 = vrcp.pop %v823
    %v840 = vrcp.pop %v826
    %v841 = vrcp.pop %v829
    %v842 = vrcp.pop %v832
    %v843 = vrcp.pop %v835
    %v844 = vmul.f32 %v797, %v836
    %v845 = vmul.f32 %v799, %v837
    %v846 = vmul.f32 %v801, %v838
    %v847 = vmul.f32 %v803, %v839
    %v848 = vmul.f32 %v805, %v840
    %v849 = vmul.f32 %v807, %v841
    %v850 = vmul.f32 %v809, %v842
    %v851 = vmul.f32 %v811, %v843
    %852 = vrot.lane.b32.xlu0 %v133, 64
    %v853 = vpop.permute.xlu0 %852
    %v856 = vsel %vm157, %v844, 0
    %858 = vmatprep.subr.mxu0 0.0
    %859 = vmatpush1.msra.mxu0 0.0
    %860 = vmatprep.subr.mxu0 0.0
    %861 = vmatpush1.msra.mxu0 0.0
    %862 = vmatprep.subr.mxu0 0.0
    %863 = vmatpush1.msra.mxu0 0.0
    %864 = vmatprep.subr.mxu0 0.0
    %865 = vmatpush1.msra.mxu0 0.0
    %866 = vmatprep.subr.mxu0 0.0
    %867 = vmatpush1.msra.mxu0 0.0
    %868 = vmatprep.subr.mxu0 0.0
    %869 = vmatpush1.msra.mxu0 0.0
    %870 = vmatprep.subr.mxu0 0.0
    %871 = vmatpush1.msra.mxu0 0.0
    %872 = vmatprep.subr.mxu0 0.0
    %873 = vmatpush1.msra.mxu0 0.0
    %874 = vmatprep.subr.mxu0 0.0
    %875 = vmatpush1.msra.mxu0 0.0
    %876 = vmatprep.subr.mxu0 0.0
    %877 = vmatpush1.msra.mxu0 0.0
    %878 = vmatprep.subr.mxu0 0.0
    %879 = vmatpush1.msra.mxu0 0.0
    %880 = vmatprep.subr.mxu0 0.0
    %881 = vmatpush1.msra.mxu0 0.0
    %882 = vmatprep.subr.mxu0 0.0
    %883 = vmatpush1.msra.mxu0 0.0
    %884 = vmatprep.subr.mxu0 0.0
    %885 = vmatpush1.msra.mxu0 0.0
    %886 = vmatprep.subr.mxu0 0.0
    %887 = vmatpush1.msra.mxu0 0.0
    %888 = vmatprep.subr.mxu0 0.0
    %889 = vmatpush1.msra.mxu0 %v853
    %890 = vmatprep.subr.mxu0 0.0
    %891 = vmatpush2.msra.mxu0 0.0
    %892 = vmatprep.subr.mxu0 0.0
    %893 = vmatpush2.msra.mxu0 0.0
    %894 = vmatprep.subr.mxu0 0.0
    %895 = vmatpush2.msra.mxu0 0.0
    %896 = vmatprep.subr.mxu0 0.0
    %897 = vmatpush2.msra.mxu0 0.0
    %898 = vmatprep.subr.mxu0 0.0
    %899 = vmatpush2.msra.mxu0 0.0
    %900 = vmatprep.subr.mxu0 0.0
    %901 = vmatpush2.msra.mxu0 0.0
    %902 = vmatprep.subr.mxu0 0.0
    %903 = vmatpush2.msra.mxu0 0.0
    %904 = vmatprep.subr.mxu0 0.0
    %905 = vmatpush2.msra.mxu0 0.0
    %906 = vmatprep.subr.mxu0 0.0
    %907 = vmatpush2.msra.mxu0 0.0
    %908 = vmatprep.subr.mxu0 0.0
    %909 = vmatpush2.msra.mxu0 0.0
    %910 = vmatprep.subr.mxu0 0.0
    %911 = vmatpush2.msra.mxu0 0.0
    %912 = vmatprep.subr.mxu0 0.0
    %913 = vmatpush2.msra.mxu0 0.0
    %914 = vmatprep.subr.mxu0 0.0
    %915 = vmatpush2.msra.mxu0 0.0
    %916 = vmatprep.subr.mxu0 0.0
    %917 = vmatpush2.msra.mxu0 0.0
    %918 = vmatprep.subr.mxu0 0.0
    %919 = vmatpush2.msra.mxu0 0.0
    %920 = vmatprep.subr.mxu0 0.0
    %921 = vmatpush2.msra.mxu0 0.0
    %922 = vmatprep.mubr.f32.mxu0 0.0
    %923 = vmatmul.mubr.f32.gmra.mxu0 %v856
    %v924 = vpop.f32.mrf.mxu0
    %v925 = vadd.f32 0.0, %v924
    %v926 = vpop.f32.mrf.mxu0
    %927 = vdwg.mxu0
    %928 = vrot.lane.b32.xlu0 %v138, 64
    %v929 = vpop.permute.xlu0 %928
    %v932 = vsel %vm157, %v845, 0
    %934 = vmatprep.subr.mxu0 0.0
    %935 = vmatpush1.msra.mxu0 0.0
    %936 = vmatprep.subr.mxu0 0.0
    %937 = vmatpush1.msra.mxu0 0.0
    %938 = vmatprep.subr.mxu0 0.0
    %939 = vmatpush1.msra.mxu0 0.0
    %940 = vmatprep.subr.mxu0 0.0
    %941 = vmatpush1.msra.mxu0 0.0
    %942 = vmatprep.subr.mxu0 0.0
    %943 = vmatpush1.msra.mxu0 0.0
    %944 = vmatprep.subr.mxu0 0.0
    %945 = vmatpush1.msra.mxu0 0.0
    %946 = vmatprep.subr.mxu0 0.0
    %947 = vmatpush1.msra.mxu0 0.0
    %948 = vmatprep.subr.mxu0 0.0
    %949 = vmatpush1.msra.mxu0 0.0
    %950 = vmatprep.subr.mxu0 0.0
    %951 = vmatpush1.msra.mxu0 0.0
    %952 = vmatprep.subr.mxu0 0.0
    %953 = vmatpush1.msra.mxu0 0.0
    %954 = vmatprep.subr.mxu0 0.0
    %955 = vmatpush1.msra.mxu0 0.0
    %956 = vmatprep.subr.mxu0 0.0
    %957 = vmatpush1.msra.mxu0 0.0
    %958 = vmatprep.subr.mxu0 0.0
    %959 = vmatpush1.msra.mxu0 0.0
    %960 = vmatprep.subr.mxu0 0.0
    %961 = vmatpush1.msra.mxu0 0.0
    %962 = vmatprep.subr.mxu0 0.0
    %963 = vmatpush1.msra.mxu0 0.0
    %964 = vmatprep.subr.mxu0 0.0
    %965 = vmatpush1.msra.mxu0 %v929
    %966 = vmatprep.subr.mxu0 0.0
    %967 = vmatpush2.msra.mxu0 0.0
    %968 = vmatprep.subr.mxu0 0.0
    %969 = vmatpush2.msra.mxu0 0.0
    %970 = vmatprep.subr.mxu0 0.0
    %971 = vmatpush2.msra.mxu0 0.0
    %972 = vmatprep.subr.mxu0 0.0
    %973 = vmatpush2.msra.mxu0 0.0
    %974 = vmatprep.subr.mxu0 0.0
    %975 = vmatpush2.msra.mxu0 0.0
    %976 = vmatprep.subr.mxu0 0.0
    %977 = vmatpush2.msra.mxu0 0.0
    %978 = vmatprep.subr.mxu0 0.0
    %979 = vmatpush2.msra.mxu0 0.0
    %980 = vmatprep.subr.mxu0 0.0
    %981 = vmatpush2.msra.mxu0 0.0
    %982 = vmatprep.subr.mxu0 0.0
    %983 = vmatpush2.msra.mxu0 0.0
    %984 = vmatprep.subr.mxu0 0.0
    %985 = vmatpush2.msra.mxu0 0.0
    %986 = vmatprep.subr.mxu0 0.0
    %987 = vmatpush2.msra.mxu0 0.0
    %988 = vmatprep.subr.mxu0 0.0
    %989 = vmatpush2.msra.mxu0 0.0
    %990 = vmatprep.subr.mxu0 0.0
    %991 = vmatpush2.msra.mxu0 0.0
    %992 = vmatprep.subr.mxu0 0.0
    %993 = vmatpush2.msra.mxu0 0.0
    %994 = vmatprep.subr.mxu0 0.0
    %995 = vmatpush2.msra.mxu0 0.0
    %996 = vmatprep.subr.mxu0 0.0
    %997 = vmatpush2.msra.mxu0 0.0
    %998 = vmatprep.mubr.f32.mxu0 0.0
    %999 = vmatmul.mubr.f32.gmra.mxu0 %v932
    %v1000 = vpop.f32.mrf.mxu0
    %v1001 = vadd.f32 0.0, %v1000
    %v1002 = vpop.f32.mrf.mxu0
    %1003 = vdwg.mxu0
    %1004 = vrot.lane.b32.xlu0 %v144, 64
    %v1005 = vpop.permute.xlu0 %1004
    %v1008 = vsel %vm157, %v846, 0
    %1010 = vmatprep.subr.mxu0 0.0
    %1011 = vmatpush1.msra.mxu0 0.0
    %1012 = vmatprep.subr.mxu0 0.0
    %1013 = vmatpush1.msra.mxu0 0.0
    %1014 = vmatprep.subr.mxu0 0.0
    %1015 = vmatpush1.msra.mxu0 0.0
    %1016 = vmatprep.subr.mxu0 0.0
    %1017 = vmatpush1.msra.mxu0 0.0
    %1018 = vmatprep.subr.mxu0 0.0
    %1019 = vmatpush1.msra.mxu0 0.0
    %1020 = vmatprep.subr.mxu0 0.0
    %1021 = vmatpush1.msra.mxu0 0.0
    %1022 = vmatprep.subr.mxu0 0.0
    %1023 = vmatpush1.msra.mxu0 0.0
    %1024 = vmatprep.subr.mxu0 0.0
    %1025 = vmatpush1.msra.mxu0 0.0
    %1026 = vmatprep.subr.mxu0 0.0
    %1027 = vmatpush1.msra.mxu0 0.0
    %1028 = vmatprep.subr.mxu0 0.0
    %1029 = vmatpush1.msra.mxu0 0.0
    %1030 = vmatprep.subr.mxu0 0.0
    %1031 = vmatpush1.msra.mxu0 0.0
    %1032 = vmatprep.subr.mxu0 0.0
    %1033 = vmatpush1.msra.mxu0 0.0
    %1034 = vmatprep.subr.mxu0 0.0
    %1035 = vmatpush1.msra.mxu0 0.0
    %1036 = vmatprep.subr.mxu0 0.0
    %1037 = vmatpush1.msra.mxu0 0.0
    %1038 = vmatprep.subr.mxu0 0.0
    %1039 = vmatpush1.msra.mxu0 0.0
    %1040 = vmatprep.subr.mxu0 0.0
    %1041 = vmatpush1.msra.mxu0 %v1005
    %1042 = vmatprep.subr.mxu0 0.0
    %1043 = vmatpush2.msra.mxu0 0.0
    %1044 = vmatprep.subr.mxu0 0.0
    %1045 = vmatpush2.msra.mxu0 0.0
    %1046 = vmatprep.subr.mxu0 0.0
    %1047 = vmatpush2.msra.mxu0 0.0
    %1048 = vmatprep.subr.mxu0 0.0
    %1049 = vmatpush2.msra.mxu0 0.0
    %1050 = vmatprep.subr.mxu0 0.0
    %1051 = vmatpush2.msra.mxu0 0.0
    %1052 = vmatprep.subr.mxu0 0.0
    %1053 = vmatpush2.msra.mxu0 0.0
    %1054 = vmatprep.subr.mxu0 0.0
    %1055 = vmatpush2.msra.mxu0 0.0
    %1056 = vmatprep.subr.mxu0 0.0
    %1057 = vmatpush2.msra.mxu0 0.0
    %1058 = vmatprep.subr.mxu0 0.0
    %1059 = vmatpush2.msra.mxu0 0.0
    %1060 = vmatprep.subr.mxu0 0.0
    %1061 = vmatpush2.msra.mxu0 0.0
    %1062 = vmatprep.subr.mxu0 0.0
    %1063 = vmatpush2.msra.mxu0 0.0
    %1064 = vmatprep.subr.mxu0 0.0
    %1065 = vmatpush2.msra.mxu0 0.0
    %1066 = vmatprep.subr.mxu0 0.0
    %1067 = vmatpush2.msra.mxu0 0.0
    %1068 = vmatprep.subr.mxu0 0.0
    %1069 = vmatpush2.msra.mxu0 0.0
    %1070 = vmatprep.subr.mxu0 0.0
    %1071 = vmatpush2.msra.mxu0 0.0
    %1072 = vmatprep.subr.mxu0 0.0
    %1073 = vmatpush2.msra.mxu0 0.0
    %1074 = vmatprep.mubr.f32.mxu0 0.0
    %1075 = vmatmul.mubr.f32.gmra.mxu0 %v1008
    %v1076 = vpop.f32.mrf.mxu0
    %v1077 = vadd.f32 0.0, %v1076
    %v1078 = vpop.f32.mrf.mxu0
    %1079 = vdwg.mxu0
    %1080 = vrot.lane.b32.xlu0 %v146, 64
    %v1081 = vpop.permute.xlu0 %1080
    %v1084 = vsel %vm157, %v847, 0
    %1086 = vmatprep.subr.mxu0 0.0
    %1087 = vmatpush1.msra.mxu0 0.0
    %1088 = vmatprep.subr.mxu0 0.0
    %1089 = vmatpush1.msra.mxu0 0.0
    %1090 = vmatprep.subr.mxu0 0.0
    %1091 = vmatpush1.msra.mxu0 0.0
    %1092 = vmatprep.subr.mxu0 0.0
    %1093 = vmatpush1.msra.mxu0 0.0
    %1094 = vmatprep.subr.mxu0 0.0
    %1095 = vmatpush1.msra.mxu0 0.0
    %1096 = vmatprep.subr.mxu0 0.0
    %1097 = vmatpush1.msra.mxu0 0.0
    %1098 = vmatprep.subr.mxu0 0.0
    %1099 = vmatpush1.msra.mxu0 0.0
    %1100 = vmatprep.subr.mxu0 0.0
    %1101 = vmatpush1.msra.mxu0 0.0
    %1102 = vmatprep.subr.mxu0 0.0
    %1103 = vmatpush1.msra.mxu0 0.0
    %1104 = vmatprep.subr.mxu0 0.0
    %1105 = vmatpush1.msra.mxu0 0.0
    %1106 = vmatprep.subr.mxu0 0.0
    %1107 = vmatpush1.msra.mxu0 0.0
    %1108 = vmatprep.subr.mxu0 0.0
    %1109 = vmatpush1.msra.mxu0 0.0
    %1110 = vmatprep.subr.mxu0 0.0
    %1111 = vmatpush1.msra.mxu0 0.0
    %1112 = vmatprep.subr.mxu0 0.0
    %1113 = vmatpush1.msra.mxu0 0.0
    %1114 = vmatprep.subr.mxu0 0.0
    %1115 = vmatpush1.msra.mxu0 0.0
    %1116 = vmatprep.subr.mxu0 0.0
    %1117 = vmatpush1.msra.mxu0 %v1081
    %1118 = vmatprep.subr.mxu0 0.0
    %1119 = vmatpush2.msra.mxu0 0.0
    %1120 = vmatprep.subr.mxu0 0.0
    %1121 = vmatpush2.msra.mxu0 0.0
    %1122 = vmatprep.subr.mxu0 0.0
    %1123 = vmatpush2.msra.mxu0 0.0
    %1124 = vmatprep.subr.mxu0 0.0
    %1125 = vmatpush2.msra.mxu0 0.0
    %1126 = vmatprep.subr.mxu0 0.0
    %1127 = vmatpush2.msra.mxu0 0.0
    %1128 = vmatprep.subr.mxu0 0.0
    %1129 = vmatpush2.msra.mxu0 0.0
    %1130 = vmatprep.subr.mxu0 0.0
    %1131 = vmatpush2.msra.mxu0 0.0
    %1132 = vmatprep.subr.mxu0 0.0
    %1133 = vmatpush2.msra.mxu0 0.0
    %1134 = vmatprep.subr.mxu0 0.0
    %1135 = vmatpush2.msra.mxu0 0.0
    %1136 = vmatprep.subr.mxu0 0.0
    %1137 = vmatpush2.msra.mxu0 0.0
    %1138 = vmatprep.subr.mxu0 0.0
    %1139 = vmatpush2.msra.mxu0 0.0
    %1140 = vmatprep.subr.mxu0 0.0
    %1141 = vmatpush2.msra.mxu0 0.0
    %1142 = vmatprep.subr.mxu0 0.0
    %1143 = vmatpush2.msra.mxu0 0.0
    %1144 = vmatprep.subr.mxu0 0.0
    %1145 = vmatpush2.msra.mxu0 0.0
    %1146 = vmatprep.subr.mxu0 0.0
    %1147 = vmatpush2.msra.mxu0 0.0
    %1148 = vmatprep.subr.mxu0 0.0
    %1149 = vmatpush2.msra.mxu0 0.0
    %1150 = vmatprep.mubr.f32.mxu0 0.0
    %1151 = vmatmul.mubr.f32.gmra.mxu0 %v1084
    %v1152 = vpop.f32.mrf.mxu0
    %v1153 = vadd.f32 0.0, %v1152
    %v1154 = vpop.f32.mrf.mxu0
    %1155 = vdwg.mxu0
    %1156 = vrot.lane.b32.xlu0 %v148, 64
    %v1157 = vpop.permute.xlu0 %1156
    %v1160 = vsel %vm157, %v848, 0
    %1162 = vmatprep.subr.mxu0 0.0
    %1163 = vmatpush1.msra.mxu0 0.0
    %1164 = vmatprep.subr.mxu0 0.0
    %1165 = vmatpush1.msra.mxu0 0.0
    %1166 = vmatprep.subr.mxu0 0.0
    %1167 = vmatpush1.msra.mxu0 0.0
    %1168 = vmatprep.subr.mxu0 0.0
    %1169 = vmatpush1.msra.mxu0 0.0
    %1170 = vmatprep.subr.mxu0 0.0
    %1171 = vmatpush1.msra.mxu0 0.0
    %1172 = vmatprep.subr.mxu0 0.0
    %1173 = vmatpush1.msra.mxu0 0.0
    %1174 = vmatprep.subr.mxu0 0.0
    %1175 = vmatpush1.msra.mxu0 0.0
    %1176 = vmatprep.subr.mxu0 0.0
    %1177 = vmatpush1.msra.mxu0 0.0
    %1178 = vmatprep.subr.mxu0 0.0
    %1179 = vmatpush1.msra.mxu0 0.0
    %1180 = vmatprep.subr.mxu0 0.0
    %1181 = vmatpush1.msra.mxu0 0.0
    %1182 = vmatprep.subr.mxu0 0.0
    %1183 = vmatpush1.msra.mxu0 0.0
    %1184 = vmatprep.subr.mxu0 0.0
    %1185 = vmatpush1.msra.mxu0 0.0
    %1186 = vmatprep.subr.mxu0 0.0
    %1187 = vmatpush1.msra.mxu0 0.0
    %1188 = vmatprep.subr.mxu0 0.0
    %1189 = vmatpush1.msra.mxu0 0.0
    %1190 = vmatprep.subr.mxu0 0.0
    %1191 = vmatpush1.msra.mxu0 0.0
    %1192 = vmatprep.subr.mxu0 0.0
    %1193 = vmatpush1.msra.mxu0 %v1157
    %1194 = vmatprep.subr.mxu0 0.0
    %1195 = vmatpush2.msra.mxu0 0.0
    %1196 = vmatprep.subr.mxu0 0.0
    %1197 = vmatpush2.msra.mxu0 0.0
    %1198 = vmatprep.subr.mxu0 0.0
    %1199 = vmatpush2.msra.mxu0 0.0
    %1200 = vmatprep.subr.mxu0 0.0
    %1201 = vmatpush2.msra.mxu0 0.0
    %1202 = vmatprep.subr.mxu0 0.0
    %1203 = vmatpush2.msra.mxu0 0.0
    %1204 = vmatprep.subr.mxu0 0.0
    %1205 = vmatpush2.msra.mxu0 0.0
    %1206 = vmatprep.subr.mxu0 0.0
    %1207 = vmatpush2.msra.mxu0 0.0
    %1208 = vmatprep.subr.mxu0 0.0
    %1209 = vmatpush2.msra.mxu0 0.0
    %1210 = vmatprep.subr.mxu0 0.0
    %1211 = vmatpush2.msra.mxu0 0.0
    %1212 = vmatprep.subr.mxu0 0.0
    %1213 = vmatpush2.msra.mxu0 0.0
    %1214 = vmatprep.subr.mxu0 0.0
    %1215 = vmatpush2.msra.mxu0 0.0
    %1216 = vmatprep.subr.mxu0 0.0
    %1217 = vmatpush2.msra.mxu0 0.0
    %1218 = vmatprep.subr.mxu0 0.0
    %1219 = vmatpush2.msra.mxu0 0.0
    %1220 = vmatprep.subr.mxu0 0.0
    %1221 = vmatpush2.msra.mxu0 0.0
    %1222 = vmatprep.subr.mxu0 0.0
    %1223 = vmatpush2.msra.mxu0 0.0
    %1224 = vmatprep.subr.mxu0 0.0
    %1225 = vmatpush2.msra.mxu0 0.0
    %1226 = vmatprep.mubr.f32.mxu0 0.0
    %1227 = vmatmul.mubr.f32.gmra.mxu0 %v1160
    %v1228 = vpop.f32.mrf.mxu0
    %v1229 = vadd.f32 0.0, %v1228
    %v1230 = vpop.f32.mrf.mxu0
    %1231 = vdwg.mxu0
    %1232 = vrot.lane.b32.xlu0 %v150, 64
    %v1233 = vpop.permute.xlu0 %1232
    %v1236 = vsel %vm157, %v849, 0
    %1238 = vmatprep.subr.mxu0 0.0
    %1239 = vmatpush1.msra.mxu0 0.0
    %1240 = vmatprep.subr.mxu0 0.0
    %1241 = vmatpush1.msra.mxu0 0.0
    %1242 = vmatprep.subr.mxu0 0.0
    %1243 = vmatpush1.msra.mxu0 0.0
    %1244 = vmatprep.subr.mxu0 0.0
    %1245 = vmatpush1.msra.mxu0 0.0
    %1246 = vmatprep.subr.mxu0 0.0
    %1247 = vmatpush1.msra.mxu0 0.0
    %1248 = vmatprep.subr.mxu0 0.0
    %1249 = vmatpush1.msra.mxu0 0.0
    %1250 = vmatprep.subr.mxu0 0.0
    %1251 = vmatpush1.msra.mxu0 0.0
    %1252 = vmatprep.subr.mxu0 0.0
    %1253 = vmatpush1.msra.mxu0 0.0
    %1254 = vmatprep.subr.mxu0 0.0
    %1255 = vmatpush1.msra.mxu0 0.0
    %1256 = vmatprep.subr.mxu0 0.0
    %1257 = vmatpush1.msra.mxu0 0.0
    %1258 = vmatprep.subr.mxu0 0.0
    %1259 = vmatpush1.msra.mxu0 0.0
    %1260 = vmatprep.subr.mxu0 0.0
    %1261 = vmatpush1.msra.mxu0 0.0
    %1262 = vmatprep.subr.mxu0 0.0
    %1263 = vmatpush1.msra.mxu0 0.0
    %1264 = vmatprep.subr.mxu0 0.0
    %1265 = vmatpush1.msra.mxu0 0.0
    %1266 = vmatprep.subr.mxu0 0.0
    %1267 = vmatpush1.msra.mxu0 0.0
    %1268 = vmatprep.subr.mxu0 0.0
    %1269 = vmatpush1.msra.mxu0 %v1233
    %1270 = vmatprep.subr.mxu0 0.0
    %1271 = vmatpush2.msra.mxu0 0.0
    %1272 = vmatprep.subr.mxu0 0.0
    %1273 = vmatpush2.msra.mxu0 0.0
    %1274 = vmatprep.subr.mxu0 0.0
    %1275 = vmatpush2.msra.mxu0 0.0
    %1276 = vmatprep.subr.mxu0 0.0
    %1277 = vmatpush2.msra.mxu0 0.0
    %1278 = vmatprep.subr.mxu0 0.0
    %1279 = vmatpush2.msra.mxu0 0.0
    %1280 = vmatprep.subr.mxu0 0.0
    %1281 = vmatpush2.msra.mxu0 0.0
    %1282 = vmatprep.subr.mxu0 0.0
    %1283 = vmatpush2.msra.mxu0 0.0
    %1284 = vmatprep.subr.mxu0 0.0
    %1285 = vmatpush2.msra.mxu0 0.0
    %1286 = vmatprep.subr.mxu0 0.0
    %1287 = vmatpush2.msra.mxu0 0.0
    %1288 = vmatprep.subr.mxu0 0.0
    %1289 = vmatpush2.msra.mxu0 0.0
    %1290 = vmatprep.subr.mxu0 0.0
    %1291 = vmatpush2.msra.mxu0 0.0
    %1292 = vmatprep.subr.mxu0 0.0
    %1293 = vmatpush2.msra.mxu0 0.0
    %1294 = vmatprep.subr.mxu0 0.0
    %1295 = vmatpush2.msra.mxu0 0.0
    %1296 = vmatprep.subr.mxu0 0.0
    %1297 = vmatpush2.msra.mxu0 0.0
    %1298 = vmatprep.subr.mxu0 0.0
    %1299 = vmatpush2.msra.mxu0 0.0
    %1300 = vmatprep.subr.mxu0 0.0
    %1301 = vmatpush2.msra.mxu0 0.0
    %1302 = vmatprep.mubr.f32.mxu0 0.0
    %1303 = vmatmul.mubr.f32.gmra.mxu0 %v1236
    %v1304 = vpop.f32.mrf.mxu0
    %v1305 = vadd.f32 0.0, %v1304
    %v1306 = vpop.f32.mrf.mxu0
    %1307 = vdwg.mxu0
    %1308 = vrot.lane.b32.xlu0 %v152, 64
    %v1309 = vpop.permute.xlu0 %1308
    %v1312 = vsel %vm157, %v850, 0
    %1314 = vmatprep.subr.mxu0 0.0
    %1315 = vmatpush1.msra.mxu0 0.0
    %1316 = vmatprep.subr.mxu0 0.0
    %1317 = vmatpush1.msra.mxu0 0.0
    %1318 = vmatprep.subr.mxu0 0.0
    %1319 = vmatpush1.msra.mxu0 0.0
    %1320 = vmatprep.subr.mxu0 0.0
    %1321 = vmatpush1.msra.mxu0 0.0
    %1322 = vmatprep.subr.mxu0 0.0
    %1323 = vmatpush1.msra.mxu0 0.0
    %1324 = vmatprep.subr.mxu0 0.0
    %1325 = vmatpush1.msra.mxu0 0.0
    %1326 = vmatprep.subr.mxu0 0.0
    %1327 = vmatpush1.msra.mxu0 0.0
    %1328 = vmatprep.subr.mxu0 0.0
    %1329 = vmatpush1.msra.mxu0 0.0
    %1330 = vmatprep.subr.mxu0 0.0
    %1331 = vmatpush1.msra.mxu0 0.0
    %1332 = vmatprep.subr.mxu0 0.0
    %1333 = vmatpush1.msra.mxu0 0.0
    %1334 = vmatprep.subr.mxu0 0.0
    %1335 = vmatpush1.msra.mxu0 0.0
    %1336 = vmatprep.subr.mxu0 0.0
    %1337 = vmatpush1.msra.mxu0 0.0
    %1338 = vmatprep.subr.mxu0 0.0
    %1339 = vmatpush1.msra.mxu0 0.0
    %1340 = vmatprep.subr.mxu0 0.0
    %1341 = vmatpush1.msra.mxu0 0.0
    %1342 = vmatprep.subr.mxu0 0.0
    %1343 = vmatpush1.msra.mxu0 0.0
    %1344 = vmatprep.subr.mxu0 0.0
    %1345 = vmatpush1.msra.mxu0 %v1309
    %1346 = vmatprep.subr.mxu0 0.0
    %1347 = vmatpush2.msra.mxu0 0.0
    %1348 = vmatprep.subr.mxu0 0.0
    %1349 = vmatpush2.msra.mxu0 0.0
    %1350 = vmatprep.subr.mxu0 0.0
    %1351 = vmatpush2.msra.mxu0 0.0
    %1352 = vmatprep.subr.mxu0 0.0
    %1353 = vmatpush2.msra.mxu0 0.0
    %1354 = vmatprep.subr.mxu0 0.0
    %1355 = vmatpush2.msra.mxu0 0.0
    %1356 = vmatprep.subr.mxu0 0.0
    %1357 = vmatpush2.msra.mxu0 0.0
    %1358 = vmatprep.subr.mxu0 0.0
    %1359 = vmatpush2.msra.mxu0 0.0
    %1360 = vmatprep.subr.mxu0 0.0
    %1361 = vmatpush2.msra.mxu0 0.0
    %1362 = vmatprep.subr.mxu0 0.0
    %1363 = vmatpush2.msra.mxu0 0.0
    %1364 = vmatprep.subr.mxu0 0.0
    %1365 = vmatpush2.msra.mxu0 0.0
    %1366 = vmatprep.subr.mxu0 0.0
    %1367 = vmatpush2.msra.mxu0 0.0
    %1368 = vmatprep.subr.mxu0 0.0
    %1369 = vmatpush2.msra.mxu0 0.0
    %1370 = vmatprep.subr.mxu0 0.0
    %1371 = vmatpush2.msra.mxu0 0.0
    %1372 = vmatprep.subr.mxu0 0.0
    %1373 = vmatpush2.msra.mxu0 0.0
    %1374 = vmatprep.subr.mxu0 0.0
    %1375 = vmatpush2.msra.mxu0 0.0
    %1376 = vmatprep.subr.mxu0 0.0
    %1377 = vmatpush2.msra.mxu0 0.0
    %1378 = vmatprep.mubr.f32.mxu0 0.0
    %1379 = vmatmul.mubr.f32.gmra.mxu0 %v1312
    %v1380 = vpop.f32.mrf.mxu0
    %v1381 = vadd.f32 0.0, %v1380
    %v1382 = vpop.f32.mrf.mxu0
    %1383 = vdwg.mxu0
    %1384 = vrot.lane.b32.xlu0 %v154, 64
    %v1385 = vpop.permute.xlu0 %1384
    %v1388 = vsel %vm157, %v851, 0
    %1390 = vmatprep.subr.mxu0 0.0
    %1391 = vmatpush1.msra.mxu0 0.0
    %1392 = vmatprep.subr.mxu0 0.0
    %1393 = vmatpush1.msra.mxu0 0.0
    %1394 = vmatprep.subr.mxu0 0.0
    %1395 = vmatpush1.msra.mxu0 0.0
    %1396 = vmatprep.subr.mxu0 0.0
    %1397 = vmatpush1.msra.mxu0 0.0
    %1398 = vmatprep.subr.mxu0 0.0
    %1399 = vmatpush1.msra.mxu0 0.0
    %1400 = vmatprep.subr.mxu0 0.0
    %1401 = vmatpush1.msra.mxu0 0.0
    %1402 = vmatprep.subr.mxu0 0.0
    %1403 = vmatpush1.msra.mxu0 0.0
    %1404 = vmatprep.subr.mxu0 0.0
    %1405 = vmatpush1.msra.mxu0 0.0
    %1406 = vmatprep.subr.mxu0 0.0
    %1407 = vmatpush1.msra.mxu0 0.0
    %1408 = vmatprep.subr.mxu0 0.0
    %1409 = vmatpush1.msra.mxu0 0.0
    %1410 = vmatprep.subr.mxu0 0.0
    %1411 = vmatpush1.msra.mxu0 0.0
    %1412 = vmatprep.subr.mxu0 0.0
    %1413 = vmatpush1.msra.mxu0 0.0
    %1414 = vmatprep.subr.mxu0 0.0
    %1415 = vmatpush1.msra.mxu0 0.0
    %1416 = vmatprep.subr.mxu0 0.0
    %1417 = vmatpush1.msra.mxu0 0.0
    %1418 = vmatprep.subr.mxu0 0.0
    %1419 = vmatpush1.msra.mxu0 0.0
    %1420 = vmatprep.subr.mxu0 0.0
    %1421 = vmatpush1.msra.mxu0 %v1385
    %1422 = vmatprep.subr.mxu0 0.0
    %1423 = vmatpush2.msra.mxu0 0.0
    %1424 = vmatprep.subr.mxu0 0.0
    %1425 = vmatpush2.msra.mxu0 0.0
    %1426 = vmatprep.subr.mxu0 0.0
    %1427 = vmatpush2.msra.mxu0 0.0
    %1428 = vmatprep.subr.mxu0 0.0
    %1429 = vmatpush2.msra.mxu0 0.0
    %1430 = vmatprep.subr.mxu0 0.0
    %1431 = vmatpush2.msra.mxu0 0.0
    %1432 = vmatprep.subr.mxu0 0.0
    %1433 = vmatpush2.msra.mxu0 0.0
    %1434 = vmatprep.subr.mxu0 0.0
    %1435 = vmatpush2.msra.mxu0 0.0
    %1436 = vmatprep.subr.mxu0 0.0
    %1437 = vmatpush2.msra.mxu0 0.0
    %1438 = vmatprep.subr.mxu0 0.0
    %1439 = vmatpush2.msra.mxu0 0.0
    %1440 = vmatprep.subr.mxu0 0.0
    %1441 = vmatpush2.msra.mxu0 0.0
    %1442 = vmatprep.subr.mxu0 0.0
    %1443 = vmatpush2.msra.mxu0 0.0
    %1444 = vmatprep.subr.mxu0 0.0
    %1445 = vmatpush2.msra.mxu0 0.0
    %1446 = vmatprep.subr.mxu0 0.0
    %1447 = vmatpush2.msra.mxu0 0.0
    %1448 = vmatprep.subr.mxu0 0.0
    %1449 = vmatpush2.msra.mxu0 0.0
    %1450 = vmatprep.subr.mxu0 0.0
    %1451 = vmatpush2.msra.mxu0 0.0
    %1452 = vmatprep.subr.mxu0 0.0
    %1453 = vmatpush2.msra.mxu0 0.0
    %1454 = vmatprep.mubr.f32.mxu0 0.0
    %1455 = vmatmul.mubr.f32.gmra.mxu0 %v1388
    %v1456 = vpop.f32.mrf.mxu0
    %v1457 = vadd.f32 0.0, %v1456
    %v1458 = vpop.f32.mrf.mxu0
    %1459 = vdwg.mxu0
    %1462 = vrot.lane.b32.xlu0 %v1077, 8
    %v1463 = vpop.permute.xlu0 %1462
    %1464 = vrot.lane.b32.xlu0 %v1153, 8
    %v1465 = vpop.permute.xlu0 %1464
    %1470 = vrot.lane.b32.xlu0 %v1229, 16
    %v1471 = vpop.permute.xlu0 %1470
    %1472 = vrot.lane.b32.xlu0 %v1305, 16
    %v1473 = vpop.permute.xlu0 %1472
    %1478 = vrot.lane.b32.xlu0 %v1381, 24
    %v1479 = vpop.permute.xlu0 %1478
    %1480 = vrot.lane.b32.xlu0 %v1457, 24
    %v1481 = vpop.permute.xlu0 %1480
    %v1484 = vsel %vm157, %v925, %v1463
    %v1485 = vsel %vm157, %v1001, %v1465
    %vm1486 = vcmask 130048
    %v1487 = vsel %vm1486, %v1484, %v1471
    %v1488 = vsel %vm1486, %v1485, %v1473
    %vm1489 = vcmask 195584
    %v1490 = vsel %vm1489, %v1487, %v1479
    %v1491 = vsel %vm1489, %v1488, %v1481
    %1496 = vrot.lane.b32.xlu0 %v34, 32
    %v1497 = vpop.permute.xlu0 %1496
    %1498 = vrot.lane.b32.xlu0 %v35, 32
    %v1499 = vpop.permute.xlu0 %1498
    %1500 = vrot.lane.b32.xlu0 %v36, 32
    %v1501 = vpop.permute.xlu0 %1500
    %1502 = vrot.lane.b32.xlu0 %v37, 32
    %v1503 = vpop.permute.xlu0 %1502
    %1509 = vrot.lane.b32.xlu0 %v58, 32
    %v1510 = vpop.permute.xlu0 %1509
    %v1513 = vsel %vm59, %v1490, 0
    %v1516 = vsel %vm59, %v1491, 0
    %1518 = vmatprep.subr.mxu0 0.0
    %1519 = vmatpush1.msra.mxu0 0.0
    %1520 = vmatprep.subr.mxu0 0.0
    %1521 = vmatpush1.msra.mxu0 0.0
    %1522 = vmatprep.subr.mxu0 0.0
    %1523 = vmatpush1.msra.mxu0 0.0
    %1524 = vmatprep.subr.mxu0 0.0
    %1525 = vmatpush1.msra.mxu0 0.0
    %1526 = vmatprep.subr.mxu0 0.0
    %1527 = vmatpush1.msra.mxu0 0.0
    %1528 = vmatprep.subr.mxu0 0.0
    %1529 = vmatpush1.msra.mxu0 0.0
    %1530 = vmatprep.subr.mxu0 0.0
    %1531 = vmatpush1.msra.mxu0 0.0
    %1532 = vmatprep.subr.mxu0 0.0
    %1533 = vmatpush1.msra.mxu0 0.0
    %1534 = vmatprep.subr.mxu0 0.0
    %1535 = vmatpush1.msra.mxu0 0.0
    %1536 = vmatprep.subr.mxu0 0.0
    %1537 = vmatpush1.msra.mxu0 0.0
    %1538 = vmatprep.subr.mxu0 0.0
    %1539 = vmatpush1.msra.mxu0 0.0
    %1540 = vmatprep.subr.mxu0 0.0
    %1541 = vmatpush1.msra.mxu0 0.0
    %1542 = vmatprep.subr.mxu0 0.0
    %1543 = vmatpush1.msra.mxu0 %v1503
    %1544 = vmatprep.subr.mxu0 0.0
    %1545 = vmatpush1.msra.mxu0 %v1501
    %1546 = vmatprep.subr.mxu0 0.0
    %1547 = vmatpush1.msra.mxu0 %v1499
    %1548 = vmatprep.subr.mxu0 0.0
    %1549 = vmatpush1.msra.mxu0 %v1497
    %1550 = vmatprep.subr.mxu0 0.0
    %1551 = vmatpush2.msra.mxu0 0.0
    %1552 = vmatprep.subr.mxu0 0.0
    %1553 = vmatpush2.msra.mxu0 0.0
    %1554 = vmatprep.subr.mxu0 0.0
    %1555 = vmatpush2.msra.mxu0 0.0
    %1556 = vmatprep.subr.mxu0 0.0
    %1557 = vmatpush2.msra.mxu0 0.0
    %1558 = vmatprep.subr.mxu0 0.0
    %1559 = vmatpush2.msra.mxu0 0.0
    %1560 = vmatprep.subr.mxu0 0.0
    %1561 = vmatpush2.msra.mxu0 0.0
    %1562 = vmatprep.subr.mxu0 0.0
    %1563 = vmatpush2.msra.mxu0 0.0
    %1564 = vmatprep.subr.mxu0 0.0
    %1565 = vmatpush2.msra.mxu0 0.0
    %1566 = vmatprep.subr.mxu0 0.0
    %1567 = vmatpush2.msra.mxu0 0.0
    %1568 = vmatprep.subr.mxu0 0.0
    %1569 = vmatpush2.msra.mxu0 0.0
    %1570 = vmatprep.subr.mxu0 0.0
    %1571 = vmatpush2.msra.mxu0 0.0
    %1572 = vmatprep.subr.mxu0 0.0
    %1573 = vmatpush2.msra.mxu0 0.0
    %1574 = vmatprep.subr.mxu0 0.0
    %1575 = vmatpush2.msra.mxu0 0.0
    %1576 = vmatprep.subr.mxu0 0.0
    %1577 = vmatpush2.msra.mxu0 0.0
    %1578 = vmatprep.subr.mxu0 0.0
    %1579 = vmatpush2.msra.mxu0 0.0
    %1580 = vmatprep.subr.mxu0 0.0
    %1581 = vmatpush2.msra.mxu0 0.0
    %1582 = vmatprep.mubr.f32.mxu0 0.0
    %1583 = vmatmul.mubr.f32.gmra.mxu0 %v1513
    %v1584 = vpop.f32.mrf.mxu0
    %v1585 = vadd.f32 %v1510, %v1584
    %v1586 = vpop.f32.mrf.mxu0
    %1587 = vmatprep.mubr.f32.mxu0 0.0
    %1588 = vmatmul.mubr.f32.gmra.mxu0 %v1516
    %v1589 = vpop.f32.mrf.mxu0
    %v1590 = vadd.f32 %v1510, %v1589
    %v1591 = vpop.f32.mrf.mxu0
    %1592 = vdwg.mxu0
    %v1593 = vadd.f32 %v27, %v1585
    %v1594 = vadd.f32 %v28, %v1590
    %v1595 = vsel %vm59, %v1593, 0.0
    %1596 = vadd.xlane.f32.xlu0 %v1595
    %v1597 = vpop.xlane.xlu0 %1596
    %v1598 = vsel %vm59, %v1594, 0.0
    %1599 = vadd.xlane.f32.xlu0 %v1598
    %v1600 = vpop.xlane.xlu0 %1599
    %v1601 = vrcp.pop 32.0
    %v1602 = vmul.f32 %v1597, %v1601
    %v1603 = vmul.f32 %v1600, %v1601
    %v1604 = vsub.f32 %v1593, %v1602
    %v1605 = vsub.f32 %v1594, %v1603
    %v1606 = vmul.f32 %v1604, %v1604
    %v1607 = vmul.f32 %v1605, %v1605
    %v1608 = vsel %vm59, %v1606, 0.0
    %1609 = vadd.xlane.f32.xlu0 %v1608
    %v1610 = vpop.xlane.xlu0 %1609
    %v1611 = vsel %vm59, %v1607, 0.0
    %1612 = vadd.xlane.f32.xlu0 %v1611
    %v1613 = vpop.xlane.xlu0 %1612
    %v1614 = vmul.f32 %v1610, %v1601
    %v1615 = vmul.f32 %v1613, %v1601
    %v1616 = vadd.f32 %v1614, 1e-05
    %v1617 = vadd.f32 %v1615, 1e-05
    %v1618 = vrsqrt.pop %v1616
    %v1619 = vrsqrt.pop %v1617
    %v1620 = vmul.f32 %v1604, %v1618
    %v1621 = vmul.f32 %v1605, %v1619
    %v1622 = vlaneseq
    %v1623 = vshrl.u32 %v1622, 7
    %v1624 = vsub.s32 0, %v1623
    %v1625 = vrot.slane %v42, %v1624
    %v1626 = vmul.f32 %v1620, %v1625
    %v1627 = vmul.f32 %v1621, %v1625
    %v1628 = vlaneseq
    %v1629 = vshrl.u32 %v1628, 7
    %v1630 = vsub.s32 1, %v1629
    %v1631 = vrot.slane %v42, %v1630
    %v1632 = vadd.f32 %v1626, %v1631
    %v1633 = vadd.f32 %v1627, %v1631
    %v1634 = vlaneseq
    %v1635 = vshrl.u32 %v1634, 7
    %v1636 = vsub.s32 7, %v1635
    %v1637 = vrot.slane %v42, %v1636
    %v1639 = vsel %vm59, %v1632, 0
    %v1642 = vsel %vm59, %v1633, 0
    %1644 = vmatprep.subr.mxu0 0.0
    %1645 = vmatpush1.msra.mxu0 0.0
    %1646 = vmatprep.subr.mxu0 0.0
    %1647 = vmatpush1.msra.mxu0 0.0
    %1648 = vmatprep.subr.mxu0 0.0
    %1649 = vmatpush1.msra.mxu0 0.0
    %1650 = vmatprep.subr.mxu0 0.0
    %1651 = vmatpush1.msra.mxu0 0.0
    %1652 = vmatprep.subr.mxu0 0.0
    %1653 = vmatpush1.msra.mxu0 0.0
    %1654 = vmatprep.subr.mxu0 0.0
    %1655 = vmatpush1.msra.mxu0 0.0
    %1656 = vmatprep.subr.mxu0 0.0
    %1657 = vmatpush1.msra.mxu0 0.0
    %1658 = vmatprep.subr.mxu0 0.0
    %1659 = vmatpush1.msra.mxu0 0.0
    %1660 = vmatprep.subr.mxu0 0.0
    %1661 = vmatpush1.msra.mxu0 0.0
    %1662 = vmatprep.subr.mxu0 0.0
    %1663 = vmatpush1.msra.mxu0 0.0
    %1664 = vmatprep.subr.mxu0 0.0
    %1665 = vmatpush1.msra.mxu0 0.0
    %1666 = vmatprep.subr.mxu0 0.0
    %1667 = vmatpush1.msra.mxu0 0.0
    %1668 = vmatprep.subr.mxu0 0.0
    %1669 = vmatpush1.msra.mxu0 %v41
    %1670 = vmatprep.subr.mxu0 0.0
    %1671 = vmatpush1.msra.mxu0 %v40
    %1672 = vmatprep.subr.mxu0 0.0
    %1673 = vmatpush1.msra.mxu0 %v39
    %1674 = vmatprep.subr.mxu0 0.0
    %1675 = vmatpush1.msra.mxu0 %v38
    %1676 = vmatprep.subr.mxu0 0.0
    %1677 = vmatpush2.msra.mxu0 0.0
    %1678 = vmatprep.subr.mxu0 0.0
    %1679 = vmatpush2.msra.mxu0 0.0
    %1680 = vmatprep.subr.mxu0 0.0
    %1681 = vmatpush2.msra.mxu0 0.0
    %1682 = vmatprep.subr.mxu0 0.0
    %1683 = vmatpush2.msra.mxu0 0.0
    %1684 = vmatprep.subr.mxu0 0.0
    %1685 = vmatpush2.msra.mxu0 0.0
    %1686 = vmatprep.subr.mxu0 0.0
    %1687 = vmatpush2.msra.mxu0 0.0
    %1688 = vmatprep.subr.mxu0 0.0
    %1689 = vmatpush2.msra.mxu0 0.0
    %1690 = vmatprep.subr.mxu0 0.0
    %1691 = vmatpush2.msra.mxu0 0.0
    %1692 = vmatprep.subr.mxu0 0.0
    %1693 = vmatpush2.msra.mxu0 0.0
    %1694 = vmatprep.subr.mxu0 0.0
    %1695 = vmatpush2.msra.mxu0 0.0
    %1696 = vmatprep.subr.mxu0 0.0
    %1697 = vmatpush2.msra.mxu0 0.0
    %1698 = vmatprep.subr.mxu0 0.0
    %1699 = vmatpush2.msra.mxu0 0.0
    %1700 = vmatprep.subr.mxu0 0.0
    %1701 = vmatpush2.msra.mxu0 0.0
    %1702 = vmatprep.subr.mxu0 0.0
    %1703 = vmatpush2.msra.mxu0 0.0
    %1704 = vmatprep.subr.mxu0 0.0
    %1705 = vmatpush2.msra.mxu0 0.0
    %1706 = vmatprep.subr.mxu0 0.0
    %1707 = vmatpush2.msra.mxu0 0.0
    %1708 = vmatprep.mubr.f32.mxu0 0.0
    %1709 = vmatmul.mubr.f32.gmra.mxu0 %v1639
    %v1710 = vpop.f32.mrf.mxu0
    %v1711 = vadd.f32 %v1637, %v1710
    %v1712 = vpop.f32.mrf.mxu0
    %1713 = vmatprep.mubr.f32.mxu0 0.0
    %1714 = vmatmul.mubr.f32.gmra.mxu0 %v1642
    %v1715 = vpop.f32.mrf.mxu0
    %v1716 = vadd.f32 %v1637, %v1715
    %v1717 = vpop.f32.mrf.mxu0
    %1718 = vdwg.mxu0
    %1723 = vrot.lane.b32.xlu0 %v38, 96
    %v1724 = vpop.permute.xlu0 %1723
    %1725 = vrot.lane.b32.xlu0 %v39, 96
    %v1726 = vpop.permute.xlu0 %1725
    %1727 = vrot.lane.b32.xlu0 %v40, 96
    %v1728 = vpop.permute.xlu0 %1727
    %1729 = vrot.lane.b32.xlu0 %v41, 96
    %v1730 = vpop.permute.xlu0 %1729
    %1736 = vrot.lane.b32.xlu0 %v1637, 96
    %v1737 = vpop.permute.xlu0 %1736
    %v1740 = vsel %vm59, %v29, 0
    %v1743 = vsel %vm59, %v30, 0
    %v1746 = vsel %vm59, %v31, 0
    %v1749 = vsel %vm59, %v32, 0
    %1751 = vmatprep.subr.mxu0 0.0
    %1752 = vmatpush1.msra.mxu0 0.0
    %1753 = vmatprep.subr.mxu0 0.0
    %1754 = vmatpush1.msra.mxu0 0.0
    %1755 = vmatprep.subr.mxu0 0.0
    %1756 = vmatpush1.msra.mxu0 0.0
    %1757 = vmatprep.subr.mxu0 0.0
    %1758 = vmatpush1.msra.mxu0 0.0
    %1759 = vmatprep.subr.mxu0 0.0
    %1760 = vmatpush1.msra.mxu0 0.0
    %1761 = vmatprep.subr.mxu0 0.0
    %1762 = vmatpush1.msra.mxu0 0.0
    %1763 = vmatprep.subr.mxu0 0.0
    %1764 = vmatpush1.msra.mxu0 0.0
    %1765 = vmatprep.subr.mxu0 0.0
    %1766 = vmatpush1.msra.mxu0 0.0
    %1767 = vmatprep.subr.mxu0 0.0
    %1768 = vmatpush1.msra.mxu0 0.0
    %1769 = vmatprep.subr.mxu0 0.0
    %1770 = vmatpush1.msra.mxu0 0.0
    %1771 = vmatprep.subr.mxu0 0.0
    %1772 = vmatpush1.msra.mxu0 0.0
    %1773 = vmatprep.subr.mxu0 0.0
    %1774 = vmatpush1.msra.mxu0 0.0
    %1775 = vmatprep.subr.mxu0 0.0
    %1776 = vmatpush1.msra.mxu0 %v1730
    %1777 = vmatprep.subr.mxu0 0.0
    %1778 = vmatpush1.msra.mxu0 %v1728
    %1779 = vmatprep.subr.mxu0 0.0
    %1780 = vmatpush1.msra.mxu0 %v1726
    %1781 = vmatprep.subr.mxu0 0.0
    %1782 = vmatpush1.msra.mxu0 %v1724
    %1783 = vmatprep.subr.mxu0 0.0
    %1784 = vmatpush2.msra.mxu0 0.0
    %1785 = vmatprep.subr.mxu0 0.0
    %1786 = vmatpush2.msra.mxu0 0.0
    %1787 = vmatprep.subr.mxu0 0.0
    %1788 = vmatpush2.msra.mxu0 0.0
    %1789 = vmatprep.subr.mxu0 0.0
    %1790 = vmatpush2.msra.mxu0 0.0
    %1791 = vmatprep.subr.mxu0 0.0
    %1792 = vmatpush2.msra.mxu0 0.0
    %1793 = vmatprep.subr.mxu0 0.0
    %1794 = vmatpush2.msra.mxu0 0.0
    %1795 = vmatprep.subr.mxu0 0.0
    %1796 = vmatpush2.msra.mxu0 0.0
    %1797 = vmatprep.subr.mxu0 0.0
    %1798 = vmatpush2.msra.mxu0 0.0
    %1799 = vmatprep.subr.mxu0 0.0
    %1800 = vmatpush2.msra.mxu0 0.0
    %1801 = vmatprep.subr.mxu0 0.0
    %1802 = vmatpush2.msra.mxu0 0.0
    %1803 = vmatprep.subr.mxu0 0.0
    %1804 = vmatpush2.msra.mxu0 0.0
    %1805 = vmatprep.subr.mxu0 0.0
    %1806 = vmatpush2.msra.mxu0 0.0
    %1807 = vmatprep.subr.mxu0 0.0
    %1808 = vmatpush2.msra.mxu0 0.0
    %1809 = vmatprep.subr.mxu0 0.0
    %1810 = vmatpush2.msra.mxu0 0.0
    %1811 = vmatprep.subr.mxu0 0.0
    %1812 = vmatpush2.msra.mxu0 0.0
    %1813 = vmatprep.subr.mxu0 0.0
    %1814 = vmatpush2.msra.mxu0 0.0
    %1815 = vmatprep.mubr.f32.mxu0 0.0
    %1816 = vmatmul.mubr.f32.gmra.mxu0 %v1740
    %v1817 = vpop.f32.mrf.mxu0
    %v1818 = vadd.f32 %v1737, %v1817
    %v1819 = vpop.f32.mrf.mxu0
    %1820 = vmatprep.mubr.f32.mxu0 0.0
    %1821 = vmatmul.mubr.f32.gmra.mxu0 %v1743
    %v1822 = vpop.f32.mrf.mxu0
    %v1823 = vadd.f32 %v1737, %v1822
    %v1824 = vpop.f32.mrf.mxu0
    %1825 = vmatprep.mubr.f32.mxu0 0.0
    %1826 = vmatmul.mubr.f32.gmra.mxu0 %v1746
    %v1827 = vpop.f32.mrf.mxu0
    %v1828 = vadd.f32 %v1737, %v1827
    %v1829 = vpop.f32.mrf.mxu0
    %1830 = vmatprep.mubr.f32.mxu0 0.0
    %1831 = vmatmul.mubr.f32.gmra.mxu0 %v1749
    %v1832 = vpop.f32.mrf.mxu0
    %v1833 = vadd.f32 %v1737, %v1832
    %v1834 = vpop.f32.mrf.mxu0
    %1835 = vdwg.mxu0
    %1838 = vrot.lane.b32.xlu0 %v1711, 120
    %v1839 = vpop.permute.xlu0 %1838
    %1840 = vrot.lane.b32.xlu0 %v1716, 120
    %v1841 = vpop.permute.xlu0 %1840
    %1842 = vrot.lane.b32.xlu0 %v1711, 112
    %v1843 = vpop.permute.xlu0 %1842
    %1844 = vrot.lane.b32.xlu0 %v1716, 112
    %v1845 = vpop.permute.xlu0 %1844
    %1846 = vrot.lane.b32.xlu0 %v1711, 104
    %v1847 = vpop.permute.xlu0 %1846
    %1848 = vrot.lane.b32.xlu0 %v1716, 104
    %v1849 = vpop.permute.xlu0 %1848
    %1854 = vrot.lane.b32.xlu0 %v1818, 120
    %v1855 = vpop.permute.xlu0 %1854
    %1856 = vrot.lane.b32.xlu0 %v1823, 120
    %v1857 = vpop.permute.xlu0 %1856
    %1858 = vrot.lane.b32.xlu0 %v1828, 120
    %v1859 = vpop.permute.xlu0 %1858
    %1860 = vrot.lane.b32.xlu0 %v1833, 120
    %v1861 = vpop.permute.xlu0 %1860
    %1862 = vrot.lane.b32.xlu0 %v1818, 112
    %v1863 = vpop.permute.xlu0 %1862
    %1864 = vrot.lane.b32.xlu0 %v1823, 112
    %v1865 = vpop.permute.xlu0 %1864
    %1866 = vrot.lane.b32.xlu0 %v1828, 112
    %v1867 = vpop.permute.xlu0 %1866
    %1868 = vrot.lane.b32.xlu0 %v1833, 112
    %v1869 = vpop.permute.xlu0 %1868
    %1870 = vrot.lane.b32.xlu0 %v1818, 104
    %v1871 = vpop.permute.xlu0 %1870
    %1872 = vrot.lane.b32.xlu0 %v1823, 104
    %v1873 = vpop.permute.xlu0 %1872
    %1874 = vrot.lane.b32.xlu0 %v1828, 104
    %v1875 = vpop.permute.xlu0 %1874
    %1876 = vrot.lane.b32.xlu0 %v1833, 104
    %v1877 = vpop.permute.xlu0 %1876
    %1879 = vrot.lane.b32.xlu0 %v33, 120
    %v1880 = vpop.permute.xlu0 %1879
    %v1882 = vsel %vm157, %v1711, 0
    %v1884 = vsel %vm157, %v1818, 0
    %v1886 = vsel %vm157, %v1823, 0
    %1888 = vmatprep.subr.mxu0 0.0
    %1889 = vmatpush1.xpose.msra.mxu0 0.0
    %1890 = vmatprep.subr.mxu0 0.0
    %1891 = vmatpush1.xpose.msra.mxu0 0.0
    %1892 = vmatprep.subr.mxu0 0.0
    %1893 = vmatpush1.xpose.msra.mxu0 0.0
    %1894 = vmatprep.subr.mxu0 0.0
    %1895 = vmatpush1.xpose.msra.mxu0 0.0
    %1896 = vmatprep.subr.mxu0 0.0
    %1897 = vmatpush1.xpose.msra.mxu0 0.0
    %1898 = vmatprep.subr.mxu0 0.0
    %1899 = vmatpush1.xpose.msra.mxu0 0.0
    %1900 = vmatprep.subr.mxu0 0.0
    %1901 = vmatpush1.xpose.msra.mxu0 0.0
    %1902 = vmatprep.subr.mxu0 0.0
    %1903 = vmatpush1.xpose.msra.mxu0 0.0
    %1904 = vmatprep.subr.mxu0 0.0
    %1905 = vmatpush1.xpose.msra.mxu0 0.0
    %1906 = vmatprep.subr.mxu0 0.0
    %1907 = vmatpush1.xpose.msra.mxu0 0.0
    %1908 = vmatprep.subr.mxu0 0.0
    %1909 = vmatpush1.xpose.msra.mxu0 0.0
    %1910 = vmatprep.subr.mxu0 0.0
    %1911 = vmatpush1.xpose.msra.mxu0 0.0
    %1912 = vmatprep.subr.mxu0 0.0
    %1913 = vmatpush1.xpose.msra.mxu0 0.0
    %1914 = vmatprep.subr.mxu0 0.0
    %1915 = vmatpush1.xpose.msra.mxu0 0.0
    %1916 = vmatprep.subr.mxu0 0.0
    %1917 = vmatpush1.xpose.msra.mxu0 %v1886
    %1918 = vmatprep.subr.mxu0 0.0
    %1919 = vmatpush1.xpose.msra.mxu0 %v1884
    %1920 = vmatprep.subr.mxu0 0.0
    %1921 = vmatpush2.xpose.msra.mxu0 0.0
    %1922 = vmatprep.subr.mxu0 0.0
    %1923 = vmatpush2.xpose.msra.mxu0 0.0
    %1924 = vmatprep.subr.mxu0 0.0
    %1925 = vmatpush2.xpose.msra.mxu0 0.0
    %1926 = vmatprep.subr.mxu0 0.0
    %1927 = vmatpush2.xpose.msra.mxu0 0.0
    %1928 = vmatprep.subr.mxu0 0.0
    %1929 = vmatpush2.xpose.msra.mxu0 0.0
    %1930 = vmatprep.subr.mxu0 0.0
    %1931 = vmatpush2.xpose.msra.mxu0 0.0
    %1932 = vmatprep.subr.mxu0 0.0
    %1933 = vmatpush2.xpose.msra.mxu0 0.0
    %1934 = vmatprep.subr.mxu0 0.0
    %1935 = vmatpush2.xpose.msra.mxu0 0.0
    %1936 = vmatprep.subr.mxu0 0.0
    %1937 = vmatpush2.xpose.msra.mxu0 0.0
    %1938 = vmatprep.subr.mxu0 0.0
    %1939 = vmatpush2.xpose.msra.mxu0 0.0
    %1940 = vmatprep.subr.mxu0 0.0
    %1941 = vmatpush2.xpose.msra.mxu0 0.0
    %1942 = vmatprep.subr.mxu0 0.0
    %1943 = vmatpush2.xpose.msra.mxu0 0.0
    %1944 = vmatprep.subr.mxu0 0.0
    %1945 = vmatpush2.xpose.msra.mxu0 0.0
    %1946 = vmatprep.subr.mxu0 0.0
    %1947 = vmatpush2.xpose.msra.mxu0 0.0
    %1948 = vmatprep.subr.mxu0 0.0
    %1949 = vmatpush2.xpose.msra.mxu0 0.0
    %1950 = vmatprep.subr.mxu0 0.0
    %1951 = vmatpush2.xpose.msra.mxu0 0.0
    %1952 = vmatprep.mubr.f32.mxu0 0.0
    %1953 = vmatmul.mubr.f32.gmra.mxu0 %v1882
    %v1954 = vpop.f32.mrf.mxu0
    %v1955 = vadd.f32 %v1880, %v1954
    %v1956 = vpop.f32.mrf.mxu0
    %1957 = vdwg.mxu0
    %v1958 = vsel %vm157, %v1716, 0
    %v1960 = vsel %vm157, %v1828, 0
    %v1962 = vsel %vm157, %v1833, 0
    %1964 = vmatprep.subr.mxu0 0.0
    %1965 = vmatpush1.xpose.msra.mxu0 0.0
    %1966 = vmatprep.subr.mxu0 0.0
    %1967 = vmatpush1.xpose.msra.mxu0 0.0
    %1968 = vmatprep.subr.mxu0 0.0
    %1969 = vmatpush1.xpose.msra.mxu0 0.0
    %1970 = vmatprep.subr.mxu0 0.0
    %1971 = vmatpush1.xpose.msra.mxu0 0.0
    %1972 = vmatprep.subr.mxu0 0.0
    %1973 = vmatpush1.xpose.msra.mxu0 0.0
    %1974 = vmatprep.subr.mxu0 0.0
    %1975 = vmatpush1.xpose.msra.mxu0 0.0
    %1976 = vmatprep.subr.mxu0 0.0
    %1977 = vmatpush1.xpose.msra.mxu0 0.0
    %1978 = vmatprep.subr.mxu0 0.0
    %1979 = vmatpush1.xpose.msra.mxu0 0.0
    %1980 = vmatprep.subr.mxu0 0.0
    %1981 = vmatpush1.xpose.msra.mxu0 0.0
    %1982 = vmatprep.subr.mxu0 0.0
    %1983 = vmatpush1.xpose.msra.mxu0 0.0
    %1984 = vmatprep.subr.mxu0 0.0
    %1985 = vmatpush1.xpose.msra.mxu0 0.0
    %1986 = vmatprep.subr.mxu0 0.0
    %1987 = vmatpush1.xpose.msra.mxu0 0.0
    %1988 = vmatprep.subr.mxu0 0.0
    %1989 = vmatpush1.xpose.msra.mxu0 0.0
    %1990 = vmatprep.subr.mxu0 0.0
    %1991 = vmatpush1.xpose.msra.mxu0 0.0
    %1992 = vmatprep.subr.mxu0 0.0
    %1993 = vmatpush1.xpose.msra.mxu0 %v1962
    %1994 = vmatprep.subr.mxu0 0.0
    %1995 = vmatpush1.xpose.msra.mxu0 %v1960
    %1996 = vmatprep.subr.mxu0 0.0
    %1997 = vmatpush2.xpose.msra.mxu0 0.0
    %1998 = vmatprep.subr.mxu0 0.0
    %1999 = vmatpush2.xpose.msra.mxu0 0.0
    %2000 = vmatprep.subr.mxu0 0.0
    %2001 = vmatpush2.xpose.msra.mxu0 0.0
    %2002 = vmatprep.subr.mxu0 0.0
    %2003 = vmatpush2.xpose.msra.mxu0 0.0
    %2004 = vmatprep.subr.mxu0 0.0
    %2005 = vmatpush2.xpose.msra.mxu0 0.0
    %2006 = vmatprep.subr.mxu0 0.0
    %2007 = vmatpush2.xpose.msra.mxu0 0.0
    %2008 = vmatprep.subr.mxu0 0.0
    %2009 = vmatpush2.xpose.msra.mxu0 0.0
    %2010 = vmatprep.subr.mxu0 0.0
    %2011 = vmatpush2.xpose.msra.mxu0 0.0
    %2012 = vmatprep.subr.mxu0 0.0
    %2013 = vmatpush2.xpose.msra.mxu0 0.0
    %2014 = vmatprep.subr.mxu0 0.0
    %2015 = vmatpush2.xpose.msra.mxu0 0.0
    %2016 = vmatprep.subr.mxu0 0.0
    %2017 = vmatpush2.xpose.msra.mxu0 0.0
    %2018 = vmatprep.subr.mxu0 0.0
    %2019 = vmatpush2.xpose.msra.mxu0 0.0
    %2020 = vmatprep.subr.mxu0 0.0
    %2021 = vmatpush2.xpose.msra.mxu0 0.0
    %2022 = vmatprep.subr.mxu0 0.0
    %2023 = vmatpush2.xpose.msra.mxu0 0.0
    %2024 = vmatprep.subr.mxu0 0.0
    %2025 = vmatpush2.xpose.msra.mxu0 0.0
    %2026 = vmatprep.subr.mxu0 0.0
    %2027 = vmatpush2.xpose.msra.mxu0 0.0
    %2028 = vmatprep.mubr.f32.mxu0 0.0
    %2029 = vmatmul.mubr.f32.gmra.mxu0 %v1958
    %v2030 = vpop.f32.mrf.mxu0
    %v2031 = vadd.f32 %v1880, %v2030
    %v2032 = vpop.f32.mrf.mxu0
    %2033 = vdwg.mxu0
    %v2034 = vsel %vm157, %v1839, 0
    %v2036 = vsel %vm157, %v1855, 0
    %v2038 = vsel %vm157, %v1857, 0
    %2040 = vmatprep.subr.mxu0 0.0
    %2041 = vmatpush1.xpose.msra.mxu0 0.0
    %2042 = vmatprep.subr.mxu0 0.0
    %2043 = vmatpush1.xpose.msra.mxu0 0.0
    %2044 = vmatprep.subr.mxu0 0.0
    %2045 = vmatpush1.xpose.msra.mxu0 0.0
    %2046 = vmatprep.subr.mxu0 0.0
    %2047 = vmatpush1.xpose.msra.mxu0 0.0
    %2048 = vmatprep.subr.mxu0 0.0
    %2049 = vmatpush1.xpose.msra.mxu0 0.0
    %2050 = vmatprep.subr.mxu0 0.0
    %2051 = vmatpush1.xpose.msra.mxu0 0.0
    %2052 = vmatprep.subr.mxu0 0.0
    %2053 = vmatpush1.xpose.msra.mxu0 0.0
    %2054 = vmatprep.subr.mxu0 0.0
    %2055 = vmatpush1.xpose.msra.mxu0 0.0
    %2056 = vmatprep.subr.mxu0 0.0
    %2057 = vmatpush1.xpose.msra.mxu0 0.0
    %2058 = vmatprep.subr.mxu0 0.0
    %2059 = vmatpush1.xpose.msra.mxu0 0.0
    %2060 = vmatprep.subr.mxu0 0.0
    %2061 = vmatpush1.xpose.msra.mxu0 0.0
    %2062 = vmatprep.subr.mxu0 0.0
    %2063 = vmatpush1.xpose.msra.mxu0 0.0
    %2064 = vmatprep.subr.mxu0 0.0
    %2065 = vmatpush1.xpose.msra.mxu0 0.0
    %2066 = vmatprep.subr.mxu0 0.0
    %2067 = vmatpush1.xpose.msra.mxu0 0.0
    %2068 = vmatprep.subr.mxu0 0.0
    %2069 = vmatpush1.xpose.msra.mxu0 %v2038
    %2070 = vmatprep.subr.mxu0 0.0
    %2071 = vmatpush1.xpose.msra.mxu0 %v2036
    %2072 = vmatprep.subr.mxu0 0.0
    %2073 = vmatpush2.xpose.msra.mxu0 0.0
    %2074 = vmatprep.subr.mxu0 0.0
    %2075 = vmatpush2.xpose.msra.mxu0 0.0
    %2076 = vmatprep.subr.mxu0 0.0
    %2077 = vmatpush2.xpose.msra.mxu0 0.0
    %2078 = vmatprep.subr.mxu0 0.0
    %2079 = vmatpush2.xpose.msra.mxu0 0.0
    %2080 = vmatprep.subr.mxu0 0.0
    %2081 = vmatpush2.xpose.msra.mxu0 0.0
    %2082 = vmatprep.subr.mxu0 0.0
    %2083 = vmatpush2.xpose.msra.mxu0 0.0
    %2084 = vmatprep.subr.mxu0 0.0
    %2085 = vmatpush2.xpose.msra.mxu0 0.0
    %2086 = vmatprep.subr.mxu0 0.0
    %2087 = vmatpush2.xpose.msra.mxu0 0.0
    %2088 = vmatprep.subr.mxu0 0.0
    %2089 = vmatpush2.xpose.msra.mxu0 0.0
    %2090 = vmatprep.subr.mxu0 0.0
    %2091 = vmatpush2.xpose.msra.mxu0 0.0
    %2092 = vmatprep.subr.mxu0 0.0
    %2093 = vmatpush2.xpose.msra.mxu0 0.0
    %2094 = vmatprep.subr.mxu0 0.0
    %2095 = vmatpush2.xpose.msra.mxu0 0.0
    %2096 = vmatprep.subr.mxu0 0.0
    %2097 = vmatpush2.xpose.msra.mxu0 0.0
    %2098 = vmatprep.subr.mxu0 0.0
    %2099 = vmatpush2.xpose.msra.mxu0 0.0
    %2100 = vmatprep.subr.mxu0 0.0
    %2101 = vmatpush2.xpose.msra.mxu0 0.0
    %2102 = vmatprep.subr.mxu0 0.0
    %2103 = vmatpush2.xpose.msra.mxu0 0.0
    %2104 = vmatprep.mubr.f32.mxu0 0.0
    %2105 = vmatmul.mubr.f32.gmra.mxu0 %v2034
    %v2106 = vpop.f32.mrf.mxu0
    %v2107 = vadd.f32 %v1880, %v2106
    %v2108 = vpop.f32.mrf.mxu0
    %2109 = vdwg.mxu0
    %v2110 = vsel %vm157, %v1841, 0
    %v2112 = vsel %vm157, %v1859, 0
    %v2114 = vsel %vm157, %v1861, 0
    %2116 = vmatprep.subr.mxu0 0.0
    %2117 = vmatpush1.xpose.msra.mxu0 0.0
    %2118 = vmatprep.subr.mxu0 0.0
    %2119 = vmatpush1.xpose.msra.mxu0 0.0
    %2120 = vmatprep.subr.mxu0 0.0
    %2121 = vmatpush1.xpose.msra.mxu0 0.0
    %2122 = vmatprep.subr.mxu0 0.0
    %2123 = vmatpush1.xpose.msra.mxu0 0.0
    %2124 = vmatprep.subr.mxu0 0.0
    %2125 = vmatpush1.xpose.msra.mxu0 0.0
    %2126 = vmatprep.subr.mxu0 0.0
    %2127 = vmatpush1.xpose.msra.mxu0 0.0
    %2128 = vmatprep.subr.mxu0 0.0
    %2129 = vmatpush1.xpose.msra.mxu0 0.0
    %2130 = vmatprep.subr.mxu0 0.0
    %2131 = vmatpush1.xpose.msra.mxu0 0.0
    %2132 = vmatprep.subr.mxu0 0.0
    %2133 = vmatpush1.xpose.msra.mxu0 0.0
    %2134 = vmatprep.subr.mxu0 0.0
    %2135 = vmatpush1.xpose.msra.mxu0 0.0
    %2136 = vmatprep.subr.mxu0 0.0
    %2137 = vmatpush1.xpose.msra.mxu0 0.0
    %2138 = vmatprep.subr.mxu0 0.0
    %2139 = vmatpush1.xpose.msra.mxu0 0.0
    %2140 = vmatprep.subr.mxu0 0.0
    %2141 = vmatpush1.xpose.msra.mxu0 0.0
    %2142 = vmatprep.subr.mxu0 0.0
    %2143 = vmatpush1.xpose.msra.mxu0 0.0
    %2144 = vmatprep.subr.mxu0 0.0
    %2145 = vmatpush1.xpose.msra.mxu0 %v2114
    %2146 = vmatprep.subr.mxu0 0.0
    %2147 = vmatpush1.xpose.msra.mxu0 %v2112
    %2148 = vmatprep.subr.mxu0 0.0
    %2149 = vmatpush2.xpose.msra.mxu0 0.0
    %2150 = vmatprep.subr.mxu0 0.0
    %2151 = vmatpush2.xpose.msra.mxu0 0.0
    %2152 = vmatprep.subr.mxu0 0.0
    %2153 = vmatpush2.xpose.msra.mxu0 0.0
    %2154 = vmatprep.subr.mxu0 0.0
    %2155 = vmatpush2.xpose.msra.mxu0 0.0
    %2156 = vmatprep.subr.mxu0 0.0
    %2157 = vmatpush2.xpose.msra.mxu0 0.0
    %2158 = vmatprep.subr.mxu0 0.0
    %2159 = vmatpush2.xpose.msra.mxu0 0.0
    %2160 = vmatprep.subr.mxu0 0.0
    %2161 = vmatpush2.xpose.msra.mxu0 0.0
    %2162 = vmatprep.subr.mxu0 0.0
    %2163 = vmatpush2.xpose.msra.mxu0 0.0
    %2164 = vmatprep.subr.mxu0 0.0
    %2165 = vmatpush2.xpose.msra.mxu0 0.0
    %2166 = vmatprep.subr.mxu0 0.0
    %2167 = vmatpush2.xpose.msra.mxu0 0.0
    %2168 = vmatprep.subr.mxu0 0.0
    %2169 = vmatpush2.xpose.msra.mxu0 0.0
    %2170 = vmatprep.subr.mxu0 0.0
    %2171 = vmatpush2.xpose.msra.mxu0 0.0
    %2172 = vmatprep.subr.mxu0 0.0
    %2173 = vmatpush2.xpose.msra.mxu0 0.0
    %2174 = vmatprep.subr.mxu0 0.0
    %2175 = vmatpush2.xpose.msra.mxu0 0.0
    %2176 = vmatprep.subr.mxu0 0.0
    %2177 = vmatpush2.xpose.msra.mxu0 0.0
    %2178 = vmatprep.subr.mxu0 0.0
    %2179 = vmatpush2.xpose.msra.mxu0 0.0
    %2180 = vmatprep.mubr.f32.mxu0 0.0
    %2181 = vmatmul.mubr.f32.gmra.mxu0 %v2110
    %v2182 = vpop.f32.mrf.mxu0
    %v2183 = vadd.f32 %v1880, %v2182
    %v2184 = vpop.f32.mrf.mxu0
    %2185 = vdwg.mxu0
    %v2186 = vsel %vm157, %v1843, 0
    %v2188 = vsel %vm157, %v1863, 0
    %v2190 = vsel %vm157, %v1865, 0
    %2192 = vmatprep.subr.mxu0 0.0
    %2193 = vmatpush1.xpose.msra.mxu0 0.0
    %2194 = vmatprep.subr.mxu0 0.0
    %2195 = vmatpush1.xpose.msra.mxu0 0.0
    %2196 = vmatprep.subr.mxu0 0.0
    %2197 = vmatpush1.xpose.msra.mxu0 0.0
    %2198 = vmatprep.subr.mxu0 0.0
    %2199 = vmatpush1.xpose.msra.mxu0 0.0
    %2200 = vmatprep.subr.mxu0 0.0
    %2201 = vmatpush1.xpose.msra.mxu0 0.0
    %2202 = vmatprep.subr.mxu0 0.0
    %2203 = vmatpush1.xpose.msra.mxu0 0.0
    %2204 = vmatprep.subr.mxu0 0.0
    %2205 = vmatpush1.xpose.msra.mxu0 0.0
    %2206 = vmatprep.subr.mxu0 0.0
    %2207 = vmatpush1.xpose.msra.mxu0 0.0
    %2208 = vmatprep.subr.mxu0 0.0
    %2209 = vmatpush1.xpose.msra.mxu0 0.0
    %2210 = vmatprep.subr.mxu0 0.0
    %2211 = vmatpush1.xpose.msra.mxu0 0.0
    %2212 = vmatprep.subr.mxu0 0.0
    %2213 = vmatpush1.xpose.msra.mxu0 0.0
    %2214 = vmatprep.subr.mxu0 0.0
    %2215 = vmatpush1.xpose.msra.mxu0 0.0
    %2216 = vmatprep.subr.mxu0 0.0
    %2217 = vmatpush1.xpose.msra.mxu0 0.0
    %2218 = vmatprep.subr.mxu0 0.0
    %2219 = vmatpush1.xpose.msra.mxu0 0.0
    %2220 = vmatprep.subr.mxu0 0.0
    %2221 = vmatpush1.xpose.msra.mxu0 %v2190
    %2222 = vmatprep.subr.mxu0 0.0
    %2223 = vmatpush1.xpose.msra.mxu0 %v2188
    %2224 = vmatprep.subr.mxu0 0.0
    %2225 = vmatpush2.xpose.msra.mxu0 0.0
    %2226 = vmatprep.subr.mxu0 0.0
    %2227 = vmatpush2.xpose.msra.mxu0 0.0
    %2228 = vmatprep.subr.mxu0 0.0
    %2229 = vmatpush2.xpose.msra.mxu0 0.0
    %2230 = vmatprep.subr.mxu0 0.0
    %2231 = vmatpush2.xpose.msra.mxu0 0.0
    %2232 = vmatprep.subr.mxu0 0.0
    %2233 = vmatpush2.xpose.msra.mxu0 0.0
    %2234 = vmatprep.subr.mxu0 0.0
    %2235 = vmatpush2.xpose.msra.mxu0 0.0
    %2236 = vmatprep.subr.mxu0 0.0
    %2237 = vmatpush2.xpose.msra.mxu0 0.0
    %2238 = vmatprep.subr.mxu0 0.0
    %2239 = vmatpush2.xpose.msra.mxu0 0.0
    %2240 = vmatprep.subr.mxu0 0.0
    %2241 = vmatpush2.xpose.msra.mxu0 0.0
    %2242 = vmatprep.subr.mxu0 0.0
    %2243 = vmatpush2.xpose.msra.mxu0 0.0
    %2244 = vmatprep.subr.mxu0 0.0
    %2245 = vmatpush2.xpose.msra.mxu0 0.0
    %2246 = vmatprep.subr.mxu0 0.0
    %2247 = vmatpush2.xpose.msra.mxu0 0.0
    %2248 = vmatprep.subr.mxu0 0.0
    %2249 = vmatpush2.xpose.msra.mxu0 0.0
    %2250 = vmatprep.subr.mxu0 0.0
    %2251 = vmatpush2.xpose.msra.mxu0 0.0
    %2252 = vmatprep.subr.mxu0 0.0
    %2253 = vmatpush2.xpose.msra.mxu0 0.0
    %2254 = vmatprep.subr.mxu0 0.0
    %2255 = vmatpush2.xpose.msra.mxu0 0.0
    %2256 = vmatprep.mubr.f32.mxu0 0.0
    %2257 = vmatmul.mubr.f32.gmra.mxu0 %v2186
    %v2258 = vpop.f32.mrf.mxu0
    %v2259 = vadd.f32 %v1880, %v2258
    %v2260 = vpop.f32.mrf.mxu0
    %2261 = vdwg.mxu0
    %v2262 = vsel %vm157, %v1845, 0
    %v2264 = vsel %vm157, %v1867, 0
    %v2266 = vsel %vm157, %v1869, 0
    %2268 = vmatprep.subr.mxu0 0.0
    %2269 = vmatpush1.xpose.msra.mxu0 0.0
    %2270 = vmatprep.subr.mxu0 0.0
    %2271 = vmatpush1.xpose.msra.mxu0 0.0
    %2272 = vmatprep.subr.mxu0 0.0
    %2273 = vmatpush1.xpose.msra.mxu0 0.0
    %2274 = vmatprep.subr.mxu0 0.0
    %2275 = vmatpush1.xpose.msra.mxu0 0.0
    %2276 = vmatprep.subr.mxu0 0.0
    %2277 = vmatpush1.xpose.msra.mxu0 0.0
    %2278 = vmatprep.subr.mxu0 0.0
    %2279 = vmatpush1.xpose.msra.mxu0 0.0
    %2280 = vmatprep.subr.mxu0 0.0
    %2281 = vmatpush1.xpose.msra.mxu0 0.0
    %2282 = vmatprep.subr.mxu0 0.0
    %2283 = vmatpush1.xpose.msra.mxu0 0.0
    %2284 = vmatprep.subr.mxu0 0.0
    %2285 = vmatpush1.xpose.msra.mxu0 0.0
    %2286 = vmatprep.subr.mxu0 0.0
    %2287 = vmatpush1.xpose.msra.mxu0 0.0
    %2288 = vmatprep.subr.mxu0 0.0
    %2289 = vmatpush1.xpose.msra.mxu0 0.0
    %2290 = vmatprep.subr.mxu0 0.0
    %2291 = vmatpush1.xpose.msra.mxu0 0.0
    %2292 = vmatprep.subr.mxu0 0.0
    %2293 = vmatpush1.xpose.msra.mxu0 0.0
    %2294 = vmatprep.subr.mxu0 0.0
    %2295 = vmatpush1.xpose.msra.mxu0 0.0
    %2296 = vmatprep.subr.mxu0 0.0
    %2297 = vmatpush1.xpose.msra.mxu0 %v2266
    %2298 = vmatprep.subr.mxu0 0.0
    %2299 = vmatpush1.xpose.msra.mxu0 %v2264
    %2300 = vmatprep.subr.mxu0 0.0
    %2301 = vmatpush2.xpose.msra.mxu0 0.0
    %2302 = vmatprep.subr.mxu0 0.0
    %2303 = vmatpush2.xpose.msra.mxu0 0.0
    %2304 = vmatprep.subr.mxu0 0.0
    %2305 = vmatpush2.xpose.msra.mxu0 0.0
    %2306 = vmatprep.subr.mxu0 0.0
    %2307 = vmatpush2.xpose.msra.mxu0 0.0
    %2308 = vmatprep.subr.mxu0 0.0
    %2309 = vmatpush2.xpose.msra.mxu0 0.0
    %2310 = vmatprep.subr.mxu0 0.0
    %2311 = vmatpush2.xpose.msra.mxu0 0.0
    %2312 = vmatprep.subr.mxu0 0.0
    %2313 = vmatpush2.xpose.msra.mxu0 0.0
    %2314 = vmatprep.subr.mxu0 0.0
    %2315 = vmatpush2.xpose.msra.mxu0 0.0
    %2316 = vmatprep.subr.mxu0 0.0
    %2317 = vmatpush2.xpose.msra.mxu0 0.0
    %2318 = vmatprep.subr.mxu0 0.0
    %2319 = vmatpush2.xpose.msra.mxu0 0.0
    %2320 = vmatprep.subr.mxu0 0.0
    %2321 = vmatpush2.xpose.msra.mxu0 0.0
    %2322 = vmatprep.subr.mxu0 0.0
    %2323 = vmatpush2.xpose.msra.mxu0 0.0
    %2324 = vmatprep.subr.mxu0 0.0
    %2325 = vmatpush2.xpose.msra.mxu0 0.0
    %2326 = vmatprep.subr.mxu0 0.0
    %2327 = vmatpush2.xpose.msra.mxu0 0.0
    %2328 = vmatprep.subr.mxu0 0.0
    %2329 = vmatpush2.xpose.msra.mxu0 0.0
    %2330 = vmatprep.subr.mxu0 0.0
    %2331 = vmatpush2.xpose.msra.mxu0 0.0
    %2332 = vmatprep.mubr.f32.mxu0 0.0
    %2333 = vmatmul.mubr.f32.gmra.mxu0 %v2262
    %v2334 = vpop.f32.mrf.mxu0
    %v2335 = vadd.f32 %v1880, %v2334
    %v2336 = vpop.f32.mrf.mxu0
    %2337 = vdwg.mxu0
    %v2338 = vsel %vm157, %v1847, 0
    %v2340 = vsel %vm157, %v1871, 0
    %v2342 = vsel %vm157, %v1873, 0
    %2344 = vmatprep.subr.mxu0 0.0
    %2345 = vmatpush1.xpose.msra.mxu0 0.0
    %2346 = vmatprep.subr.mxu0 0.0
    %2347 = vmatpush1.xpose.msra.mxu0 0.0
    %2348 = vmatprep.subr.mxu0 0.0
    %2349 = vmatpush1.xpose.msra.mxu0 0.0
    %2350 = vmatprep.subr.mxu0 0.0
    %2351 = vmatpush1.xpose.msra.mxu0 0.0
    %2352 = vmatprep.subr.mxu0 0.0
    %2353 = vmatpush1.xpose.msra.mxu0 0.0
    %2354 = vmatprep.subr.mxu0 0.0
    %2355 = vmatpush1.xpose.msra.mxu0 0.0
    %2356 = vmatprep.subr.mxu0 0.0
    %2357 = vmatpush1.xpose.msra.mxu0 0.0
    %2358 = vmatprep.subr.mxu0 0.0
    %2359 = vmatpush1.xpose.msra.mxu0 0.0
    %2360 = vmatprep.subr.mxu0 0.0
    %2361 = vmatpush1.xpose.msra.mxu0 0.0
    %2362 = vmatprep.subr.mxu0 0.0
    %2363 = vmatpush1.xpose.msra.mxu0 0.0
    %2364 = vmatprep.subr.mxu0 0.0
    %2365 = vmatpush1.xpose.msra.mxu0 0.0
    %2366 = vmatprep.subr.mxu0 0.0
    %2367 = vmatpush1.xpose.msra.mxu0 0.0
    %2368 = vmatprep.subr.mxu0 0.0
    %2369 = vmatpush1.xpose.msra.mxu0 0.0
    %2370 = vmatprep.subr.mxu0 0.0
    %2371 = vmatpush1.xpose.msra.mxu0 0.0
    %2372 = vmatprep.subr.mxu0 0.0
    %2373 = vmatpush1.xpose.msra.mxu0 %v2342
    %2374 = vmatprep.subr.mxu0 0.0
    %2375 = vmatpush1.xpose.msra.mxu0 %v2340
    %2376 = vmatprep.subr.mxu0 0.0
    %2377 = vmatpush2.xpose.msra.mxu0 0.0
    %2378 = vmatprep.subr.mxu0 0.0
    %2379 = vmatpush2.xpose.msra.mxu0 0.0
    %2380 = vmatprep.subr.mxu0 0.0
    %2381 = vmatpush2.xpose.msra.mxu0 0.0
    %2382 = vmatprep.subr.mxu0 0.0
    %2383 = vmatpush2.xpose.msra.mxu0 0.0
    %2384 = vmatprep.subr.mxu0 0.0
    %2385 = vmatpush2.xpose.msra.mxu0 0.0
    %2386 = vmatprep.subr.mxu0 0.0
    %2387 = vmatpush2.xpose.msra.mxu0 0.0
    %2388 = vmatprep.subr.mxu0 0.0
    %2389 = vmatpush2.xpose.msra.mxu0 0.0
    %2390 = vmatprep.subr.mxu0 0.0
    %2391 = vmatpush2.xpose.msra.mxu0 0.0
    %2392 = vmatprep.subr.mxu0 0.0
    %2393 = vmatpush2.xpose.msra.mxu0 0.0
    %2394 = vmatprep.subr.mxu0 0.0
    %2395 = vmatpush2.xpose.msra.mxu0 0.0
    %2396 = vmatprep.subr.mxu0 0.0
    %2397 = vmatpush2.xpose.msra.mxu0 0.0
    %2398 = vmatprep.subr.mxu0 0.0
    %2399 = vmatpush2.xpose.msra.mxu0 0.0
    %2400 = vmatprep.subr.mxu0 0.0
    %2401 = vmatpush2.xpose.msra.mxu0 0.0
    %2402 = vmatprep.subr.mxu0 0.0
    %2403 = vmatpush2.xpose.msra.mxu0 0.0
    %2404 = vmatprep.subr.mxu0 0.0
    %2405 = vmatpush2.xpose.msra.mxu0 0.0
    %2406 = vmatprep.subr.mxu0 0.0
    %2407 = vmatpush2.xpose.msra.mxu0 0.0
    %2408 = vmatprep.mubr.f32.mxu0 0.0
    %2409 = vmatmul.mubr.f32.gmra.mxu0 %v2338
    %v2410 = vpop.f32.mrf.mxu0
    %v2411 = vadd.f32 %v1880, %v2410
    %v2412 = vpop.f32.mrf.mxu0
    %2413 = vdwg.mxu0
    %v2414 = vsel %vm157, %v1849, 0
    %v2416 = vsel %vm157, %v1875, 0
    %v2418 = vsel %vm157, %v1877, 0
    %2420 = vmatprep.subr.mxu0 0.0
    %2421 = vmatpush1.xpose.msra.mxu0 0.0
    %2422 = vmatprep.subr.mxu0 0.0
    %2423 = vmatpush1.xpose.msra.mxu0 0.0
    %2424 = vmatprep.subr.mxu0 0.0
    %2425 = vmatpush1.xpose.msra.mxu0 0.0
    %2426 = vmatprep.subr.mxu0 0.0
    %2427 = vmatpush1.xpose.msra.mxu0 0.0
    %2428 = vmatprep.subr.mxu0 0.0
    %2429 = vmatpush1.xpose.msra.mxu0 0.0
    %2430 = vmatprep.subr.mxu0 0.0
    %2431 = vmatpush1.xpose.msra.mxu0 0.0
    %2432 = vmatprep.subr.mxu0 0.0
    %2433 = vmatpush1.xpose.msra.mxu0 0.0
    %2434 = vmatprep.subr.mxu0 0.0
    %2435 = vmatpush1.xpose.msra.mxu0 0.0
    %2436 = vmatprep.subr.mxu0 0.0
    %2437 = vmatpush1.xpose.msra.mxu0 0.0
    %2438 = vmatprep.subr.mxu0 0.0
    %2439 = vmatpush1.xpose.msra.mxu0 0.0
    %2440 = vmatprep.subr.mxu0 0.0
    %2441 = vmatpush1.xpose.msra.mxu0 0.0
    %2442 = vmatprep.subr.mxu0 0.0
    %2443 = vmatpush1.xpose.msra.mxu0 0.0
    %2444 = vmatprep.subr.mxu0 0.0
    %2445 = vmatpush1.xpose.msra.mxu0 0.0
    %2446 = vmatprep.subr.mxu0 0.0
    %2447 = vmatpush1.xpose.msra.mxu0 0.0
    %2448 = vmatprep.subr.mxu0 0.0
    %2449 = vmatpush1.xpose.msra.mxu0 %v2418
    %2450 = vmatprep.subr.mxu0 0.0
    %2451 = vmatpush1.xpose.msra.mxu0 %v2416
    %2452 = vmatprep.subr.mxu0 0.0
    %2453 = vmatpush2.xpose.msra.mxu0 0.0
    %2454 = vmatprep.subr.mxu0 0.0
    %2455 = vmatpush2.xpose.msra.mxu0 0.0
    %2456 = vmatprep.subr.mxu0 0.0
    %2457 = vmatpush2.xpose.msra.mxu0 0.0
    %2458 = vmatprep.subr.mxu0 0.0
    %2459 = vmatpush2.xpose.msra.mxu0 0.0
    %2460 = vmatprep.subr.mxu0 0.0
    %2461 = vmatpush2.xpose.msra.mxu0 0.0
    %2462 = vmatprep.subr.mxu0 0.0
    %2463 = vmatpush2.xpose.msra.mxu0 0.0
    %2464 = vmatprep.subr.mxu0 0.0
    %2465 = vmatpush2.xpose.msra.mxu0 0.0
    %2466 = vmatprep.subr.mxu0 0.0
    %2467 = vmatpush2.xpose.msra.mxu0 0.0
    %2468 = vmatprep.subr.mxu0 0.0
    %2469 = vmatpush2.xpose.msra.mxu0 0.0
    %2470 = vmatprep.subr.mxu0 0.0
    %2471 = vmatpush2.xpose.msra.mxu0 0.0
    %2472 = vmatprep.subr.mxu0 0.0
    %2473 = vmatpush2.xpose.msra.mxu0 0.0
    %2474 = vmatprep.subr.mxu0 0.0
    %2475 = vmatpush2.xpose.msra.mxu0 0.0
    %2476 = vmatprep.subr.mxu0 0.0
    %2477 = vmatpush2.xpose.msra.mxu0 0.0
    %2478 = vmatprep.subr.mxu0 0.0
    %2479 = vmatpush2.xpose.msra.mxu0 0.0
    %2480 = vmatprep.subr.mxu0 0.0
    %2481 = vmatpush2.xpose.msra.mxu0 0.0
    %2482 = vmatprep.subr.mxu0 0.0
    %2483 = vmatpush2.xpose.msra.mxu0 0.0
    %2484 = vmatprep.mubr.f32.mxu0 0.0
    %2485 = vmatmul.mubr.f32.gmra.mxu0 %v2414
    %v2486 = vpop.f32.mrf.mxu0
    %v2487 = vadd.f32 %v1880, %v2486
    %v2488 = vpop.f32.mrf.mxu0
    %2489 = vdwg.mxu0
    %v2490 = vsel %vm1486, %v1955, -inf
    %2491 = vmax.xlane.f32.xlu0 %v2490
    %v2492 = vpop.xlane.xlu0 %2491
    %v2493 = vsel %vm1486, %v2031, -inf
    %2494 = vmax.xlane.f32.xlu0 %v2493
    %v2495 = vpop.xlane.xlu0 %2494
    %v2496 = vsel %vm1486, %v2107, -inf
    %2497 = vmax.xlane.f32.xlu0 %v2496
    %v2498 = vpop.xlane.xlu0 %2497
    %v2499 = vsel %vm1486, %v2183, -inf
    %2500 = vmax.xlane.f32.xlu0 %v2499
    %v2501 = vpop.xlane.xlu0 %2500
    %v2502 = vsel %vm1486, %v2259, -inf
    %2503 = vmax.xlane.f32.xlu0 %v2502
    %v2504 = vpop.xlane.xlu0 %2503
    %v2505 = vsel %vm1486, %v2335, -inf
    %2506 = vmax.xlane.f32.xlu0 %v2505
    %v2507 = vpop.xlane.xlu0 %2506
    %v2508 = vsel %vm1486, %v2411, -inf
    %2509 = vmax.xlane.f32.xlu0 %v2508
    %v2510 = vpop.xlane.xlu0 %2509
    %v2511 = vsel %vm1486, %v2487, -inf
    %2512 = vmax.xlane.f32.xlu0 %v2511
    %v2513 = vpop.xlane.xlu0 %2512
    %v2514 = vsub.f32 %v1955, %v2492
    %v2515 = vsub.f32 %v2031, %v2495
    %v2516 = vsub.f32 %v2107, %v2498
    %v2517 = vsub.f32 %v2183, %v2501
    %v2518 = vsub.f32 %v2259, %v2504
    %v2519 = vsub.f32 %v2335, %v2507
    %v2520 = vsub.f32 %v2411, %v2510
    %v2521 = vsub.f32 %v2487, %v2513
    %v2522 = vmul.f32 %v2514, 1.442695
    %v2523 = vpow.pop %v2522
    %v2524 = vmul.f32 %v2515, 1.442695
    %v2525 = vpow.pop %v2524
    %v2526 = vmul.f32 %v2516, 1.442695
    %v2527 = vpow.pop %v2526
    %v2528 = vmul.f32 %v2517, 1.442695
    %v2529 = vpow.pop %v2528
    %v2530 = vmul.f32 %v2518, 1.442695
    %v2531 = vpow.pop %v2530
    %v2532 = vmul.f32 %v2519, 1.442695
    %v2533 = vpow.pop %v2532
    %v2534 = vmul.f32 %v2520, 1.442695
    %v2535 = vpow.pop %v2534
    %v2536 = vmul.f32 %v2521, 1.442695
    %v2537 = vpow.pop %v2536
    %v2538 = vsel %vm1486, %v2523, 0.0
    %2539 = vadd.xlane.f32.xlu0 %v2538
    %v2540 = vpop.xlane.xlu0 %2539
    %v2541 = vsel %vm1486, %v2525, 0.0
    %2542 = vadd.xlane.f32.xlu0 %v2541
    %v2543 = vpop.xlane.xlu0 %2542
    %v2544 = vsel %vm1486, %v2527, 0.0
    %2545 = vadd.xlane.f32.xlu0 %v2544
    %v2546 = vpop.xlane.xlu0 %2545
    %v2547 = vsel %vm1486, %v2529, 0.0
    %2548 = vadd.xlane.f32.xlu0 %v2547
    %v2549 = vpop.xlane.xlu0 %2548
    %v2550 = vsel %vm1486, %v2531, 0.0
    %2551 = vadd.xlane.f32.xlu0 %v2550
    %v2552 = vpop.xlane.xlu0 %2551
    %v2553 = vsel %vm1486, %v2533, 0.0
    %2554 = vadd.xlane.f32.xlu0 %v2553
    %v2555 = vpop.xlane.xlu0 %2554
    %v2556 = vsel %vm1486, %v2535, 0.0
    %2557 = vadd.xlane.f32.xlu0 %v2556
    %v2558 = vpop.xlane.xlu0 %2557
    %v2559 = vsel %vm1486, %v2537, 0.0
    %2560 = vadd.xlane.f32.xlu0 %v2559
    %v2561 = vpop.xlane.xlu0 %2560
    %v2562 = vrcp.pop %v2540
    %v2563 = vrcp.pop %v2543
    %v2564 = vrcp.pop %v2546
    %v2565 = vrcp.pop %v2549
    %v2566 = vrcp.pop %v2552
    %v2567 = vrcp.pop %v2555
    %v2568 = vrcp.pop %v2558
    %v2569 = vrcp.pop %v2561
    %v2570 = vmul.f32 %v2523, %v2562
    %v2571 = vmul.f32 %v2525, %v2563
    %v2572 = vmul.f32 %v2527, %v2564
    %v2573 = vmul.f32 %v2529, %v2565
    %v2574 = vmul.f32 %v2531, %v2566
    %v2575 = vmul.f32 %v2533, %v2567
    %v2576 = vmul.f32 %v2535, %v2568
    %v2577 = vmul.f32 %v2537, %v2569
    %2578 = vrot.lane.b32.xlu0 %v1818, 96
    %v2579 = vpop.permute.xlu0 %2578
    %2580 = vrot.lane.b32.xlu0 %v1823, 96
    %v2581 = vpop.permute.xlu0 %2580
    %v2585 = vsel %vm1486, %v2570, 0
    %2587 = vmatprep.subr.mxu0 0.0
    %2588 = vmatpush1.msra.mxu0 0.0
    %2589 = vmatprep.subr.mxu0 0.0
    %2590 = vmatpush1.msra.mxu0 0.0
    %2591 = vmatprep.subr.mxu0 0.0
    %2592 = vmatpush1.msra.mxu0 0.0
    %2593 = vmatprep.subr.mxu0 0.0
    %2594 = vmatpush1.msra.mxu0 0.0
    %2595 = vmatprep.subr.mxu0 0.0
    %2596 = vmatpush1.msra.mxu0 0.0
    %2597 = vmatprep.subr.mxu0 0.0
    %2598 = vmatpush1.msra.mxu0 0.0
    %2599 = vmatprep.subr.mxu0 0.0
    %2600 = vmatpush1.msra.mxu0 0.0
    %2601 = vmatprep.subr.mxu0 0.0
    %2602 = vmatpush1.msra.mxu0 0.0
    %2603 = vmatprep.subr.mxu0 0.0
    %2604 = vmatpush1.msra.mxu0 0.0
    %2605 = vmatprep.subr.mxu0 0.0
    %2606 = vmatpush1.msra.mxu0 0.0
    %2607 = vmatprep.subr.mxu0 0.0
    %2608 = vmatpush1.msra.mxu0 0.0
    %2609 = vmatprep.subr.mxu0 0.0
    %2610 = vmatpush1.msra.mxu0 0.0
    %2611 = vmatprep.subr.mxu0 0.0
    %2612 = vmatpush1.msra.mxu0 0.0
    %2613 = vmatprep.subr.mxu0 0.0
    %2614 = vmatpush1.msra.mxu0 0.0
    %2615 = vmatprep.subr.mxu0 0.0
    %2616 = vmatpush1.msra.mxu0 %v2581
    %2617 = vmatprep.subr.mxu0 0.0
    %2618 = vmatpush1.msra.mxu0 %v2579
    %2619 = vmatprep.subr.mxu0 0.0
    %2620 = vmatpush2.msra.mxu0 0.0
    %2621 = vmatprep.subr.mxu0 0.0
    %2622 = vmatpush2.msra.mxu0 0.0
    %2623 = vmatprep.subr.mxu0 0.0
    %2624 = vmatpush2.msra.mxu0 0.0
    %2625 = vmatprep.subr.mxu0 0.0
    %2626 = vmatpush2.msra.mxu0 0.0
    %2627 = vmatprep.subr.mxu0 0.0
    %2628 = vmatpush2.msra.mxu0 0.0
    %2629 = vmatprep.subr.mxu0 0.0
    %2630 = vmatpush2.msra.mxu0 0.0
    %2631 = vmatprep.subr.mxu0 0.0
    %2632 = vmatpush2.msra.mxu0 0.0
    %2633 = vmatprep.subr.mxu0 0.0
    %2634 = vmatpush2.msra.mxu0 0.0
    %2635 = vmatprep.subr.mxu0 0.0
    %2636 = vmatpush2.msra.mxu0 0.0
    %2637 = vmatprep.subr.mxu0 0.0
    %2638 = vmatpush2.msra.mxu0 0.0
    %2639 = vmatprep.subr.mxu0 0.0
    %2640 = vmatpush2.msra.mxu0 0.0
    %2641 = vmatprep.subr.mxu0 0.0
    %2642 = vmatpush2.msra.mxu0 0.0
    %2643 = vmatprep.subr.mxu0 0.0
    %2644 = vmatpush2.msra.mxu0 0.0
    %2645 = vmatprep.subr.mxu0 0.0
    %2646 = vmatpush2.msra.mxu0 0.0
    %2647 = vmatprep.subr.mxu0 0.0
    %2648 = vmatpush2.msra.mxu0 0.0
    %2649 = vmatprep.subr.mxu0 0.0
    %2650 = vmatpush2.msra.mxu0 0.0
    %2651 = vmatprep.mubr.f32.mxu0 0.0
    %2652 = vmatmul.mubr.f32.gmra.mxu0 %v2585
    %v2653 = vpop.f32.mrf.mxu0
    %v2654 = vadd.f32 0.0, %v2653
    %v2655 = vpop.f32.mrf.mxu0
    %2656 = vdwg.mxu0
    %2657 = vrot.lane.b32.xlu0 %v1828, 96
    %v2658 = vpop.permute.xlu0 %2657
    %2659 = vrot.lane.b32.xlu0 %v1833, 96
    %v2660 = vpop.permute.xlu0 %2659
    %v2664 = vsel %vm1486, %v2571, 0
    %2666 = vmatprep.subr.mxu0 0.0
    %2667 = vmatpush1.msra.mxu0 0.0
    %2668 = vmatprep.subr.mxu0 0.0
    %2669 = vmatpush1.msra.mxu0 0.0
    %2670 = vmatprep.subr.mxu0 0.0
    %2671 = vmatpush1.msra.mxu0 0.0
    %2672 = vmatprep.subr.mxu0 0.0
    %2673 = vmatpush1.msra.mxu0 0.0
    %2674 = vmatprep.subr.mxu0 0.0
    %2675 = vmatpush1.msra.mxu0 0.0
    %2676 = vmatprep.subr.mxu0 0.0
    %2677 = vmatpush1.msra.mxu0 0.0
    %2678 = vmatprep.subr.mxu0 0.0
    %2679 = vmatpush1.msra.mxu0 0.0
    %2680 = vmatprep.subr.mxu0 0.0
    %2681 = vmatpush1.msra.mxu0 0.0
    %2682 = vmatprep.subr.mxu0 0.0
    %2683 = vmatpush1.msra.mxu0 0.0
    %2684 = vmatprep.subr.mxu0 0.0
    %2685 = vmatpush1.msra.mxu0 0.0
    %2686 = vmatprep.subr.mxu0 0.0
    %2687 = vmatpush1.msra.mxu0 0.0
    %2688 = vmatprep.subr.mxu0 0.0
    %2689 = vmatpush1.msra.mxu0 0.0
    %2690 = vmatprep.subr.mxu0 0.0
    %2691 = vmatpush1.msra.mxu0 0.0
    %2692 = vmatprep.subr.mxu0 0.0
    %2693 = vmatpush1.msra.mxu0 0.0
    %2694 = vmatprep.subr.mxu0 0.0
    %2695 = vmatpush1.msra.mxu0 %v2660
    %2696 = vmatprep.subr.mxu0 0.0
    %2697 = vmatpush1.msra.mxu0 %v2658
    %2698 = vmatprep.subr.mxu0 0.0
    %2699 = vmatpush2.msra.mxu0 0.0
    %2700 = vmatprep.subr.mxu0 0.0
    %2701 = vmatpush2.msra.mxu0 0.0
    %2702 = vmatprep.subr.mxu0 0.0
    %2703 = vmatpush2.msra.mxu0 0.0
    %2704 = vmatprep.subr.mxu0 0.0
    %2705 = vmatpush2.msra.mxu0 0.0
    %2706 = vmatprep.subr.mxu0 0.0
    %2707 = vmatpush2.msra.mxu0 0.0
    %2708 = vmatprep.subr.mxu0 0.0
    %2709 = vmatpush2.msra.mxu0 0.0
    %2710 = vmatprep.subr.mxu0 0.0
    %2711 = vmatpush2.msra.mxu0 0.0
    %2712 = vmatprep.subr.mxu0 0.0
    %2713 = vmatpush2.msra.mxu0 0.0
    %2714 = vmatprep.subr.mxu0 0.0
    %2715 = vmatpush2.msra.mxu0 0.0
    %2716 = vmatprep.subr.mxu0 0.0
    %2717 = vmatpush2.msra.mxu0 0.0
    %2718 = vmatprep.subr.mxu0 0.0
    %2719 = vmatpush2.msra.mxu0 0.0
    %2720 = vmatprep.subr.mxu0 0.0
    %2721 = vmatpush2.msra.mxu0 0.0
    %2722 = vmatprep.subr.mxu0 0.0
    %2723 = vmatpush2.msra.mxu0 0.0
    %2724 = vmatprep.subr.mxu0 0.0
    %2725 = vmatpush2.msra.mxu0 0.0
    %2726 = vmatprep.subr.mxu0 0.0
    %2727 = vmatpush2.msra.mxu0 0.0
    %2728 = vmatprep.subr.mxu0 0.0
    %2729 = vmatpush2.msra.mxu0 0.0
    %2730 = vmatprep.mubr.f32.mxu0 0.0
    %2731 = vmatmul.mubr.f32.gmra.mxu0 %v2664
    %v2732 = vpop.f32.mrf.mxu0
    %v2733 = vadd.f32 0.0, %v2732
    %v2734 = vpop.f32.mrf.mxu0
    %2735 = vdwg.mxu0
    %2736 = vrot.lane.b32.xlu0 %v1855, 96
    %v2737 = vpop.permute.xlu0 %2736
    %2738 = vrot.lane.b32.xlu0 %v1857, 96
    %v2739 = vpop.permute.xlu0 %2738
    %v2743 = vsel %vm1486, %v2572, 0
    %2745 = vmatprep.subr.mxu0 0.0
    %2746 = vmatpush1.msra.mxu0 0.0
    %2747 = vmatprep.subr.mxu0 0.0
    %2748 = vmatpush1.msra.mxu0 0.0
    %2749 = vmatprep.subr.mxu0 0.0
    %2750 = vmatpush1.msra.mxu0 0.0
    %2751 = vmatprep.subr.mxu0 0.0
    %2752 = vmatpush1.msra.mxu0 0.0
    %2753 = vmatprep.subr.mxu0 0.0
    %2754 = vmatpush1.msra.mxu0 0.0
    %2755 = vmatprep.subr.mxu0 0.0
    %2756 = vmatpush1.msra.mxu0 0.0
    %2757 = vmatprep.subr.mxu0 0.0
    %2758 = vmatpush1.msra.mxu0 0.0
    %2759 = vmatprep.subr.mxu0 0.0
    %2760 = vmatpush1.msra.mxu0 0.0
    %2761 = vmatprep.subr.mxu0 0.0
    %2762 = vmatpush1.msra.mxu0 0.0
    %2763 = vmatprep.subr.mxu0 0.0
    %2764 = vmatpush1.msra.mxu0 0.0
    %2765 = vmatprep.subr.mxu0 0.0
    %2766 = vmatpush1.msra.mxu0 0.0
    %2767 = vmatprep.subr.mxu0 0.0
    %2768 = vmatpush1.msra.mxu0 0.0
    %2769 = vmatprep.subr.mxu0 0.0
    %2770 = vmatpush1.msra.mxu0 0.0
    %2771 = vmatprep.subr.mxu0 0.0
    %2772 = vmatpush1.msra.mxu0 0.0
    %2773 = vmatprep.subr.mxu0 0.0
    %2774 = vmatpush1.msra.mxu0 %v2739
    %2775 = vmatprep.subr.mxu0 0.0
    %2776 = vmatpush1.msra.mxu0 %v2737
    %2777 = vmatprep.subr.mxu0 0.0
    %2778 = vmatpush2.msra.mxu0 0.0
    %2779 = vmatprep.subr.mxu0 0.0
    %2780 = vmatpush2.msra.mxu0 0.0
    %2781 = vmatprep.subr.mxu0 0.0
    %2782 = vmatpush2.msra.mxu0 0.0
    %2783 = vmatprep.subr.mxu0 0.0
    %2784 = vmatpush2.msra.mxu0 0.0
    %2785 = vmatprep.subr.mxu0 0.0
    %2786 = vmatpush2.msra.mxu0 0.0
    %2787 = vmatprep.subr.mxu0 0.0
    %2788 = vmatpush2.msra.mxu0 0.0
    %2789 = vmatprep.subr.mxu0 0.0
    %2790 = vmatpush2.msra.mxu0 0.0
    %2791 = vmatprep.subr.mxu0 0.0
    %2792 = vmatpush2.msra.mxu0 0.0
    %2793 = vmatprep.subr.mxu0 0.0
    %2794 = vmatpush2.msra.mxu0 0.0
    %2795 = vmatprep.subr.mxu0 0.0
    %2796 = vmatpush2.msra.mxu0 0.0
    %2797 = vmatprep.subr.mxu0 0.0
    %2798 = vmatpush2.msra.mxu0 0.0
    %2799 = vmatprep.subr.mxu0 0.0
    %2800 = vmatpush2.msra.mxu0 0.0
    %2801 = vmatprep.subr.mxu0 0.0
    %2802 = vmatpush2.msra.mxu0 0.0
    %2803 = vmatprep.subr.mxu0 0.0
    %2804 = vmatpush2.msra.mxu0 0.0
    %2805 = vmatprep.subr.mxu0 0.0
    %2806 = vmatpush2.msra.mxu0 0.0
    %2807 = vmatprep.subr.mxu0 0.0
    %2808 = vmatpush2.msra.mxu0 0.0
    %2809 = vmatprep.mubr.f32.mxu0 0.0
    %2810 = vmatmul.mubr.f32.gmra.mxu0 %v2743
    %v2811 = vpop.f32.mrf.mxu0
    %v2812 = vadd.f32 0.0, %v2811
    %v2813 = vpop.f32.mrf.mxu0
    %2814 = vdwg.mxu0
    %2815 = vrot.lane.b32.xlu0 %v1859, 96
    %v2816 = vpop.permute.xlu0 %2815
    %2817 = vrot.lane.b32.xlu0 %v1861, 96
    %v2818 = vpop.permute.xlu0 %2817
    %v2822 = vsel %vm1486, %v2573, 0
    %2824 = vmatprep.subr.mxu0 0.0
    %2825 = vmatpush1.msra.mxu0 0.0
    %2826 = vmatprep.subr.mxu0 0.0
    %2827 = vmatpush1.msra.mxu0 0.0
    %2828 = vmatprep.subr.mxu0 0.0
    %2829 = vmatpush1.msra.mxu0 0.0
    %2830 = vmatprep.subr.mxu0 0.0
    %2831 = vmatpush1.msra.mxu0 0.0
    %2832 = vmatprep.subr.mxu0 0.0
    %2833 = vmatpush1.msra.mxu0 0.0
    %2834 = vmatprep.subr.mxu0 0.0
    %2835 = vmatpush1.msra.mxu0 0.0
    %2836 = vmatprep.subr.mxu0 0.0
    %2837 = vmatpush1.msra.mxu0 0.0
    %2838 = vmatprep.subr.mxu0 0.0
    %2839 = vmatpush1.msra.mxu0 0.0
    %2840 = vmatprep.subr.mxu0 0.0
    %2841 = vmatpush1.msra.mxu0 0.0
    %2842 = vmatprep.subr.mxu0 0.0
    %2843 = vmatpush1.msra.mxu0 0.0
    %2844 = vmatprep.subr.mxu0 0.0
    %2845 = vmatpush1.msra.mxu0 0.0
    %2846 = vmatprep.subr.mxu0 0.0
    %2847 = vmatpush1.msra.mxu0 0.0
    %2848 = vmatprep.subr.mxu0 0.0
    %2849 = vmatpush1.msra.mxu0 0.0
    %2850 = vmatprep.subr.mxu0 0.0
    %2851 = vmatpush1.msra.mxu0 0.0
    %2852 = vmatprep.subr.mxu0 0.0
    %2853 = vmatpush1.msra.mxu0 %v2818
    %2854 = vmatprep.subr.mxu0 0.0
    %2855 = vmatpush1.msra.mxu0 %v2816
    %2856 = vmatprep.subr.mxu0 0.0
    %2857 = vmatpush2.msra.mxu0 0.0
    %2858 = vmatprep.subr.mxu0 0.0
    %2859 = vmatpush2.msra.mxu0 0.0
    %2860 = vmatprep.subr.mxu0 0.0
    %2861 = vmatpush2.msra.mxu0 0.0
    %2862 = vmatprep.subr.mxu0 0.0
    %2863 = vmatpush2.msra.mxu0 0.0
    %2864 = vmatprep.subr.mxu0 0.0
    %2865 = vmatpush2.msra.mxu0 0.0
    %2866 = vmatprep.subr.mxu0 0.0
    %2867 = vmatpush2.msra.mxu0 0.0
    %2868 = vmatprep.subr.mxu0 0.0
    %2869 = vmatpush2.msra.mxu0 0.0
    %2870 = vmatprep.subr.mxu0 0.0
    %2871 = vmatpush2.msra.mxu0 0.0
    %2872 = vmatprep.subr.mxu0 0.0
    %2873 = vmatpush2.msra.mxu0 0.0
    %2874 = vmatprep.subr.mxu0 0.0
    %2875 = vmatpush2.msra.mxu0 0.0
    %2876 = vmatprep.subr.mxu0 0.0
    %2877 = vmatpush2.msra.mxu0 0.0
    %2878 = vmatprep.subr.mxu0 0.0
    %2879 = vmatpush2.msra.mxu0 0.0
    %2880 = vmatprep.subr.mxu0 0.0
    %2881 = vmatpush2.msra.mxu0 0.0
    %2882 = vmatprep.subr.mxu0 0.0
    %2883 = vmatpush2.msra.mxu0 0.0
    %2884 = vmatprep.subr.mxu0 0.0
    %2885 = vmatpush2.msra.mxu0 0.0
    %2886 = vmatprep.subr.mxu0 0.0
    %2887 = vmatpush2.msra.mxu0 0.0
    %2888 = vmatprep.mubr.f32.mxu0 0.0
    %2889 = vmatmul.mubr.f32.gmra.mxu0 %v2822
    %v2890 = vpop.f32.mrf.mxu0
    %v2891 = vadd.f32 0.0, %v2890
    %v2892 = vpop.f32.mrf.mxu0
    %2893 = vdwg.mxu0
    %2894 = vrot.lane.b32.xlu0 %v1863, 96
    %v2895 = vpop.permute.xlu0 %2894
    %2896 = vrot.lane.b32.xlu0 %v1865, 96
    %v2897 = vpop.permute.xlu0 %2896
    %v2901 = vsel %vm1486, %v2574, 0
    %2903 = vmatprep.subr.mxu0 0.0
    %2904 = vmatpush1.msra.mxu0 0.0
    %2905 = vmatprep.subr.mxu0 0.0
    %2906 = vmatpush1.msra.mxu0 0.0
    %2907 = vmatprep.subr.mxu0 0.0
    %2908 = vmatpush1.msra.mxu0 0.0
    %2909 = vmatprep.subr.mxu0 0.0
    %2910 = vmatpush1.msra.mxu0 0.0
    %2911 = vmatprep.subr.mxu0 0.0
    %2912 = vmatpush1.msra.mxu0 0.0
    %2913 = vmatprep.subr.mxu0 0.0
    %2914 = vmatpush1.msra.mxu0 0.0
    %2915 = vmatprep.subr.mxu0 0.0
    %2916 = vmatpush1.msra.mxu0 0.0
    %2917 = vmatprep.subr.mxu0 0.0
    %2918 = vmatpush1.msra.mxu0 0.0
    %2919 = vmatprep.subr.mxu0 0.0
    %2920 = vmatpush1.msra.mxu0 0.0
    %2921 = vmatprep.subr.mxu0 0.0
    %2922 = vmatpush1.msra.mxu0 0.0
    %2923 = vmatprep.subr.mxu0 0.0
    %2924 = vmatpush1.msra.mxu0 0.0
    %2925 = vmatprep.subr.mxu0 0.0
    %2926 = vmatpush1.msra.mxu0 0.0
    %2927 = vmatprep.subr.mxu0 0.0
    %2928 = vmatpush1.msra.mxu0 0.0
    %2929 = vmatprep.subr.mxu0 0.0
    %2930 = vmatpush1.msra.mxu0 0.0
    %2931 = vmatprep.subr.mxu0 0.0
    %2932 = vmatpush1.msra.mxu0 %v2897
    %2933 = vmatprep.subr.mxu0 0.0
    %2934 = vmatpush1.msra.mxu0 %v2895
    %2935 = vmatprep.subr.mxu0 0.0
    %2936 = vmatpush2.msra.mxu0 0.0
    %2937 = vmatprep.subr.mxu0 0.0
    %2938 = vmatpush2.msra.mxu0 0.0
    %2939 = vmatprep.subr.mxu0 0.0
    %2940 = vmatpush2.msra.mxu0 0.0
    %2941 = vmatprep.subr.mxu0 0.0
    %2942 = vmatpush2.msra.mxu0 0.0
    %2943 = vmatprep.subr.mxu0 0.0
    %2944 = vmatpush2.msra.mxu0 0.0
    %2945 = vmatprep.subr.mxu0 0.0
    %2946 = vmatpush2.msra.mxu0 0.0
    %2947 = vmatprep.subr.mxu0 0.0
    %2948 = vmatpush2.msra.mxu0 0.0
    %2949 = vmatprep.subr.mxu0 0.0
    %2950 = vmatpush2.msra.mxu0 0.0
    %2951 = vmatprep.subr.mxu0 0.0
    %2952 = vmatpush2.msra.mxu0 0.0
    %2953 = vmatprep.subr.mxu0 0.0
    %2954 = vmatpush2.msra.mxu0 0.0
    %2955 = vmatprep.subr.mxu0 0.0
    %2956 = vmatpush2.msra.mxu0 0.0
    %2957 = vmatprep.subr.mxu0 0.0
    %2958 = vmatpush2.msra.mxu0 0.0
    %2959 = vmatprep.subr.mxu0 0.0
    %2960 = vmatpush2.msra.mxu0 0.0
    %2961 = vmatprep.subr.mxu0 0.0
    %2962 = vmatpush2.msra.mxu0 0.0
    %2963 = vmatprep.subr.mxu0 0.0
    %2964 = vmatpush2.msra.mxu0 0.0
    %2965 = vmatprep.subr.mxu0 0.0
    %2966 = vmatpush2.msra.mxu0 0.0
    %2967 = vmatprep.mubr.f32.mxu0 0.0
    %2968 = vmatmul.mubr.f32.gmra.mxu0 %v2901
    %v2969 = vpop.f32.mrf.mxu0
    %v2970 = vadd.f32 0.0, %v2969
    %v2971 = vpop.f32.mrf.mxu0
    %2972 = vdwg.mxu0
    %2973 = vrot.lane.b32.xlu0 %v1867, 96
    %v2974 = vpop.permute.xlu0 %2973
    %2975 = vrot.lane.b32.xlu0 %v1869, 96
    %v2976 = vpop.permute.xlu0 %2975
    %v2980 = vsel %vm1486, %v2575, 0
    %2982 = vmatprep.subr.mxu0 0.0
    %2983 = vmatpush1.msra.mxu0 0.0
    %2984 = vmatprep.subr.mxu0 0.0
    %2985 = vmatpush1.msra.mxu0 0.0
    %2986 = vmatprep.subr.mxu0 0.0
    %2987 = vmatpush1.msra.mxu0 0.0
    %2988 = vmatprep.subr.mxu0 0.0
    %2989 = vmatpush1.msra.mxu0 0.0
    %2990 = vmatprep.subr.mxu0 0.0
    %2991 = vmatpush1.msra.mxu0 0.0
    %2992 = vmatprep.subr.mxu0 0.0
    %2993 = vmatpush1.msra.mxu0 0.0
    %2994 = vmatprep.subr.mxu0 0.0
    %2995 = vmatpush1.msra.mxu0 0.0
    %2996 = vmatprep.subr.mxu0 0.0
    %2997 = vmatpush1.msra.mxu0 0.0
    %2998 = vmatprep.subr.mxu0 0.0
    %2999 = vmatpush1.msra.mxu0 0.0
    %3000 = vmatprep.subr.mxu0 0.0
    %3001 = vmatpush1.msra.mxu0 0.0
    %3002 = vmatprep.subr.mxu0 0.0
    %3003 = vmatpush1.msra.mxu0 0.0
    %3004 = vmatprep.subr.mxu0 0.0
    %3005 = vmatpush1.msra.mxu0 0.0
    %3006 = vmatprep.subr.mxu0 0.0
    %3007 = vmatpush1.msra.mxu0 0.0
    %3008 = vmatprep.subr.mxu0 0.0
    %3009 = vmatpush1.msra.mxu0 0.0
    %3010 = vmatprep.subr.mxu0 0.0
    %3011 = vmatpush1.msra.mxu0 %v2976
    %3012 = vmatprep.subr.mxu0 0.0
    %3013 = vmatpush1.msra.mxu0 %v2974
    %3014 = vmatprep.subr.mxu0 0.0
    %3015 = vmatpush2.msra.mxu0 0.0
    %3016 = vmatprep.subr.mxu0 0.0
    %3017 = vmatpush2.msra.mxu0 0.0
    %3018 = vmatprep.subr.mxu0 0.0
    %3019 = vmatpush2.msra.mxu0 0.0
    %3020 = vmatprep.subr.mxu0 0.0
    %3021 = vmatpush2.msra.mxu0 0.0
    %3022 = vmatprep.subr.mxu0 0.0
    %3023 = vmatpush2.msra.mxu0 0.0
    %3024 = vmatprep.subr.mxu0 0.0
    %3025 = vmatpush2.msra.mxu0 0.0
    %3026 = vmatprep.subr.mxu0 0.0
    %3027 = vmatpush2.msra.mxu0 0.0
    %3028 = vmatprep.subr.mxu0 0.0
    %3029 = vmatpush2.msra.mxu0 0.0
    %3030 = vmatprep.subr.mxu0 0.0
    %3031 = vmatpush2.msra.mxu0 0.0
    %3032 = vmatprep.subr.mxu0 0.0
    %3033 = vmatpush2.msra.mxu0 0.0
    %3034 = vmatprep.subr.mxu0 0.0
    %3035 = vmatpush2.msra.mxu0 0.0
    %3036 = vmatprep.subr.mxu0 0.0
    %3037 = vmatpush2.msra.mxu0 0.0
    %3038 = vmatprep.subr.mxu0 0.0
    %3039 = vmatpush2.msra.mxu0 0.0
    %3040 = vmatprep.subr.mxu0 0.0
    %3041 = vmatpush2.msra.mxu0 0.0
    %3042 = vmatprep.subr.mxu0 0.0
    %3043 = vmatpush2.msra.mxu0 0.0
    %3044 = vmatprep.subr.mxu0 0.0
    %3045 = vmatpush2.msra.mxu0 0.0
    %3046 = vmatprep.mubr.f32.mxu0 0.0
    %3047 = vmatmul.mubr.f32.gmra.mxu0 %v2980
    %v3048 = vpop.f32.mrf.mxu0
    %v3049 = vadd.f32 0.0, %v3048
    %v3050 = vpop.f32.mrf.mxu0
    %3051 = vdwg.mxu0
    %3052 = vrot.lane.b32.xlu0 %v1871, 96
    %v3053 = vpop.permute.xlu0 %3052
    %3054 = vrot.lane.b32.xlu0 %v1873, 96
    %v3055 = vpop.permute.xlu0 %3054
    %v3059 = vsel %vm1486, %v2576, 0
    %3061 = vmatprep.subr.mxu0 0.0
    %3062 = vmatpush1.msra.mxu0 0.0
    %3063 = vmatprep.subr.mxu0 0.0
    %3064 = vmatpush1.msra.mxu0 0.0
    %3065 = vmatprep.subr.mxu0 0.0
    %3066 = vmatpush1.msra.mxu0 0.0
    %3067 = vmatprep.subr.mxu0 0.0
    %3068 = vmatpush1.msra.mxu0 0.0
    %3069 = vmatprep.subr.mxu0 0.0
    %3070 = vmatpush1.msra.mxu0 0.0
    %3071 = vmatprep.subr.mxu0 0.0
    %3072 = vmatpush1.msra.mxu0 0.0
    %3073 = vmatprep.subr.mxu0 0.0
    %3074 = vmatpush1.msra.mxu0 0.0
    %3075 = vmatprep.subr.mxu0 0.0
    %3076 = vmatpush1.msra.mxu0 0.0
    %3077 = vmatprep.subr.mxu0 0.0
    %3078 = vmatpush1.msra.mxu0 0.0
    %3079 = vmatprep.subr.mxu0 0.0
    %3080 = vmatpush1.msra.mxu0 0.0
    %3081 = vmatprep.subr.mxu0 0.0
    %3082 = vmatpush1.msra.mxu0 0.0
    %3083 = vmatprep.subr.mxu0 0.0
    %3084 = vmatpush1.msra.mxu0 0.0
    %3085 = vmatprep.subr.mxu0 0.0
    %3086 = vmatpush1.msra.mxu0 0.0
    %3087 = vmatprep.subr.mxu0 0.0
    %3088 = vmatpush1.msra.mxu0 0.0
    %3089 = vmatprep.subr.mxu0 0.0
    %3090 = vmatpush1.msra.mxu0 %v3055
    %3091 = vmatprep.subr.mxu0 0.0
    %3092 = vmatpush1.msra.mxu0 %v3053
    %3093 = vmatprep.subr.mxu0 0.0
    %3094 = vmatpush2.msra.mxu0 0.0
    %3095 = vmatprep.subr.mxu0 0.0
    %3096 = vmatpush2.msra.mxu0 0.0
    %3097 = vmatprep.subr.mxu0 0.0
    %3098 = vmatpush2.msra.mxu0 0.0
    %3099 = vmatprep.subr.mxu0 0.0
    %3100 = vmatpush2.msra.mxu0 0.0
    %3101 = vmatprep.subr.mxu0 0.0
    %3102 = vmatpush2.msra.mxu0 0.0
    %3103 = vmatprep.subr.mxu0 0.0
    %3104 = vmatpush2.msra.mxu0 0.0
    %3105 = vmatprep.subr.mxu0 0.0
    %3106 = vmatpush2.msra.mxu0 0.0
    %3107 = vmatprep.subr.mxu0 0.0
    %3108 = vmatpush2.msra.mxu0 0.0
    %3109 = vmatprep.subr.mxu0 0.0
    %3110 = vmatpush2.msra.mxu0 0.0
    %3111 = vmatprep.subr.mxu0 0.0
    %3112 = vmatpush2.msra.mxu0 0.0
    %3113 = vmatprep.subr.mxu0 0.0
    %3114 = vmatpush2.msra.mxu0 0.0
    %3115 = vmatprep.subr.mxu0 0.0
    %3116 = vmatpush2.msra.mxu0 0.0
    %3117 = vmatprep.subr.mxu0 0.0
    %3118 = vmatpush2.msra.mxu0 0.0
    %3119 = vmatprep.subr.mxu0 0.0
    %3120 = vmatpush2.msra.mxu0 0.0
    %3121 = vmatprep.subr.mxu0 0.0
    %3122 = vmatpush2.msra.mxu0 0.0
    %3123 = vmatprep.subr.mxu0 0.0
    %3124 = vmatpush2.msra.mxu0 0.0
    %3125 = vmatprep.mubr.f32.mxu0 0.0
    %3126 = vmatmul.mubr.f32.gmra.mxu0 %v3059
    %v3127 = vpop.f32.mrf.mxu0
    %v3128 = vadd.f32 0.0, %v3127
    %v3129 = vpop.f32.mrf.mxu0
    %3130 = vdwg.mxu0
    %3131 = vrot.lane.b32.xlu0 %v1875, 96
    %v3132 = vpop.permute.xlu0 %3131
    %3133 = vrot.lane.b32.xlu0 %v1877, 96
    %v3134 = vpop.permute.xlu0 %3133
    %v3138 = vsel %vm1486, %v2577, 0
    %3140 = vmatprep.subr.mxu0 0.0
    %3141 = vmatpush1.msra.mxu0 0.0
    %3142 = vmatprep.subr.mxu0 0.0
    %3143 = vmatpush1.msra.mxu0 0.0
    %3144 = vmatprep.subr.mxu0 0.0
    %3145 = vmatpush1.msra.mxu0 0.0
    %3146 = vmatprep.subr.mxu0 0.0
    %3147 = vmatpush1.msra.mxu0 0.0
    %3148 = vmatprep.subr.mxu0 0.0
    %3149 = vmatpush1.msra.mxu0 0.0
    %3150 = vmatprep.subr.mxu0 0.0
    %3151 = vmatpush1.msra.mxu0 0.0
    %3152 = vmatprep.subr.mxu0 0.0
    %3153 = vmatpush1.msra.mxu0 0.0
    %3154 = vmatprep.subr.mxu0 0.0
    %3155 = vmatpush1.msra.mxu0 0.0
    %3156 = vmatprep.subr.mxu0 0.0
    %3157 = vmatpush1.msra.mxu0 0.0
    %3158 = vmatprep.subr.mxu0 0.0
    %3159 = vmatpush1.msra.mxu0 0.0
    %3160 = vmatprep.subr.mxu0 0.0
    %3161 = vmatpush1.msra.mxu0 0.0
    %3162 = vmatprep.subr.mxu0 0.0
    %3163 = vmatpush1.msra.mxu0 0.0
    %3164 = vmatprep.subr.mxu0 0.0
    %3165 = vmatpush1.msra.mxu0 0.0
    %3166 = vmatprep.subr.mxu0 0.0
    %3167 = vmatpush1.msra.mxu0 0.0
    %3168 = vmatprep.subr.mxu0 0.0
    %3169 = vmatpush1.msra.mxu0 %v3134
    %3170 = vmatprep.subr.mxu0 0.0
    %3171 = vmatpush1.msra.mxu0 %v3132
    %3172 = vmatprep.subr.mxu0 0.0
    %3173 = vmatpush2.msra.mxu0 0.0
    %3174 = vmatprep.subr.mxu0 0.0
    %3175 = vmatpush2.msra.mxu0 0.0
    %3176 = vmatprep.subr.mxu0 0.0
    %3177 = vmatpush2.msra.mxu0 0.0
    %3178 = vmatprep.subr.mxu0 0.0
    %3179 = vmatpush2.msra.mxu0 0.0
    %3180 = vmatprep.subr.mxu0 0.0
    %3181 = vmatpush2.msra.mxu0 0.0
    %3182 = vmatprep.subr.mxu0 0.0
    %3183 = vmatpush2.msra.mxu0 0.0
    %3184 = vmatprep.subr.mxu0 0.0
    %3185 = vmatpush2.msra.mxu0 0.0
    %3186 = vmatprep.subr.mxu0 0.0
    %3187 = vmatpush2.msra.mxu0 0.0
    %3188 = vmatprep.subr.mxu0 0.0
    %3189 = vmatpush2.msra.mxu0 0.0
    %3190 = vmatprep.subr.mxu0 0.0
    %3191 = vmatpush2.msra.mxu0 0.0
    %3192 = vmatprep.subr.mxu0 0.0
    %3193 = vmatpush2.msra.mxu0 0.0
    %3194 = vmatprep.subr.mxu0 0.0
    %3195 = vmatpush2.msra.mxu0 0.0
    %3196 = vmatprep.subr.mxu0 0.0
    %3197 = vmatpush2.msra.mxu0 0.0
    %3198 = vmatprep.subr.mxu0 0.0
    %3199 = vmatpush2.msra.mxu0 0.0
    %3200 = vmatprep.subr.mxu0 0.0
    %3201 = vmatpush2.msra.mxu0 0.0
    %3202 = vmatprep.subr.mxu0 0.0
    %3203 = vmatpush2.msra.mxu0 0.0
    %3204 = vmatprep.mubr.f32.mxu0 0.0
    %3205 = vmatmul.mubr.f32.gmra.mxu0 %v3138
    %v3206 = vpop.f32.mrf.mxu0
    %v3207 = vadd.f32 0.0, %v3206
    %v3208 = vpop.f32.mrf.mxu0
    %3209 = vdwg.mxu0
    %3212 = vrot.lane.b32.xlu0 %v2812, 8
    %v3213 = vpop.permute.xlu0 %3212
    %3214 = vrot.lane.b32.xlu0 %v2891, 8
    %v3215 = vpop.permute.xlu0 %3214
    %3220 = vrot.lane.b32.xlu0 %v2970, 16
    %v3221 = vpop.permute.xlu0 %3220
    %3222 = vrot.lane.b32.xlu0 %v3049, 16
    %v3223 = vpop.permute.xlu0 %3222
    %3228 = vrot.lane.b32.xlu0 %v3128, 24
    %v3229 = vpop.permute.xlu0 %3228
    %3230 = vrot.lane.b32.xlu0 %v3207, 24
    %v3231 = vpop.permute.xlu0 %3230
    %v3234 = vsel %vm157, %v2654, %v3213
    %v3235 = vsel %vm157, %v2733, %v3215
    %v3236 = vsel %vm1486, %v3234, %v3221
    %v3237 = vsel %vm1486, %v3235, %v3223
    %v3238 = vsel %vm1489, %v3236, %v3229
    %v3239 = vsel %vm1489, %v3237, %v3231
    %3240 = vrot.lane.b32.xlu0 %v38, 32
    %v3241 = vpop.permute.xlu0 %3240
    %3242 = vrot.lane.b32.xlu0 %v39, 32
    %v3243 = vpop.permute.xlu0 %3242
    %3244 = vrot.lane.b32.xlu0 %v40, 32
    %v3245 = vpop.permute.xlu0 %3244
    %3246 = vrot.lane.b32.xlu0 %v41, 32
    %v3247 = vpop.permute.xlu0 %3246
    %3252 = vrot.lane.b32.xlu0 %v1637, 32
    %v3253 = vpop.permute.xlu0 %3252
    %v3256 = vsel %vm59, %v3238, 0
    %v3259 = vsel %vm59, %v3239, 0
    %3261 = vmatprep.subr.mxu0 0.0
    %3262 = vmatpush1.msra.mxu0 0.0
    %3263 = vmatprep.subr.mxu0 0.0
    %3264 = vmatpush1.msra.mxu0 0.0
    %3265 = vmatprep.subr.mxu0 0.0
    %3266 = vmatpush1.msra.mxu0 0.0
    %3267 = vmatprep.subr.mxu0 0.0
    %3268 = vmatpush1.msra.mxu0 0.0
    %3269 = vmatprep.subr.mxu0 0.0
    %3270 = vmatpush1.msra.mxu0 0.0
    %3271 = vmatprep.subr.mxu0 0.0
    %3272 = vmatpush1.msra.mxu0 0.0
    %3273 = vmatprep.subr.mxu0 0.0
    %3274 = vmatpush1.msra.mxu0 0.0
    %3275 = vmatprep.subr.mxu0 0.0
    %3276 = vmatpush1.msra.mxu0 0.0
    %3277 = vmatprep.subr.mxu0 0.0
    %3278 = vmatpush1.msra.mxu0 0.0
    %3279 = vmatprep.subr.mxu0 0.0
    %3280 = vmatpush1.msra.mxu0 0.0
    %3281 = vmatprep.subr.mxu0 0.0
    %3282 = vmatpush1.msra.mxu0 0.0
    %3283 = vmatprep.subr.mxu0 0.0
    %3284 = vmatpush1.msra.mxu0 0.0
    %3285 = vmatprep.subr.mxu0 0.0
    %3286 = vmatpush1.msra.mxu0 %v3247
    %3287 = vmatprep.subr.mxu0 0.0
    %3288 = vmatpush1.msra.mxu0 %v3245
    %3289 = vmatprep.subr.mxu0 0.0
    %3290 = vmatpush1.msra.mxu0 %v3243
    %3291 = vmatprep.subr.mxu0 0.0
    %3292 = vmatpush1.msra.mxu0 %v3241
    %3293 = vmatprep.subr.mxu0 0.0
    %3294 = vmatpush2.msra.mxu0 0.0
    %3295 = vmatprep.subr.mxu0 0.0
    %3296 = vmatpush2.msra.mxu0 0.0
    %3297 = vmatprep.subr.mxu0 0.0
    %3298 = vmatpush2.msra.mxu0 0.0
    %3299 = vmatprep.subr.mxu0 0.0
    %3300 = vmatpush2.msra.mxu0 0.0
    %3301 = vmatprep.subr.mxu0 0.0
    %3302 = vmatpush2.msra.mxu0 0.0
    %3303 = vmatprep.subr.mxu0 0.0
    %3304 = vmatpush2.msra.mxu0 0.0
    %3305 = vmatprep.subr.mxu0 0.0
    %3306 = vmatpush2.msra.mxu0 0.0
    %3307 = vmatprep.subr.mxu0 0.0
    %3308 = vmatpush2.msra.mxu0 0.0
    %3309 = vmatprep.subr.mxu0 0.0
    %3310 = vmatpush2.msra.mxu0 0.0
    %3311 = vmatprep.subr.mxu0 0.0
    %3312 = vmatpush2.msra.mxu0 0.0
    %3313 = vmatprep.subr.mxu0 0.0
    %3314 = vmatpush2.msra.mxu0 0.0
    %3315 = vmatprep.subr.mxu0 0.0
    %3316 = vmatpush2.msra.mxu0 0.0
    %3317 = vmatprep.subr.mxu0 0.0
    %3318 = vmatpush2.msra.mxu0 0.0
    %3319 = vmatprep.subr.mxu0 0.0
    %3320 = vmatpush2.msra.mxu0 0.0
    %3321 = vmatprep.subr.mxu0 0.0
    %3322 = vmatpush2.msra.mxu0 0.0
    %3323 = vmatprep.subr.mxu0 0.0
    %3324 = vmatpush2.msra.mxu0 0.0
    %3325 = vmatprep.mubr.f32.mxu0 0.0
    %3326 = vmatmul.mubr.f32.gmra.mxu0 %v3256
    %v3327 = vpop.f32.mrf.mxu0
    %v3328 = vadd.f32 %v3253, %v3327
    %v3329 = vpop.f32.mrf.mxu0
    %3330 = vmatprep.mubr.f32.mxu0 0.0
    %3331 = vmatmul.mubr.f32.gmra.mxu0 %v3259
    %v3332 = vpop.f32.mrf.mxu0
    %v3333 = vadd.f32 %v3253, %v3332
    %v3334 = vpop.f32.mrf.mxu0
    %3335 = vdwg.mxu0
    %v3336 = vadd.f32 %v1632, %v3328
    %v3337 = vadd.f32 %v1633, %v3333
    %v3338 = vsel %vm59, %v3336, 0.0
    %3339 = vadd.xlane.f32.xlu0 %v3338
    %v3340 = vpop.xlane.xlu0 %3339
    %v3341 = vsel %vm59, %v3337, 0.0
    %3342 = vadd.xlane.f32.xlu0 %v3341
    %v3343 = vpop.xlane.xlu0 %3342
    %v3344 = vmul.f32 %v3340, %v1601
    %v3345 = vmul.f32 %v3343, %v1601
    %v3346 = vsub.f32 %v3336, %v3344
    %v3347 = vsub.f32 %v3337, %v3345
    %v3348 = vmul.f32 %v3346, %v3346
    %v3349 = vmul.f32 %v3347, %v3347
    %v3350 = vsel %vm59, %v3348, 0.0
    %3351 = vadd.xlane.f32.xlu0 %v3350
    %v3352 = vpop.xlane.xlu0 %3351
    %v3353 = vsel %vm59, %v3349, 0.0
    %3354 = vadd.xlane.f32.xlu0 %v3353
    %v3355 = vpop.xlane.xlu0 %3354
    %v3356 = vmul.f32 %v3352, %v1601
    %v3357 = vmul.f32 %v3355, %v1601
    %v3358 = vadd.f32 %v3356, 1e-05
    %v3359 = vadd.f32 %v3357, 1e-05
    %v3360 = vrsqrt.pop %v3358
    %v3361 = vrsqrt.pop %v3359
    %v3362 = vmul.f32 %v3346, %v3360
    %v3363 = vmul.f32 %v3347, %v3361
    %v3364 = vlaneseq
    %v3365 = vshrl.u32 %v3364, 7
    %v3366 = vsub.s32 2, %v3365
    %v3367 = vrot.slane %v42, %v3366
    %v3368 = vmul.f32 %v3362, %v3367
    %v3369 = vmul.f32 %v3363, %v3367
    %v3370 = vlaneseq
    %v3371 = vshrl.u32 %v3370, 7
    %v3372 = vsub.s32 3, %v3371
    %v3373 = vrot.slane %v42, %v3372
    %v3374 = vadd.f32 %v3368, %v3373
    %v3375 = vadd.f32 %v3369, %v3373
    %v3376 = vlaneseq
    %v3377 = vshrl.u32 %v3376, 7
    %v3378 = vsub.s32 4, %v3377
    %v3379 = vrot.slane %v42, %v3378
    %v3381 = vsel %vm59, %v3374, 0
    %v3384 = vsel %vm59, %v3375, 0
    %3386 = vmatprep.subr.mxu0 0.0
    %3387 = vmatpush1.msra.mxu0 0.0
    %3388 = vmatprep.subr.mxu0 0.0
    %3389 = vmatpush1.msra.mxu0 0.0
    %3390 = vmatprep.subr.mxu0 0.0
    %3391 = vmatpush1.msra.mxu0 0.0
    %3392 = vmatprep.subr.mxu0 0.0
    %3393 = vmatpush1.msra.mxu0 0.0
    %3394 = vmatprep.subr.mxu0 0.0
    %3395 = vmatpush1.msra.mxu0 0.0
    %3396 = vmatprep.subr.mxu0 0.0
    %3397 = vmatpush1.msra.mxu0 0.0
    %3398 = vmatprep.subr.mxu0 0.0
    %3399 = vmatpush1.msra.mxu0 0.0
    %3400 = vmatprep.subr.mxu0 0.0
    %3401 = vmatpush1.msra.mxu0 0.0
    %3402 = vmatprep.subr.mxu0 0.0
    %3403 = vmatpush1.msra.mxu0 0.0
    %3404 = vmatprep.subr.mxu0 0.0
    %3405 = vmatpush1.msra.mxu0 0.0
    %3406 = vmatprep.subr.mxu0 0.0
    %3407 = vmatpush1.msra.mxu0 0.0
    %3408 = vmatprep.subr.mxu0 0.0
    %3409 = vmatpush1.msra.mxu0 0.0
    %3410 = vmatprep.subr.mxu0 0.0
    %3411 = vmatpush1.msra.mxu0 %v46
    %3412 = vmatprep.subr.mxu0 0.0
    %3413 = vmatpush1.msra.mxu0 %v45
    %3414 = vmatprep.subr.mxu0 0.0
    %3415 = vmatpush1.msra.mxu0 %v44
    %3416 = vmatprep.subr.mxu0 0.0
    %3417 = vmatpush1.msra.mxu0 %v43
    %3418 = vmatprep.subr.mxu0 0.0
    %3419 = vmatpush2.msra.mxu0 0.0
    %3420 = vmatprep.subr.mxu0 0.0
    %3421 = vmatpush2.msra.mxu0 0.0
    %3422 = vmatprep.subr.mxu0 0.0
    %3423 = vmatpush2.msra.mxu0 0.0
    %3424 = vmatprep.subr.mxu0 0.0
    %3425 = vmatpush2.msra.mxu0 0.0
    %3426 = vmatprep.subr.mxu0 0.0
    %3427 = vmatpush2.msra.mxu0 0.0
    %3428 = vmatprep.subr.mxu0 0.0
    %3429 = vmatpush2.msra.mxu0 0.0
    %3430 = vmatprep.subr.mxu0 0.0
    %3431 = vmatpush2.msra.mxu0 0.0
    %3432 = vmatprep.subr.mxu0 0.0
    %3433 = vmatpush2.msra.mxu0 0.0
    %3434 = vmatprep.subr.mxu0 0.0
    %3435 = vmatpush2.msra.mxu0 0.0
    %3436 = vmatprep.subr.mxu0 0.0
    %3437 = vmatpush2.msra.mxu0 0.0
    %3438 = vmatprep.subr.mxu0 0.0
    %3439 = vmatpush2.msra.mxu0 0.0
    %3440 = vmatprep.subr.mxu0 0.0
    %3441 = vmatpush2.msra.mxu0 0.0
    %3442 = vmatprep.subr.mxu0 0.0
    %3443 = vmatpush2.msra.mxu0 0.0
    %3444 = vmatprep.subr.mxu0 0.0
    %3445 = vmatpush2.msra.mxu0 0.0
    %3446 = vmatprep.subr.mxu0 0.0
    %3447 = vmatpush2.msra.mxu0 0.0
    %3448 = vmatprep.subr.mxu0 0.0
    %3449 = vmatpush2.msra.mxu0 0.0
    %3450 = vmatprep.mubr.f32.mxu0 0.0
    %3451 = vmatmul.mubr.f32.gmra.mxu0 %v3381
    %v3452 = vpop.f32.mrf.mxu0
    %v3453 = vadd.f32 %v3379, %v3452
    %v3454 = vpop.f32.mrf.mxu0
    %3455 = vmatprep.mubr.f32.mxu0 0.0
    %3456 = vmatmul.mubr.f32.gmra.mxu0 %v3384
    %v3457 = vpop.f32.mrf.mxu0
    %v3458 = vadd.f32 %v3379, %v3457
    %v3459 = vpop.f32.mrf.mxu0
    %3460 = vdwg.mxu0
    %v3461 = vmax.f32 %v3453, 0.0
    %v3462 = vmax.f32 %v3458, 0.0
    %v3463 = vlaneseq
    %v3464 = vshrl.u32 %v3463, 7
    %v3465 = vsub.s32 5, %v3464
    %v3466 = vrot.slane %v42, %v3465
    %vm3467 = vcmask 523264
    %v3469 = vsel %vm3467, %v3461, 0
    %v3472 = vsel %vm3467, %v3462, 0
    %3474 = vmatprep.subr.mxu0 0.0
    %3475 = vmatpush1.msra.mxu0 0.0
    %3476 = vmatprep.subr.mxu0 0.0
    %3477 = vmatpush1.msra.mxu0 0.0
    %3478 = vmatprep.subr.mxu0 0.0
    %3479 = vmatpush1.msra.mxu0 0.0
    %3480 = vmatprep.subr.mxu0 0.0
    %3481 = vmatpush1.msra.mxu0 0.0
    %3482 = vmatprep.subr.mxu0 0.0
    %3483 = vmatpush1.msra.mxu0 0.0
    %3484 = vmatprep.subr.mxu0 0.0
    %3485 = vmatpush1.msra.mxu0 0.0
    %3486 = vmatprep.subr.mxu0 0.0
    %3487 = vmatpush1.msra.mxu0 0.0
    %3488 = vmatprep.subr.mxu0 0.0
    %3489 = vmatpush1.msra.mxu0 0.0
    %3490 = vmatprep.subr.mxu0 0.0
    %3491 = vmatpush1.msra.mxu0 %v54
    %3492 = vmatprep.subr.mxu0 0.0
    %3493 = vmatpush1.msra.mxu0 %v53
    %3494 = vmatprep.subr.mxu0 0.0
    %3495 = vmatpush1.msra.mxu0 %v52
    %3496 = vmatprep.subr.mxu0 0.0
    %3497 = vmatpush1.msra.mxu0 %v51
    %3498 = vmatprep.subr.mxu0 0.0
    %3499 = vmatpush1.msra.mxu0 %v50
    %3500 = vmatprep.subr.mxu0 0.0
    %3501 = vmatpush1.msra.mxu0 %v49
    %3502 = vmatprep.subr.mxu0 0.0
    %3503 = vmatpush1.msra.mxu0 %v48
    %3504 = vmatprep.subr.mxu0 0.0
    %3505 = vmatpush1.msra.mxu0 %v47
    %3506 = vmatprep.subr.mxu0 0.0
    %3507 = vmatpush2.msra.mxu0 0.0
    %3508 = vmatprep.subr.mxu0 0.0
    %3509 = vmatpush2.msra.mxu0 0.0
    %3510 = vmatprep.subr.mxu0 0.0
    %3511 = vmatpush2.msra.mxu0 0.0
    %3512 = vmatprep.subr.mxu0 0.0
    %3513 = vmatpush2.msra.mxu0 0.0
    %3514 = vmatprep.subr.mxu0 0.0
    %3515 = vmatpush2.msra.mxu0 0.0
    %3516 = vmatprep.subr.mxu0 0.0
    %3517 = vmatpush2.msra.mxu0 0.0
    %3518 = vmatprep.subr.mxu0 0.0
    %3519 = vmatpush2.msra.mxu0 0.0
    %3520 = vmatprep.subr.mxu0 0.0
    %3521 = vmatpush2.msra.mxu0 0.0
    %3522 = vmatprep.subr.mxu0 0.0
    %3523 = vmatpush2.msra.mxu0 0.0
    %3524 = vmatprep.subr.mxu0 0.0
    %3525 = vmatpush2.msra.mxu0 0.0
    %3526 = vmatprep.subr.mxu0 0.0
    %3527 = vmatpush2.msra.mxu0 0.0
    %3528 = vmatprep.subr.mxu0 0.0
    %3529 = vmatpush2.msra.mxu0 0.0
    %3530 = vmatprep.subr.mxu0 0.0
    %3531 = vmatpush2.msra.mxu0 0.0
    %3532 = vmatprep.subr.mxu0 0.0
    %3533 = vmatpush2.msra.mxu0 0.0
    %3534 = vmatprep.subr.mxu0 0.0
    %3535 = vmatpush2.msra.mxu0 0.0
    %3536 = vmatprep.subr.mxu0 0.0
    %3537 = vmatpush2.msra.mxu0 0.0
    %3538 = vmatprep.mubr.f32.mxu0 0.0
    %3539 = vmatmul.mubr.f32.gmra.mxu0 %v3469
    %v3540 = vpop.f32.mrf.mxu0
    %v3541 = vadd.f32 %v3466, %v3540
    %v3542 = vpop.f32.mrf.mxu0
    %3543 = vmatprep.mubr.f32.mxu0 0.0
    %3544 = vmatmul.mubr.f32.gmra.mxu0 %v3472
    %v3545 = vpop.f32.mrf.mxu0
    %v3546 = vadd.f32 %v3466, %v3545
    %v3547 = vpop.f32.mrf.mxu0
    %3548 = vdwg.mxu0
    %v3549 = vadd.f32 %v3336, %v3541
    %v3550 = vadd.f32 %v3337, %v3546
    %3551 = vst.msk [vmem:[#allocation2] sm:$0xff] %vm59, %v3549
    %3552 = vst.msk [vmem:[#allocation2 + $0x8] sm:$0xff] %vm59, %v3550
    // Predicated region
    $region30: #{tpu_custom_call.1} parent=1 // pred_check
      _
    $region31: #{tpu_custom_call.1} parent=1 // pred_check_branch
      %3554 = sbr.rel (0) target = $region33
    $region32: #{tpu_custom_call.1} parent=1 // pred_region
      %s3556 = ssub.s32 256, 256
      %3557 = vsyncadd [#allocation3], %s3556
      %s3558 = sshll.u32 [#allocation2], 4
      %s3559 = int_to_ptr.vmem [resolvable:$true] %s3558
      %3564 = dma.vmem_to_hbm [thread:$0]  %s3559, 256, %s7, [#allocation3], 128, 128, 8
    $region33: #{tpu_custom_call.1} parent=1 // pred_fallthru
      _
    // Predicated region
    $region34: #{tpu_custom_call.1} parent=1 // pred_check
      _
    $region35: #{tpu_custom_call.1} parent=1 // pred_check_branch
      %3566 = sbr.rel (0) target = $region37
    $region36: #{tpu_custom_call.1} parent=1 // pred_region
      %3567 = dma.done [#allocation3], 256
    $region37: #{tpu_custom_call.1} parent=1 // pred_fallthru
      _
    %3568 = vsyncpa [#allocation3], 1

</llo_original>
